<compile_context>
chip_gen: v6e
topology: v6e:2x2x1
jax: 0.10.0
libtpu: 0.0.40
codegen_flags: <defaults>
</compile_context>

<pallas_src>
import functools

import jax
import jax.numpy as jnp
from jax.experimental import pallas as pl
from jax.experimental.pallas import tpu as pltpu

# ----------------------------- model config ---------------------------------
VOCAB = 512                 # synthetic stand-in for tiktoken n_vocab
EMBED_DIM = 32
NUM_HEADS = 4
NUM_PARAMS = 64             # FFN hidden size
NUM_QUERIES_PER_GROUP = 2   # GQA: kv heads = NUM_HEADS // NUM_QUERIES_PER_GROUP
NUM_BLOCKS = 2
HEAD_DIM = EMBED_DIM // NUM_HEADS
NUM_KV_HEADS = NUM_HEADS // NUM_QUERIES_PER_GROUP
KV_DIM = NUM_KV_HEADS * HEAD_DIM

_DN = (((1,), (0,)), ((), ()))       # standard (M,K) x (K,N) contraction
_DN_QKT = (((1,), (1,)), ((), ()))   # contract last dims: q @ k^T without explicit .T


# ----------------------------- fused Pallas kernel ---------------------------
def _layernorm(h, g, b):
    mu = jnp.mean(h, axis=-1, keepdims=True)
    var = jnp.mean((h - mu) ** 2, axis=-1, keepdims=True)
    return (h - mu) * jax.lax.rsqrt(var + 1e-5) * g + b


def _fused_net_kernel(tok_ref,
                      emb_ref, mask_ref,
                      ln1_g_ref, ln1_b_ref, w_qkv_ref, b_qkv_ref,
                      w_o_ref, b_o_ref, ln2_g_ref, ln2_b_ref,
                      w1_ref, b1_ref, w2_ref, b2_ref,
                      lm_w_ref, lm_b_ref,
                      out_ref, x_vmem, *, batch, seq):
    """Whole forward pass (embedding gather + all blocks + LM head), one launch."""
    n_valid = batch * seq

    # ---- fused embedding gather: token ids live in SMEM, table in VMEM ----
    x_vmem[...] = jnp.zeros_like(x_vmem)          # keeps the 2 pad rows finite
    for r in range(n_valid):                      # unrolled dynamic row gathers
        tok = tok_ref[r]
        x_vmem[pl.ds(r, 1), :] = emb_ref[pl.ds(tok, 1), :]
    x = x_vmem[...]                               # (m_pad, D) f32, batches packed

    # Additive mask (block-diagonal by batch + causal + pad-key kill), hoisted
    # once; precomputed outside the kernel so no in-kernel iota/div/select work.
    mask_add = mask_ref[...]                      # (m_pad, m_pad) f32

    for blk in range(NUM_BLOCKS):                 # unrolled at trace time
        # ---- attention sub-block (pre-LN), fused QKV projection ----
        # 1/sqrt(head_dim) is already folded into the Q columns of w_qkv.
        h = _layernorm(x, ln1_g_ref[blk], ln1_b_ref[blk])
        qkv = jax.lax.dot_general(h, w_qkv_ref[blk], _DN,
                                  preferred_element_type=jnp.float32)
        qkv = qkv + b_qkv_ref[blk]                # (m_pad, D + 2*KV_DIM)

        head_outs = []
        for kv in range(NUM_KV_HEADS):            # k/v sliced once per kv group
            k0 = EMBED_DIM + kv * HEAD_DIM
            v0 = EMBED_DIM + KV_DIM + kv * HEAD_DIM
            k_h = qkv[:, k0:k0 + HEAD_DIM]        # (m_pad, hd)
            v_h = qkv[:, v0:v0 + HEAD_DIM]        # (m_pad, hd)
            for qi in range(NUM_QUERIES_PER_GROUP):
                hq = kv * NUM_QUERIES_PER_GROUP + qi
                q_h = qkv[:, hq * HEAD_DIM:(hq + 1) * HEAD_DIM]
                # One score matmul / softmax per head, shared by ALL batches:
                # cross-batch entries are killed by the additive mask (extra MXU
                # FLOPs are free, the MXU is otherwise idle at these sizes).
                s = jax.lax.dot_general(q_h, k_h, _DN_QKT,
                                        preferred_element_type=jnp.float32)
                s = s + mask_add
                m = jnp.max(s, axis=-1, keepdims=True)
                p = jnp.exp(s - m)
                denom = jnp.sum(p, axis=-1, keepdims=True)
                p = p * pl.reciprocal(denom, approx=True)   # EUP slot, not VALU div
                head_outs.append(
                    jax.lax.dot_general(p, v_h, _DN,
                                        preferred_element_type=jnp.float32))
        attn = jnp.concatenate(head_outs, axis=-1)          # (m_pad, D)

        x = x + jax.lax.dot_general(attn, w_o_ref[blk], _DN,
                                    preferred_element_type=jnp.float32) + b_o_ref[blk]

        # ---- MLP sub-block (pre-LN) ----
        h2 = _layernorm(x, ln2_g_ref[blk], ln2_b_ref[blk])
        f = jax.lax.dot_general(h2, w1_ref[blk], _DN,
                                preferred_element_type=jnp.float32) + b1_ref[blk]
        # TODO(synk): PyTorch nn.GELU defaults to the exact erf form; the tanh
        #             approximation is used here (accepted small numeric tolerance).
        f = jax.nn.gelu(f)
        x = x + jax.lax.dot_general(f, w2_ref[blk], _DN,
                                    preferred_element_type=jnp.float32) + b2_ref[blk]

    # ---- LM head: full VOCAB in one step, lane-dense (n_valid, 512) store ----
    logits = jax.lax.dot_general(x, lm_w_ref[...], _DN,
                                 preferred_element_type=jnp.float32) + lm_b_ref[...]
    out_ref[...] = logits[0:n_valid, :].astype(out_ref.dtype)


def fused_forward(tokens_flat, mask_add, params, *, batch, seq, m_pad):
    args = (params["embed"], mask_add,
            params["ln1_g"], params["ln1_b"], params["w_qkv"], params["b_qkv"],
            params["w_o"], params["b_o"], params["ln2_g"], params["ln2_b"],
            params["w1"], params["b1"], params["w2"], params["b2"],
            params["lm_w"], params["lm_b"])
    n_valid = batch * seq
    kernel = functools.partial(_fused_net_kernel, batch=batch, seq=seq)
    return pl.pallas_call(
        kernel,
        out_shape=jax.ShapeDtypeStruct((n_valid, VOCAB), jnp.float32),
        grid_spec=pltpu.PrefetchScalarGridSpec(
            num_scalar_prefetch=1,                 # token ids -> SMEM
            grid=(1,),                             # single launch, ~300 KB VMEM
            in_specs=[pl.BlockSpec(a.shape, lambda i, tok, nd=a.ndim: (0,) * nd)
                      for a in args],
            out_specs=pl.BlockSpec((n_valid, VOCAB), lambda i, tok: (0, 0)),
            scratch_shapes=[pltpu.VMEM((m_pad, EMBED_DIM), jnp.float32)],
        ),
        compiler_params=pltpu.CompilerParams(dimension_semantics=("arbitrary",)),
    )(tokens_flat, *args)


# ----------------------------- params & forward glue -------------------------
def init_params(key):
    def nrm(k, shape, std=0.02):
        return jax.random.normal(k, shape, jnp.float32) * std

    ks = jax.random.split(key, 6)
    # Per-block weights stacked on a leading NUM_BLOCKS axis; QKV pre-fused into
    # one (D, D + 2*KV_DIM) weight with 1/sqrt(head_dim) folded into the Q
    # columns at construction time (Q bias columns are zero, no fold needed).
    w_qkv = nrm(ks[1], (NUM_BLOCKS, EMBED_DIM, EMBED_DIM + 2 * KV_DIM))
    w_qkv = w_qkv.at[:, :, :EMBED_DIM].multiply(1.0 / (HEAD_DIM ** 0.5))
    return {
        "embed": nrm(ks[0], (VOCAB, EMBED_DIM)),
        "ln1_g": jnp.ones((NUM_BLOCKS, 1, EMBED_DIM), jnp.float32),
        "ln1_b": jnp.zeros((NUM_BLOCKS, 1, EMBED_DIM), jnp.float32),
        "w_qkv": w_qkv,
        "b_qkv": jnp.zeros((NUM_BLOCKS, 1, EMBED_DIM + 2 * KV_DIM), jnp.float32),
        "w_o": nrm(ks[2], (NUM_BLOCKS, EMBED_DIM, EMBED_DIM)),
        "b_o": jnp.zeros((NUM_BLOCKS, 1, EMBED_DIM), jnp.float32),
        "ln2_g": jnp.ones((NUM_BLOCKS, 1, EMBED_DIM), jnp.float32),
        "ln2_b": jnp.zeros((NUM_BLOCKS, 1, EMBED_DIM), jnp.float32),
        "w1": nrm(ks[3], (NUM_BLOCKS, EMBED_DIM, NUM_PARAMS)),
        "b1": jnp.zeros((NUM_BLOCKS, 1, NUM_PARAMS), jnp.float32),
        "w2": nrm(ks[4], (NUM_BLOCKS, NUM_PARAMS, EMBED_DIM)),
        "b2": jnp.zeros((NUM_BLOCKS, 1, EMBED_DIM), jnp.float32),
        "lm_w": nrm(ks[5], (EMBED_DIM, VOCAB)),
        "lm_b": jnp.zeros((1, VOCAB), jnp.float32),
    }


def _build_mask(batch, seq, m_pad):
    # Depends only on static shapes -> constant-folded by XLA at compile time.
    r = jnp.arange(m_pad, dtype=jnp.int32)
    same_batch = (r[:, None] // seq) == (r[None, :] // seq)
    causal = (r[None, :] % seq) <= (r[:, None] % seq)
    col_valid = (r < batch * seq)[None, :]
    allow = same_batch & causal & col_valid
    allow = allow | (r[:, None] == r[None, :])   # pad rows attend to self -> finite
    return jnp.where(allow, 0.0, -1e30).astype(jnp.float32)


def net_forward(params, tokens):
    batch, seq = tokens.shape
    m_pad = ((batch * seq + 7) // 8) * 8          # 30 valid rows -> 32 (sublane pad)
    mask_add = _build_mask(batch, seq, m_pad)
    logits = fused_forward(tokens.reshape(-1).astype(jnp.int32), mask_add, params,
                           batch=batch, seq=seq, m_pad=m_pad)
    return logits.reshape(batch, seq, VOCAB)      # row-major reshape: free


# ----------------------------- main ------------------------------------------
if __name__ == "__main__":
    key = jax.random.PRNGKey(0)
    params = init_params(key)

    # same dummy tokens as the PyTorch script (all ids < VOCAB)
    tokens = jnp.array(
        [[10, 50, 50, 20, 30, 10, 80, 70, 20, 60],
         [5, 6, 7, 8, 9, 7, 5, 5, 4, 3],
         [2, 3, 45, 67, 89, 20, 11, 23, 19, 11]], dtype=jnp.int32)

    out = jax.jit(net_forward)(params, tokens)
    out = jax.block_until_ready(out)
    assert out.shape == (3, 10, VOCAB) and out.dtype == jnp.float32
    assert bool(jnp.all(jnp.isfinite(out)))
    print("KERNEL_OK")
</pallas_src>

<mosaic_0001>
module attributes {stable_mosaic.version = 11 : i64} {
  func.func @_fused_net_kernel(%arg0: i32, %arg1: memref<30xi32, #tpu.memory_space<smem>>, %arg2: memref<512x32xf32, #tpu.memory_space<vmem>>, %arg3: memref<32x32xf32, #tpu.memory_space<vmem>>, %arg4: memref<2x1x32xf32, #tpu.memory_space<vmem>>, %arg5: memref<2x1x32xf32, #tpu.memory_space<vmem>>, %arg6: memref<2x32x64xf32, #tpu.memory_space<vmem>>, %arg7: memref<2x1x64xf32, #tpu.memory_space<vmem>>, %arg8: memref<2x32x32xf32, #tpu.memory_space<vmem>>, %arg9: memref<2x1x32xf32, #tpu.memory_space<vmem>>, %arg10: memref<2x1x32xf32, #tpu.memory_space<vmem>>, %arg11: memref<2x1x32xf32, #tpu.memory_space<vmem>>, %arg12: memref<2x32x64xf32, #tpu.memory_space<vmem>>, %arg13: memref<2x1x64xf32, #tpu.memory_space<vmem>>, %arg14: memref<2x64x32xf32, #tpu.memory_space<vmem>>, %arg15: memref<2x1x32xf32, #tpu.memory_space<vmem>>, %arg16: memref<32x512xf32, #tpu.memory_space<vmem>>, %arg17: memref<1x512xf32, #tpu.memory_space<vmem>>, %arg18: memref<30x512xf32, #tpu.memory_space<vmem>>, %arg19: memref<32x32xf32, #tpu.memory_space<vmem>>) attributes {dimension_semantics = [#tpu.dimension_semantics<arbitrary>], iteration_bounds = array<i64: 1>, scalar_prefetch = 1 : i64, scratch_operands = 1 : i64, tpu.core_type = #tpu.core_type<tc>, window_params = [{pipeline_mode = #tpu.pipeline_mode<synchronous>, transform_indices = @transform_0, window_bounds = array<i64: 512, 32>}, {pipeline_mode = #tpu.pipeline_mode<synchronous>, transform_indices = @transform_1, window_bounds = array<i64: 32, 32>}, {pipeline_mode = #tpu.pipeline_mode<synchronous>, transform_indices = @transform_2, window_bounds = array<i64: 2, 1, 32>}, {pipeline_mode = #tpu.pipeline_mode<synchronous>, transform_indices = @transform_3, window_bounds = array<i64: 2, 1, 32>}, {pipeline_mode = #tpu.pipeline_mode<synchronous>, transform_indices = @transform_4, window_bounds = array<i64: 2, 32, 64>}, {pipeline_mode = #tpu.pipeline_mode<synchronous>, transform_indices = @transform_5, window_bounds = array<i64: 2, 1, 64>}, {pipeline_mode = #tpu.pipeline_mode<synchronous>, transform_indices = @transform_6, window_bounds = array<i64: 2, 32, 32>}, {pipeline_mode = #tpu.pipeline_mode<synchronous>, transform_indices = @transform_7, window_bounds = array<i64: 2, 1, 32>}, {pipeline_mode = #tpu.pipeline_mode<synchronous>, transform_indices = @transform_8, window_bounds = array<i64: 2, 1, 32>}, {pipeline_mode = #tpu.pipeline_mode<synchronous>, transform_indices = @transform_9, window_bounds = array<i64: 2, 1, 32>}, {pipeline_mode = #tpu.pipeline_mode<synchronous>, transform_indices = @transform_10, window_bounds = array<i64: 2, 32, 64>}, {pipeline_mode = #tpu.pipeline_mode<synchronous>, transform_indices = @transform_11, window_bounds = array<i64: 2, 1, 64>}, {pipeline_mode = #tpu.pipeline_mode<synchronous>, transform_indices = @transform_12, window_bounds = array<i64: 2, 64, 32>}, {pipeline_mode = #tpu.pipeline_mode<synchronous>, transform_indices = @transform_13, window_bounds = array<i64: 2, 1, 32>}, {pipeline_mode = #tpu.pipeline_mode<synchronous>, transform_indices = @transform_14, window_bounds = array<i64: 32, 512>}, {pipeline_mode = #tpu.pipeline_mode<synchronous>, transform_indices = @transform_15, window_bounds = array<i64: 1, 512>}, {pipeline_mode = #tpu.pipeline_mode<synchronous>, transform_indices = @transform_16, window_bounds = array<i64: 30, 512>}]} {
    %cst = arith.constant 0.000000e+00 : f32
    %0 = vector.broadcast %cst : f32 to vector<32x32xf32>
    %c0 = arith.constant 0 : index
    %c0_0 = arith.constant 0 : index
    %1 = vector.load %arg19[%c0, %c0_0] : memref<32x32xf32, #tpu.memory_space<vmem>>, vector<32x32xf32>
    tpu.vector_store %arg19[%c0, %c0_0], %0 {strides = array<i32>} : memref<32x32xf32, #tpu.memory_space<vmem>>, vector<32x32xf32>,
    %c0_1 = arith.constant 0 : index
    %2 = memref.load %arg1[%c0_1] : memref<30xi32, #tpu.memory_space<smem>>
    %3 = arith.index_cast %2 : i32 to index
    %c0_2 = arith.constant 0 : index
    %4 = vector.load %arg2[%3, %c0_2] : memref<512x32xf32, #tpu.memory_space<vmem>>, vector<1x32xf32>
    %c0_3 = arith.constant 0 : index
    %c0_4 = arith.constant 0 : index
    %5 = vector.load %arg19[%c0_3, %c0_4] : memref<32x32xf32, #tpu.memory_space<vmem>>, vector<1x32xf32>
    tpu.vector_store %arg19[%c0_3, %c0_4], %4 {strides = array<i32>} : memref<32x32xf32, #tpu.memory_space<vmem>>, vector<1x32xf32>,
    %c1 = arith.constant 1 : index
    %6 = memref.load %arg1[%c1] : memref<30xi32, #tpu.memory_space<smem>>
    %7 = arith.index_cast %6 : i32 to index
    %c0_5 = arith.constant 0 : index
    %8 = vector.load %arg2[%7, %c0_5] : memref<512x32xf32, #tpu.memory_space<vmem>>, vector<1x32xf32>
    %c1_6 = arith.constant 1 : index
    %c0_7 = arith.constant 0 : index
    %9 = vector.load %arg19[%c1_6, %c0_7] : memref<32x32xf32, #tpu.memory_space<vmem>>, vector<1x32xf32>
    tpu.vector_store %arg19[%c1_6, %c0_7], %8 {strides = array<i32>} : memref<32x32xf32, #tpu.memory_space<vmem>>, vector<1x32xf32>,
    %c2 = arith.constant 2 : index
    %10 = memref.load %arg1[%c2] : memref<30xi32, #tpu.memory_space<smem>>
    %11 = arith.index_cast %10 : i32 to index
    %c0_8 = arith.constant 0 : index
    %12 = vector.load %arg2[%11, %c0_8] : memref<512x32xf32, #tpu.memory_space<vmem>>, vector<1x32xf32>
    %c2_9 = arith.constant 2 : index
    %c0_10 = arith.constant 0 : index
    %13 = vector.load %arg19[%c2_9, %c0_10] : memref<32x32xf32, #tpu.memory_space<vmem>>, vector<1x32xf32>
    tpu.vector_store %arg19[%c2_9, %c0_10], %12 {strides = array<i32>} : memref<32x32xf32, #tpu.memory_space<vmem>>, vector<1x32xf32>,
    %c3 = arith.constant 3 : index
    %14 = memref.load %arg1[%c3] : memref<30xi32, #tpu.memory_space<smem>>
    %15 = arith.index_cast %14 : i32 to index
    %c0_11 = arith.constant 0 : index
    %16 = vector.load %arg2[%15, %c0_11] : memref<512x32xf32, #tpu.memory_space<vmem>>, vector<1x32xf32>
    %c3_12 = arith.constant 3 : index
    %c0_13 = arith.constant 0 : index
    %17 = vector.load %arg19[%c3_12, %c0_13] : memref<32x32xf32, #tpu.memory_space<vmem>>, vector<1x32xf32>
    tpu.vector_store %arg19[%c3_12, %c0_13], %16 {strides = array<i32>} : memref<32x32xf32, #tpu.memory_space<vmem>>, vector<1x32xf32>,
    %c4 = arith.constant 4 : index
    %18 = memref.load %arg1[%c4] : memref<30xi32, #tpu.memory_space<smem>>
    %19 = arith.index_cast %18 : i32 to index
    %c0_14 = arith.constant 0 : index
    %20 = vector.load %arg2[%19, %c0_14] : memref<512x32xf32, #tpu.memory_space<vmem>>, vector<1x32xf32>
    %c4_15 = arith.constant 4 : index
    %c0_16 = arith.constant 0 : index
    %21 = vector.load %arg19[%c4_15, %c0_16] : memref<32x32xf32, #tpu.memory_space<vmem>>, vector<1x32xf32>
    tpu.vector_store %arg19[%c4_15, %c0_16], %20 {strides = array<i32>} : memref<32x32xf32, #tpu.memory_space<vmem>>, vector<1x32xf32>,
    %c5 = arith.constant 5 : index
    %22 = memref.load %arg1[%c5] : memref<30xi32, #tpu.memory_space<smem>>
    %23 = arith.index_cast %22 : i32 to index
    %c0_17 = arith.constant 0 : index
    %24 = vector.load %arg2[%23, %c0_17] : memref<512x32xf32, #tpu.memory_space<vmem>>, vector<1x32xf32>
    %c5_18 = arith.constant 5 : index
    %c0_19 = arith.constant 0 : index
    %25 = vector.load %arg19[%c5_18, %c0_19] : memref<32x32xf32, #tpu.memory_space<vmem>>, vector<1x32xf32>
    tpu.vector_store %arg19[%c5_18, %c0_19], %24 {strides = array<i32>} : memref<32x32xf32, #tpu.memory_space<vmem>>, vector<1x32xf32>,
    %c6 = arith.constant 6 : index
    %26 = memref.load %arg1[%c6] : memref<30xi32, #tpu.memory_space<smem>>
    %27 = arith.index_cast %26 : i32 to index
    %c0_20 = arith.constant 0 : index
    %28 = vector.load %arg2[%27, %c0_20] : memref<512x32xf32, #tpu.memory_space<vmem>>, vector<1x32xf32>
    %c6_21 = arith.constant 6 : index
    %c0_22 = arith.constant 0 : index
    %29 = vector.load %arg19[%c6_21, %c0_22] : memref<32x32xf32, #tpu.memory_space<vmem>>, vector<1x32xf32>
    tpu.vector_store %arg19[%c6_21, %c0_22], %28 {strides = array<i32>} : memref<32x32xf32, #tpu.memory_space<vmem>>, vector<1x32xf32>,
    %c7 = arith.constant 7 : index
    %30 = memref.load %arg1[%c7] : memref<30xi32, #tpu.memory_space<smem>>
    %31 = arith.index_cast %30 : i32 to index
    %c0_23 = arith.constant 0 : index
    %32 = vector.load %arg2[%31, %c0_23] : memref<512x32xf32, #tpu.memory_space<vmem>>, vector<1x32xf32>
    %c7_24 = arith.constant 7 : index
    %c0_25 = arith.constant 0 : index
    %33 = vector.load %arg19[%c7_24, %c0_25] : memref<32x32xf32, #tpu.memory_space<vmem>>, vector<1x32xf32>
    tpu.vector_store %arg19[%c7_24, %c0_25], %32 {strides = array<i32>} : memref<32x32xf32, #tpu.memory_space<vmem>>, vector<1x32xf32>,
    %c8 = arith.constant 8 : index
    %34 = memref.load %arg1[%c8] : memref<30xi32, #tpu.memory_space<smem>>
    %35 = arith.index_cast %34 : i32 to index
    %c0_26 = arith.constant 0 : index
    %36 = vector.load %arg2[%35, %c0_26] : memref<512x32xf32, #tpu.memory_space<vmem>>, vector<1x32xf32>
    %c8_27 = arith.constant 8 : index
    %c0_28 = arith.constant 0 : index
    %37 = vector.load %arg19[%c8_27, %c0_28] : memref<32x32xf32, #tpu.memory_space<vmem>>, vector<1x32xf32>
    tpu.vector_store %arg19[%c8_27, %c0_28], %36 {strides = array<i32>} : memref<32x32xf32, #tpu.memory_space<vmem>>, vector<1x32xf32>,
    %c9 = arith.constant 9 : index
    %38 = memref.load %arg1[%c9] : memref<30xi32, #tpu.memory_space<smem>>
    %39 = arith.index_cast %38 : i32 to index
    %c0_29 = arith.constant 0 : index
    %40 = vector.load %arg2[%39, %c0_29] : memref<512x32xf32, #tpu.memory_space<vmem>>, vector<1x32xf32>
    %c9_30 = arith.constant 9 : index
    %c0_31 = arith.constant 0 : index
    %41 = vector.load %arg19[%c9_30, %c0_31] : memref<32x32xf32, #tpu.memory_space<vmem>>, vector<1x32xf32>
    tpu.vector_store %arg19[%c9_30, %c0_31], %40 {strides = array<i32>} : memref<32x32xf32, #tpu.memory_space<vmem>>, vector<1x32xf32>,
    %c10 = arith.constant 10 : index
    %42 = memref.load %arg1[%c10] : memref<30xi32, #tpu.memory_space<smem>>
    %43 = arith.index_cast %42 : i32 to index
    %c0_32 = arith.constant 0 : index
    %44 = vector.load %arg2[%43, %c0_32] : memref<512x32xf32, #tpu.memory_space<vmem>>, vector<1x32xf32>
    %c10_33 = arith.constant 10 : index
    %c0_34 = arith.constant 0 : index
    %45 = vector.load %arg19[%c10_33, %c0_34] : memref<32x32xf32, #tpu.memory_space<vmem>>, vector<1x32xf32>
    tpu.vector_store %arg19[%c10_33, %c0_34], %44 {strides = array<i32>} : memref<32x32xf32, #tpu.memory_space<vmem>>, vector<1x32xf32>,
    %c11 = arith.constant 11 : index
    %46 = memref.load %arg1[%c11] : memref<30xi32, #tpu.memory_space<smem>>
    %47 = arith.index_cast %46 : i32 to index
    %c0_35 = arith.constant 0 : index
    %48 = vector.load %arg2[%47, %c0_35] : memref<512x32xf32, #tpu.memory_space<vmem>>, vector<1x32xf32>
    %c11_36 = arith.constant 11 : index
    %c0_37 = arith.constant 0 : index
    %49 = vector.load %arg19[%c11_36, %c0_37] : memref<32x32xf32, #tpu.memory_space<vmem>>, vector<1x32xf32>
    tpu.vector_store %arg19[%c11_36, %c0_37], %48 {strides = array<i32>} : memref<32x32xf32, #tpu.memory_space<vmem>>, vector<1x32xf32>,
    %c12 = arith.constant 12 : index
    %50 = memref.load %arg1[%c12] : memref<30xi32, #tpu.memory_space<smem>>
    %51 = arith.index_cast %50 : i32 to index
    %c0_38 = arith.constant 0 : index
    %52 = vector.load %arg2[%51, %c0_38] : memref<512x32xf32, #tpu.memory_space<vmem>>, vector<1x32xf32>
    %c12_39 = arith.constant 12 : index
    %c0_40 = arith.constant 0 : index
    %53 = vector.load %arg19[%c12_39, %c0_40] : memref<32x32xf32, #tpu.memory_space<vmem>>, vector<1x32xf32>
    tpu.vector_store %arg19[%c12_39, %c0_40], %52 {strides = array<i32>} : memref<32x32xf32, #tpu.memory_space<vmem>>, vector<1x32xf32>,
    %c13 = arith.constant 13 : index
    %54 = memref.load %arg1[%c13] : memref<30xi32, #tpu.memory_space<smem>>
    %55 = arith.index_cast %54 : i32 to index
    %c0_41 = arith.constant 0 : index
    %56 = vector.load %arg2[%55, %c0_41] : memref<512x32xf32, #tpu.memory_space<vmem>>, vector<1x32xf32>
    %c13_42 = arith.constant 13 : index
    %c0_43 = arith.constant 0 : index
    %57 = vector.load %arg19[%c13_42, %c0_43] : memref<32x32xf32, #tpu.memory_space<vmem>>, vector<1x32xf32>
    tpu.vector_store %arg19[%c13_42, %c0_43], %56 {strides = array<i32>} : memref<32x32xf32, #tpu.memory_space<vmem>>, vector<1x32xf32>,
    %c14 = arith.constant 14 : index
    %58 = memref.load %arg1[%c14] : memref<30xi32, #tpu.memory_space<smem>>
    %59 = arith.index_cast %58 : i32 to index
    %c0_44 = arith.constant 0 : index
    %60 = vector.load %arg2[%59, %c0_44] : memref<512x32xf32, #tpu.memory_space<vmem>>, vector<1x32xf32>
    %c14_45 = arith.constant 14 : index
    %c0_46 = arith.constant 0 : index
    %61 = vector.load %arg19[%c14_45, %c0_46] : memref<32x32xf32, #tpu.memory_space<vmem>>, vector<1x32xf32>
    tpu.vector_store %arg19[%c14_45, %c0_46], %60 {strides = array<i32>} : memref<32x32xf32, #tpu.memory_space<vmem>>, vector<1x32xf32>,
    %c15 = arith.constant 15 : index
    %62 = memref.load %arg1[%c15] : memref<30xi32, #tpu.memory_space<smem>>
    %63 = arith.index_cast %62 : i32 to index
    %c0_47 = arith.constant 0 : index
    %64 = vector.load %arg2[%63, %c0_47] : memref<512x32xf32, #tpu.memory_space<vmem>>, vector<1x32xf32>
    %c15_48 = arith.constant 15 : index
    %c0_49 = arith.constant 0 : index
    %65 = vector.load %arg19[%c15_48, %c0_49] : memref<32x32xf32, #tpu.memory_space<vmem>>, vector<1x32xf32>
    tpu.vector_store %arg19[%c15_48, %c0_49], %64 {strides = array<i32>} : memref<32x32xf32, #tpu.memory_space<vmem>>, vector<1x32xf32>,
    %c16 = arith.constant 16 : index
    %66 = memref.load %arg1[%c16] : memref<30xi32, #tpu.memory_space<smem>>
    %67 = arith.index_cast %66 : i32 to index
    %c0_50 = arith.constant 0 : index
    %68 = vector.load %arg2[%67, %c0_50] : memref<512x32xf32, #tpu.memory_space<vmem>>, vector<1x32xf32>
    %c16_51 = arith.constant 16 : index
    %c0_52 = arith.constant 0 : index
    %69 = vector.load %arg19[%c16_51, %c0_52] : memref<32x32xf32, #tpu.memory_space<vmem>>, vector<1x32xf32>
    tpu.vector_store %arg19[%c16_51, %c0_52], %68 {strides = array<i32>} : memref<32x32xf32, #tpu.memory_space<vmem>>, vector<1x32xf32>,
    %c17 = arith.constant 17 : index
    %70 = memref.load %arg1[%c17] : memref<30xi32, #tpu.memory_space<smem>>
    %71 = arith.index_cast %70 : i32 to index
    %c0_53 = arith.constant 0 : index
    %72 = vector.load %arg2[%71, %c0_53] : memref<512x32xf32, #tpu.memory_space<vmem>>, vector<1x32xf32>
    %c17_54 = arith.constant 17 : index
    %c0_55 = arith.constant 0 : index
    %73 = vector.load %arg19[%c17_54, %c0_55] : memref<32x32xf32, #tpu.memory_space<vmem>>, vector<1x32xf32>
    tpu.vector_store %arg19[%c17_54, %c0_55], %72 {strides = array<i32>} : memref<32x32xf32, #tpu.memory_space<vmem>>, vector<1x32xf32>,
    %c18 = arith.constant 18 : index
    %74 = memref.load %arg1[%c18] : memref<30xi32, #tpu.memory_space<smem>>
    %75 = arith.index_cast %74 : i32 to index
    %c0_56 = arith.constant 0 : index
    %76 = vector.load %arg2[%75, %c0_56] : memref<512x32xf32, #tpu.memory_space<vmem>>, vector<1x32xf32>
    %c18_57 = arith.constant 18 : index
    %c0_58 = arith.constant 0 : index
    %77 = vector.load %arg19[%c18_57, %c0_58] : memref<32x32xf32, #tpu.memory_space<vmem>>, vector<1x32xf32>
    tpu.vector_store %arg19[%c18_57, %c0_58], %76 {strides = array<i32>} : memref<32x32xf32, #tpu.memory_space<vmem>>, vector<1x32xf32>,
    %c19 = arith.constant 19 : index
    %78 = memref.load %arg1[%c19] : memref<30xi32, #tpu.memory_space<smem>>
    %79 = arith.index_cast %78 : i32 to index
    %c0_59 = arith.constant 0 : index
    %80 = vector.load %arg2[%79, %c0_59] : memref<512x32xf32, #tpu.memory_space<vmem>>, vector<1x32xf32>
    %c19_60 = arith.constant 19 : index
    %c0_61 = arith.constant 0 : index
    %81 = vector.load %arg19[%c19_60, %c0_61] : memref<32x32xf32, #tpu.memory_space<vmem>>, vector<1x32xf32>
    tpu.vector_store %arg19[%c19_60, %c0_61], %80 {strides = array<i32>} : memref<32x32xf32, #tpu.memory_space<vmem>>, vector<1x32xf32>,
    %c20 = arith.constant 20 : index
    %82 = memref.load %arg1[%c20] : memref<30xi32, #tpu.memory_space<smem>>
    %83 = arith.index_cast %82 : i32 to index
    %c0_62 = arith.constant 0 : index
    %84 = vector.load %arg2[%83, %c0_62] : memref<512x32xf32, #tpu.memory_space<vmem>>, vector<1x32xf32>
    %c20_63 = arith.constant 20 : index
    %c0_64 = arith.constant 0 : index
    %85 = vector.load %arg19[%c20_63, %c0_64] : memref<32x32xf32, #tpu.memory_space<vmem>>, vector<1x32xf32>
    tpu.vector_store %arg19[%c20_63, %c0_64], %84 {strides = array<i32>} : memref<32x32xf32, #tpu.memory_space<vmem>>, vector<1x32xf32>,
    %c21 = arith.constant 21 : index
    %86 = memref.load %arg1[%c21] : memref<30xi32, #tpu.memory_space<smem>>
    %87 = arith.index_cast %86 : i32 to index
    %c0_65 = arith.constant 0 : index
    %88 = vector.load %arg2[%87, %c0_65] : memref<512x32xf32, #tpu.memory_space<vmem>>, vector<1x32xf32>
    %c21_66 = arith.constant 21 : index
    %c0_67 = arith.constant 0 : index
    %89 = vector.load %arg19[%c21_66, %c0_67] : memref<32x32xf32, #tpu.memory_space<vmem>>, vector<1x32xf32>
    tpu.vector_store %arg19[%c21_66, %c0_67], %88 {strides = array<i32>} : memref<32x32xf32, #tpu.memory_space<vmem>>, vector<1x32xf32>,
    %c22 = arith.constant 22 : index
    %90 = memref.load %arg1[%c22] : memref<30xi32, #tpu.memory_space<smem>>
    %91 = arith.index_cast %90 : i32 to index
    %c0_68 = arith.constant 0 : index
    %92 = vector.load %arg2[%91, %c0_68] : memref<512x32xf32, #tpu.memory_space<vmem>>, vector<1x32xf32>
    %c22_69 = arith.constant 22 : index
    %c0_70 = arith.constant 0 : index
    %93 = vector.load %arg19[%c22_69, %c0_70] : memref<32x32xf32, #tpu.memory_space<vmem>>, vector<1x32xf32>
    tpu.vector_store %arg19[%c22_69, %c0_70], %92 {strides = array<i32>} : memref<32x32xf32, #tpu.memory_space<vmem>>, vector<1x32xf32>,
    %c23 = arith.constant 23 : index
    %94 = memref.load %arg1[%c23] : memref<30xi32, #tpu.memory_space<smem>>
    %95 = arith.index_cast %94 : i32 to index
    %c0_71 = arith.constant 0 : index
    %96 = vector.load %arg2[%95, %c0_71] : memref<512x32xf32, #tpu.memory_space<vmem>>, vector<1x32xf32>
    %c23_72 = arith.constant 23 : index
    %c0_73 = arith.constant 0 : index
    %97 = vector.load %arg19[%c23_72, %c0_73] : memref<32x32xf32, #tpu.memory_space<vmem>>, vector<1x32xf32>
    tpu.vector_store %arg19[%c23_72, %c0_73], %96 {strides = array<i32>} : memref<32x32xf32, #tpu.memory_space<vmem>>, vector<1x32xf32>,
    %c24 = arith.constant 24 : index
    %98 = memref.load %arg1[%c24] : memref<30xi32, #tpu.memory_space<smem>>
    %99 = arith.index_cast %98 : i32 to index
    %c0_74 = arith.constant 0 : index
    %100 = vector.load %arg2[%99, %c0_74] : memref<512x32xf32, #tpu.memory_space<vmem>>, vector<1x32xf32>
    %c24_75 = arith.constant 24 : index
    %c0_76 = arith.constant 0 : index
    %101 = vector.load %arg19[%c24_75, %c0_76] : memref<32x32xf32, #tpu.memory_space<vmem>>, vector<1x32xf32>
    tpu.vector_store %arg19[%c24_75, %c0_76], %100 {strides = array<i32>} : memref<32x32xf32, #tpu.memory_space<vmem>>, vector<1x32xf32>,
    %c25 = arith.constant 25 : index
    %102 = memref.load %arg1[%c25] : memref<30xi32, #tpu.memory_space<smem>>
    %103 = arith.index_cast %102 : i32 to index
    %c0_77 = arith.constant 0 : index
    %104 = vector.load %arg2[%103, %c0_77] : memref<512x32xf32, #tpu.memory_space<vmem>>, vector<1x32xf32>
    %c25_78 = arith.constant 25 : index
    %c0_79 = arith.constant 0 : index
    %105 = vector.load %arg19[%c25_78, %c0_79] : memref<32x32xf32, #tpu.memory_space<vmem>>, vector<1x32xf32>
    tpu.vector_store %arg19[%c25_78, %c0_79], %104 {strides = array<i32>} : memref<32x32xf32, #tpu.memory_space<vmem>>, vector<1x32xf32>,
    %c26 = arith.constant 26 : index
    %106 = memref.load %arg1[%c26] : memref<30xi32, #tpu.memory_space<smem>>
    %107 = arith.index_cast %106 : i32 to index
    %c0_80 = arith.constant 0 : index
    %108 = vector.load %arg2[%107, %c0_80] : memref<512x32xf32, #tpu.memory_space<vmem>>, vector<1x32xf32>
    %c26_81 = arith.constant 26 : index
    %c0_82 = arith.constant 0 : index
    %109 = vector.load %arg19[%c26_81, %c0_82] : memref<32x32xf32, #tpu.memory_space<vmem>>, vector<1x32xf32>
    tpu.vector_store %arg19[%c26_81, %c0_82], %108 {strides = array<i32>} : memref<32x32xf32, #tpu.memory_space<vmem>>, vector<1x32xf32>,
    %c27 = arith.constant 27 : index
    %110 = memref.load %arg1[%c27] : memref<30xi32, #tpu.memory_space<smem>>
    %111 = arith.index_cast %110 : i32 to index
    %c0_83 = arith.constant 0 : index
    %112 = vector.load %arg2[%111, %c0_83] : memref<512x32xf32, #tpu.memory_space<vmem>>, vector<1x32xf32>
    %c27_84 = arith.constant 27 : index
    %c0_85 = arith.constant 0 : index
    %113 = vector.load %arg19[%c27_84, %c0_85] : memref<32x32xf32, #tpu.memory_space<vmem>>, vector<1x32xf32>
    tpu.vector_store %arg19[%c27_84, %c0_85], %112 {strides = array<i32>} : memref<32x32xf32, #tpu.memory_space<vmem>>, vector<1x32xf32>,
    %c28 = arith.constant 28 : index
    %114 = memref.load %arg1[%c28] : memref<30xi32, #tpu.memory_space<smem>>
    %115 = arith.index_cast %114 : i32 to index
    %c0_86 = arith.constant 0 : index
    %116 = vector.load %arg2[%115, %c0_86] : memref<512x32xf32, #tpu.memory_space<vmem>>, vector<1x32xf32>
    %c28_87 = arith.constant 28 : index
    %c0_88 = arith.constant 0 : index
    %117 = vector.load %arg19[%c28_87, %c0_88] : memref<32x32xf32, #tpu.memory_space<vmem>>, vector<1x32xf32>
    tpu.vector_store %arg19[%c28_87, %c0_88], %116 {strides = array<i32>} : memref<32x32xf32, #tpu.memory_space<vmem>>, vector<1x32xf32>,
    %c29 = arith.constant 29 : index
    %118 = memref.load %arg1[%c29] : memref<30xi32, #tpu.memory_space<smem>>
    %119 = arith.index_cast %118 : i32 to index
    %c0_89 = arith.constant 0 : index
    %120 = vector.load %arg2[%119, %c0_89] : memref<512x32xf32, #tpu.memory_space<vmem>>, vector<1x32xf32>
    %c29_90 = arith.constant 29 : index
    %c0_91 = arith.constant 0 : index
    %121 = vector.load %arg19[%c29_90, %c0_91] : memref<32x32xf32, #tpu.memory_space<vmem>>, vector<1x32xf32>
    tpu.vector_store %arg19[%c29_90, %c0_91], %120 {strides = array<i32>} : memref<32x32xf32, #tpu.memory_space<vmem>>, vector<1x32xf32>,
    %c0_92 = arith.constant 0 : index
    %c0_93 = arith.constant 0 : index
    %122 = vector.load %arg19[%c0_92, %c0_93] : memref<32x32xf32, #tpu.memory_space<vmem>>, vector<32x32xf32>
    %c0_94 = arith.constant 0 : index
    %c0_95 = arith.constant 0 : index
    %123 = vector.load %arg3[%c0_94, %c0_95] : memref<32x32xf32, #tpu.memory_space<vmem>>, vector<32x32xf32>
    %c0_96 = arith.constant 0 : index
    %c0_97 = arith.constant 0 : index
    %c0_98 = arith.constant 0 : index
    %124 = vector.load %arg4[%c0_96, %c0_97, %c0_98] : memref<2x1x32xf32, #tpu.memory_space<vmem>>, vector<1x1x32xf32>
    %125 = vector.shape_cast %124 : vector<1x1x32xf32> to vector<1x32xf32>
    %c0_99 = arith.constant 0 : index
    %c0_100 = arith.constant 0 : index
    %c0_101 = arith.constant 0 : index
    %126 = vector.load %arg5[%c0_99, %c0_100, %c0_101] : memref<2x1x32xf32, #tpu.memory_space<vmem>>, vector<1x1x32xf32>
    %127 = vector.shape_cast %126 : vector<1x1x32xf32> to vector<1x32xf32>
    %cst_102 = arith.constant dense<0.000000e+00> : vector<32xf32>
    %128 = vector.multi_reduction <add>, %122, %cst_102 [1] : vector<32x32xf32> to vector<32xf32>
    %129 = vector.shape_cast %128 : vector<32xf32> to vector<32x1xf32>
    %cst_103 = arith.constant 3.200000e+01 : f32
    %130 = vector.broadcast %cst_103 : f32 to vector<32x1xf32>
    %131 = arith.divf %129, %130 : vector<32x1xf32>
    %132 = vector.broadcast %131 : vector<32x1xf32> to vector<32x32xf32>
    %133 = arith.subf %122, %132 : vector<32x32xf32>
    %134 = arith.mulf %133, %133 : vector<32x32xf32>
    %cst_104 = arith.constant dense<0.000000e+00> : vector<32xf32>
    %135 = vector.multi_reduction <add>, %134, %cst_104 [1] : vector<32x32xf32> to vector<32xf32>
    %136 = vector.shape_cast %135 : vector<32xf32> to vector<32x1xf32>
    %cst_105 = arith.constant 3.200000e+01 : f32
    %137 = vector.broadcast %cst_105 : f32 to vector<32x1xf32>
    %138 = arith.divf %136, %137 : vector<32x1xf32>
    %139 = vector.broadcast %131 : vector<32x1xf32> to vector<32x32xf32>
    %140 = arith.subf %122, %139 : vector<32x32xf32>
    %cst_106 = arith.constant 9.99999974E-6 : f32
    %141 = vector.broadcast %cst_106 : f32 to vector<32x1xf32>
    %142 = arith.addf %138, %141 : vector<32x1xf32>
    %143 = math.rsqrt %142 : vector<32x1xf32>
    %144 = vector.broadcast %143 : vector<32x1xf32> to vector<32x32xf32>
    %145 = arith.mulf %140, %144 : vector<32x32xf32>
    %146 = vector.broadcast %125 : vector<1x32xf32> to vector<32x32xf32>
    %147 = arith.mulf %145, %146 : vector<32x32xf32>
    %148 = vector.broadcast %127 : vector<1x32xf32> to vector<32x32xf32>
    %149 = arith.addf %147, %148 : vector<32x32xf32>
    %c0_107 = arith.constant 0 : index
    %c0_108 = arith.constant 0 : index
    %c0_109 = arith.constant 0 : index
    %150 = vector.load %arg6[%c0_107, %c0_108, %c0_109] : memref<2x32x64xf32, #tpu.memory_space<vmem>>, vector<1x32x64xf32>
    %151 = vector.shape_cast %150 : vector<1x32x64xf32> to vector<32x64xf32>
    %cst_110 = arith.constant dense<0.000000e+00> : vector<32x64xf32>
    %152 = tpu.matmul %149, %151, %cst_110 {dimension_numbers = #tpu.dot_dimension_numbers<[1], [0], [0], [1], [0, 0, 1, 1], [], []>} : vector<32x32xf32>, vector<32x64xf32>, vector<32x64xf32> -> vector<32x64xf32>
    %c0_111 = arith.constant 0 : index
    %c0_112 = arith.constant 0 : index
    %c0_113 = arith.constant 0 : index
    %153 = vector.load %arg7[%c0_111, %c0_112, %c0_113] : memref<2x1x64xf32, #tpu.memory_space<vmem>>, vector<1x1x64xf32>
    %154 = vector.shape_cast %153 : vector<1x1x64xf32> to vector<1x64xf32>
    %155 = vector.broadcast %154 : vector<1x64xf32> to vector<32x64xf32>
    %156 = arith.addf %152, %155 : vector<32x64xf32>
    %157 = vector.extract_strided_slice %156 {offsets = [0, 32], sizes = [32, 8], strides = [1, 1]} : vector<32x64xf32> to vector<32x8xf32>
    %158 = vector.extract_strided_slice %156 {offsets = [0, 48], sizes = [32, 8], strides = [1, 1]} : vector<32x64xf32> to vector<32x8xf32>
    %159 = vector.extract_strided_slice %156 {offsets = [0, 0], sizes = [32, 8], strides = [1, 1]} : vector<32x64xf32> to vector<32x8xf32>
    %cst_114 = arith.constant dense<0.000000e+00> : vector<32x32xf32>
    %160 = tpu.matmul %159, %157, %cst_114 {dimension_numbers = #tpu.dot_dimension_numbers<[1], [1], [0], [0], [0, 0, 1, 0], [], []>} : vector<32x8xf32>, vector<32x8xf32>, vector<32x32xf32> -> vector<32x32xf32>
    %161 = arith.addf %160, %123 : vector<32x32xf32>
    %cst_115 = arith.constant dense<0xFF800000> : vector<32xf32>
    %162 = vector.multi_reduction <maximumf>, %161, %cst_115 [1] : vector<32x32xf32> to vector<32xf32>
    %163 = vector.shape_cast %162 : vector<32xf32> to vector<32x1xf32>
    %164 = vector.broadcast %163 : vector<32x1xf32> to vector<32x32xf32>
    %165 = arith.subf %161, %164 : vector<32x32xf32>
    %166 = math.exp %165 : vector<32x32xf32>
    %cst_116 = arith.constant dense<0.000000e+00> : vector<32xf32>
    %167 = vector.multi_reduction <add>, %166, %cst_116 [1] : vector<32x32xf32> to vector<32xf32>
    %168 = vector.shape_cast %167 : vector<32xf32> to vector<32x1xf32>
    %169 = tpu.reciprocal %168 {approx = true} : vector<32x1xf32> -> vector<32x1xf32>
    %170 = vector.broadcast %169 : vector<32x1xf32> to vector<32x32xf32>
    %171 = arith.mulf %166, %170 : vector<32x32xf32>
    %cst_117 = arith.constant dense<0.000000e+00> : vector<32x8xf32>
    %172 = tpu.matmul %171, %158, %cst_117 {dimension_numbers = #tpu.dot_dimension_numbers<[1], [0], [0], [1], [0, 0, 1, 1], [], []>} : vector<32x32xf32>, vector<32x8xf32>, vector<32x8xf32> -> vector<32x8xf32>
    %173 = vector.extract_strided_slice %156 {offsets = [0, 8], sizes = [32, 8], strides = [1, 1]} : vector<32x64xf32> to vector<32x8xf32>
    %cst_118 = arith.constant dense<0.000000e+00> : vector<32x32xf32>
    %174 = tpu.matmul %173, %157, %cst_118 {dimension_numbers = #tpu.dot_dimension_numbers<[1], [1], [0], [0], [0, 0, 1, 0], [], []>} : vector<32x8xf32>, vector<32x8xf32>, vector<32x32xf32> -> vector<32x32xf32>
    %175 = arith.addf %174, %123 : vector<32x32xf32>
    %cst_119 = arith.constant dense<0xFF800000> : vector<32xf32>
    %176 = vector.multi_reduction <maximumf>, %175, %cst_119 [1] : vector<32x32xf32> to vector<32xf32>
    %177 = vector.shape_cast %176 : vector<32xf32> to vector<32x1xf32>
    %178 = vector.broadcast %177 : vector<32x1xf32> to vector<32x32xf32>
    %179 = arith.subf %175, %178 : vector<32x32xf32>
    %180 = math.exp %179 : vector<32x32xf32>
    %cst_120 = arith.constant dense<0.000000e+00> : vector<32xf32>
    %181 = vector.multi_reduction <add>, %180, %cst_120 [1] : vector<32x32xf32> to vector<32xf32>
    %182 = vector.shape_cast %181 : vector<32xf32> to vector<32x1xf32>
    %183 = tpu.reciprocal %182 {approx = true} : vector<32x1xf32> -> vector<32x1xf32>
    %184 = vector.broadcast %183 : vector<32x1xf32> to vector<32x32xf32>
    %185 = arith.mulf %180, %184 : vector<32x32xf32>
    %cst_121 = arith.constant dense<0.000000e+00> : vector<32x8xf32>
    %186 = tpu.matmul %185, %158, %cst_121 {dimension_numbers = #tpu.dot_dimension_numbers<[1], [0], [0], [1], [0, 0, 1, 1], [], []>} : vector<32x32xf32>, vector<32x8xf32>, vector<32x8xf32> -> vector<32x8xf32>
    %187 = vector.extract_strided_slice %156 {offsets = [0, 40], sizes = [32, 8], strides = [1, 1]} : vector<32x64xf32> to vector<32x8xf32>
    %188 = vector.extract_strided_slice %156 {offsets = [0, 56], sizes = [32, 8], strides = [1, 1]} : vector<32x64xf32> to vector<32x8xf32>
    %189 = vector.extract_strided_slice %156 {offsets = [0, 16], sizes = [32, 8], strides = [1, 1]} : vector<32x64xf32> to vector<32x8xf32>
    %cst_122 = arith.constant dense<0.000000e+00> : vector<32x32xf32>
    %190 = tpu.matmul %189, %187, %cst_122 {dimension_numbers = #tpu.dot_dimension_numbers<[1], [1], [0], [0], [0, 0, 1, 0], [], []>} : vector<32x8xf32>, vector<32x8xf32>, vector<32x32xf32> -> vector<32x32xf32>
    %191 = arith.addf %190, %123 : vector<32x32xf32>
    %cst_123 = arith.constant dense<0xFF800000> : vector<32xf32>
    %192 = vector.multi_reduction <maximumf>, %191, %cst_123 [1] : vector<32x32xf32> to vector<32xf32>
    %193 = vector.shape_cast %192 : vector<32xf32> to vector<32x1xf32>
    %194 = vector.broadcast %193 : vector<32x1xf32> to vector<32x32xf32>
    %195 = arith.subf %191, %194 : vector<32x32xf32>
    %196 = math.exp %195 : vector<32x32xf32>
    %cst_124 = arith.constant dense<0.000000e+00> : vector<32xf32>
    %197 = vector.multi_reduction <add>, %196, %cst_124 [1] : vector<32x32xf32> to vector<32xf32>
    %198 = vector.shape_cast %197 : vector<32xf32> to vector<32x1xf32>
    %199 = tpu.reciprocal %198 {approx = true} : vector<32x1xf32> -> vector<32x1xf32>
    %200 = vector.broadcast %199 : vector<32x1xf32> to vector<32x32xf32>
    %201 = arith.mulf %196, %200 : vector<32x32xf32>
    %cst_125 = arith.constant dense<0.000000e+00> : vector<32x8xf32>
    %202 = tpu.matmul %201, %188, %cst_125 {dimension_numbers = #tpu.dot_dimension_numbers<[1], [0], [0], [1], [0, 0, 1, 1], [], []>} : vector<32x32xf32>, vector<32x8xf32>, vector<32x8xf32> -> vector<32x8xf32>
    %203 = vector.extract_strided_slice %156 {offsets = [0, 24], sizes = [32, 8], strides = [1, 1]} : vector<32x64xf32> to vector<32x8xf32>
    %cst_126 = arith.constant dense<0.000000e+00> : vector<32x32xf32>
    %204 = tpu.matmul %203, %187, %cst_126 {dimension_numbers = #tpu.dot_dimension_numbers<[1], [1], [0], [0], [0, 0, 1, 0], [], []>} : vector<32x8xf32>, vector<32x8xf32>, vector<32x32xf32> -> vector<32x32xf32>
    %205 = arith.addf %204, %123 : vector<32x32xf32>
    %cst_127 = arith.constant dense<0xFF800000> : vector<32xf32>
    %206 = vector.multi_reduction <maximumf>, %205, %cst_127 [1] : vector<32x32xf32> to vector<32xf32>
    %207 = vector.shape_cast %206 : vector<32xf32> to vector<32x1xf32>
    %208 = vector.broadcast %207 : vector<32x1xf32> to vector<32x32xf32>
    %209 = arith.subf %205, %208 : vector<32x32xf32>
    %210 = math.exp %209 : vector<32x32xf32>
    %cst_128 = arith.constant dense<0.000000e+00> : vector<32xf32>
    %211 = vector.multi_reduction <add>, %210, %cst_128 [1] : vector<32x32xf32> to vector<32xf32>
    %212 = vector.shape_cast %211 : vector<32xf32> to vector<32x1xf32>
    %213 = tpu.reciprocal %212 {approx = true} : vector<32x1xf32> -> vector<32x1xf32>
    %214 = vector.broadcast %213 : vector<32x1xf32> to vector<32x32xf32>
    %215 = arith.mulf %210, %214 : vector<32x32xf32>
    %cst_129 = arith.constant dense<0.000000e+00> : vector<32x8xf32>
    %216 = tpu.matmul %215, %188, %cst_129 {dimension_numbers = #tpu.dot_dimension_numbers<[1], [0], [0], [1], [0, 0, 1, 1], [], []>} : vector<32x32xf32>, vector<32x8xf32>, vector<32x8xf32> -> vector<32x8xf32>
    %217 = tpu.concatenate %172, %186, %202, %216 in 1 : vector<32x8xf32>, vector<32x8xf32>, vector<32x8xf32>, vector<32x8xf32> -> vector<32x32xf32>
    %c0_130 = arith.constant 0 : index
    %c0_131 = arith.constant 0 : index
    %c0_132 = arith.constant 0 : index
    %218 = vector.load %arg8[%c0_130, %c0_131, %c0_132] : memref<2x32x32xf32, #tpu.memory_space<vmem>>, vector<1x32x32xf32>
    %219 = vector.shape_cast %218 : vector<1x32x32xf32> to vector<32x32xf32>
    %cst_133 = arith.constant dense<0.000000e+00> : vector<32x32xf32>
    %220 = tpu.matmul %217, %219, %cst_133 {dimension_numbers = #tpu.dot_dimension_numbers<[1], [0], [0], [1], [0, 0, 1, 1], [], []>} : vector<32x32xf32>, vector<32x32xf32>, vector<32x32xf32> -> vector<32x32xf32>
    %221 = arith.addf %122, %220 : vector<32x32xf32>
    %c0_134 = arith.constant 0 : index
    %c0_135 = arith.constant 0 : index
    %c0_136 = arith.constant 0 : index
    %222 = vector.load %arg9[%c0_134, %c0_135, %c0_136] : memref<2x1x32xf32, #tpu.memory_space<vmem>>, vector<1x1x32xf32>
    %223 = vector.shape_cast %222 : vector<1x1x32xf32> to vector<1x32xf32>
    %224 = vector.broadcast %223 : vector<1x32xf32> to vector<32x32xf32>
    %225 = arith.addf %221, %224 : vector<32x32xf32>
    %c0_137 = arith.constant 0 : index
    %c0_138 = arith.constant 0 : index
    %c0_139 = arith.constant 0 : index
    %226 = vector.load %arg10[%c0_137, %c0_138, %c0_139] : memref<2x1x32xf32, #tpu.memory_space<vmem>>, vector<1x1x32xf32>
    %227 = vector.shape_cast %226 : vector<1x1x32xf32> to vector<1x32xf32>
    %c0_140 = arith.constant 0 : index
    %c0_141 = arith.constant 0 : index
    %c0_142 = arith.constant 0 : index
    %228 = vector.load %arg11[%c0_140, %c0_141, %c0_142] : memref<2x1x32xf32, #tpu.memory_space<vmem>>, vector<1x1x32xf32>
    %229 = vector.shape_cast %228 : vector<1x1x32xf32> to vector<1x32xf32>
    %cst_143 = arith.constant dense<0.000000e+00> : vector<32xf32>
    %230 = vector.multi_reduction <add>, %225, %cst_143 [1] : vector<32x32xf32> to vector<32xf32>
    %231 = vector.shape_cast %230 : vector<32xf32> to vector<32x1xf32>
    %cst_144 = arith.constant 3.200000e+01 : f32
    %232 = vector.broadcast %cst_144 : f32 to vector<32x1xf32>
    %233 = arith.divf %231, %232 : vector<32x1xf32>
    %234 = vector.broadcast %233 : vector<32x1xf32> to vector<32x32xf32>
    %235 = arith.subf %225, %234 : vector<32x32xf32>
    %236 = arith.mulf %235, %235 : vector<32x32xf32>
    %cst_145 = arith.constant dense<0.000000e+00> : vector<32xf32>
    %237 = vector.multi_reduction <add>, %236, %cst_145 [1] : vector<32x32xf32> to vector<32xf32>
    %238 = vector.shape_cast %237 : vector<32xf32> to vector<32x1xf32>
    %cst_146 = arith.constant 3.200000e+01 : f32
    %239 = vector.broadcast %cst_146 : f32 to vector<32x1xf32>
    %240 = arith.divf %238, %239 : vector<32x1xf32>
    %241 = vector.broadcast %233 : vector<32x1xf32> to vector<32x32xf32>
    %242 = arith.subf %225, %241 : vector<32x32xf32>
    %cst_147 = arith.constant 9.99999974E-6 : f32
    %243 = vector.broadcast %cst_147 : f32 to vector<32x1xf32>
    %244 = arith.addf %240, %243 : vector<32x1xf32>
    %245 = math.rsqrt %244 : vector<32x1xf32>
    %246 = vector.broadcast %245 : vector<32x1xf32> to vector<32x32xf32>
    %247 = arith.mulf %242, %246 : vector<32x32xf32>
    %248 = vector.broadcast %227 : vector<1x32xf32> to vector<32x32xf32>
    %249 = arith.mulf %247, %248 : vector<32x32xf32>
    %250 = vector.broadcast %229 : vector<1x32xf32> to vector<32x32xf32>
    %251 = arith.addf %249, %250 : vector<32x32xf32>
    %c0_148 = arith.constant 0 : index
    %c0_149 = arith.constant 0 : index
    %c0_150 = arith.constant 0 : index
    %252 = vector.load %arg12[%c0_148, %c0_149, %c0_150] : memref<2x32x64xf32, #tpu.memory_space<vmem>>, vector<1x32x64xf32>
    %253 = vector.shape_cast %252 : vector<1x32x64xf32> to vector<32x64xf32>
    %cst_151 = arith.constant dense<0.000000e+00> : vector<32x64xf32>
    %254 = tpu.matmul %251, %253, %cst_151 {dimension_numbers = #tpu.dot_dimension_numbers<[1], [0], [0], [1], [0, 0, 1, 1], [], []>} : vector<32x32xf32>, vector<32x64xf32>, vector<32x64xf32> -> vector<32x64xf32>
    %c0_152 = arith.constant 0 : index
    %c0_153 = arith.constant 0 : index
    %c0_154 = arith.constant 0 : index
    %255 = vector.load %arg13[%c0_152, %c0_153, %c0_154] : memref<2x1x64xf32, #tpu.memory_space<vmem>>, vector<1x1x64xf32>
    %256 = vector.shape_cast %255 : vector<1x1x64xf32> to vector<1x64xf32>
    %257 = vector.broadcast %256 : vector<1x64xf32> to vector<32x64xf32>
    %258 = arith.addf %254, %257 : vector<32x64xf32>
    %259 = arith.mulf %258, %258 : vector<32x64xf32>
    %260 = arith.mulf %258, %259 : vector<32x64xf32>
    %cst_155 = arith.constant 4.471500e-02 : f32
    %261 = vector.broadcast %cst_155 : f32 to vector<32x64xf32>
    %262 = arith.mulf %261, %260 : vector<32x64xf32>
    %263 = arith.addf %258, %262 : vector<32x64xf32>
    %cst_156 = arith.constant 0.797884583 : f32
    %264 = vector.broadcast %cst_156 : f32 to vector<32x64xf32>
    %265 = arith.mulf %264, %263 : vector<32x64xf32>
    %266 = math.tanh %265 : vector<32x64xf32>
    %cst_157 = arith.constant 1.000000e+00 : f32
    %267 = vector.broadcast %cst_157 : f32 to vector<32x64xf32>
    %268 = arith.addf %267, %266 : vector<32x64xf32>
    %cst_158 = arith.constant 5.000000e-01 : f32
    %269 = vector.broadcast %cst_158 : f32 to vector<32x64xf32>
    %270 = arith.mulf %269, %268 : vector<32x64xf32>
    %271 = arith.mulf %258, %270 : vector<32x64xf32>
    %c0_159 = arith.constant 0 : index
    %c0_160 = arith.constant 0 : index
    %c0_161 = arith.constant 0 : index
    %272 = vector.load %arg14[%c0_159, %c0_160, %c0_161] : memref<2x64x32xf32, #tpu.memory_space<vmem>>, vector<1x64x32xf32>
    %273 = vector.shape_cast %272 : vector<1x64x32xf32> to vector<64x32xf32>
    %cst_162 = arith.constant dense<0.000000e+00> : vector<32x32xf32>
    %274 = tpu.matmul %271, %273, %cst_162 {dimension_numbers = #tpu.dot_dimension_numbers<[1], [0], [0], [1], [0, 0, 1, 1], [], []>} : vector<32x64xf32>, vector<64x32xf32>, vector<32x32xf32> -> vector<32x32xf32>
    %275 = arith.addf %225, %274 : vector<32x32xf32>
    %c0_163 = arith.constant 0 : index
    %c0_164 = arith.constant 0 : index
    %c0_165 = arith.constant 0 : index
    %276 = vector.load %arg15[%c0_163, %c0_164, %c0_165] : memref<2x1x32xf32, #tpu.memory_space<vmem>>, vector<1x1x32xf32>
    %277 = vector.shape_cast %276 : vector<1x1x32xf32> to vector<1x32xf32>
    %278 = vector.broadcast %277 : vector<1x32xf32> to vector<32x32xf32>
    %279 = arith.addf %275, %278 : vector<32x32xf32>
    %c1_166 = arith.constant 1 : index
    %c0_167 = arith.constant 0 : index
    %c0_168 = arith.constant 0 : index
    %280 = vector.load %arg4[%c1_166, %c0_167, %c0_168] : memref<2x1x32xf32, #tpu.memory_space<vmem>>, vector<1x1x32xf32>
    %281 = vector.shape_cast %280 : vector<1x1x32xf32> to vector<1x32xf32>
    %c1_169 = arith.constant 1 : index
    %c0_170 = arith.constant 0 : index
    %c0_171 = arith.constant 0 : index
    %282 = vector.load %arg5[%c1_169, %c0_170, %c0_171] : memref<2x1x32xf32, #tpu.memory_space<vmem>>, vector<1x1x32xf32>
    %283 = vector.shape_cast %282 : vector<1x1x32xf32> to vector<1x32xf32>
    %cst_172 = arith.constant dense<0.000000e+00> : vector<32xf32>
    %284 = vector.multi_reduction <add>, %279, %cst_172 [1] : vector<32x32xf32> to vector<32xf32>
    %285 = vector.shape_cast %284 : vector<32xf32> to vector<32x1xf32>
    %cst_173 = arith.constant 3.200000e+01 : f32
    %286 = vector.broadcast %cst_173 : f32 to vector<32x1xf32>
    %287 = arith.divf %285, %286 : vector<32x1xf32>
    %288 = vector.broadcast %287 : vector<32x1xf32> to vector<32x32xf32>
    %289 = arith.subf %279, %288 : vector<32x32xf32>
    %290 = arith.mulf %289, %289 : vector<32x32xf32>
    %cst_174 = arith.constant dense<0.000000e+00> : vector<32xf32>
    %291 = vector.multi_reduction <add>, %290, %cst_174 [1] : vector<32x32xf32> to vector<32xf32>
    %292 = vector.shape_cast %291 : vector<32xf32> to vector<32x1xf32>
    %cst_175 = arith.constant 3.200000e+01 : f32
    %293 = vector.broadcast %cst_175 : f32 to vector<32x1xf32>
    %294 = arith.divf %292, %293 : vector<32x1xf32>
    %295 = vector.broadcast %287 : vector<32x1xf32> to vector<32x32xf32>
    %296 = arith.subf %279, %295 : vector<32x32xf32>
    %cst_176 = arith.constant 9.99999974E-6 : f32
    %297 = vector.broadcast %cst_176 : f32 to vector<32x1xf32>
    %298 = arith.addf %294, %297 : vector<32x1xf32>
    %299 = math.rsqrt %298 : vector<32x1xf32>
    %300 = vector.broadcast %299 : vector<32x1xf32> to vector<32x32xf32>
    %301 = arith.mulf %296, %300 : vector<32x32xf32>
    %302 = vector.broadcast %281 : vector<1x32xf32> to vector<32x32xf32>
    %303 = arith.mulf %301, %302 : vector<32x32xf32>
    %304 = vector.broadcast %283 : vector<1x32xf32> to vector<32x32xf32>
    %305 = arith.addf %303, %304 : vector<32x32xf32>
    %c1_177 = arith.constant 1 : index
    %c0_178 = arith.constant 0 : index
    %c0_179 = arith.constant 0 : index
    %306 = vector.load %arg6[%c1_177, %c0_178, %c0_179] : memref<2x32x64xf32, #tpu.memory_space<vmem>>, vector<1x32x64xf32>
    %307 = vector.shape_cast %306 : vector<1x32x64xf32> to vector<32x64xf32>
    %cst_180 = arith.constant dense<0.000000e+00> : vector<32x64xf32>
    %308 = tpu.matmul %305, %307, %cst_180 {dimension_numbers = #tpu.dot_dimension_numbers<[1], [0], [0], [1], [0, 0, 1, 1], [], []>} : vector<32x32xf32>, vector<32x64xf32>, vector<32x64xf32> -> vector<32x64xf32>
    %c1_181 = arith.constant 1 : index
    %c0_182 = arith.constant 0 : index
    %c0_183 = arith.constant 0 : index
    %309 = vector.load %arg7[%c1_181, %c0_182, %c0_183] : memref<2x1x64xf32, #tpu.memory_space<vmem>>, vector<1x1x64xf32>
    %310 = vector.shape_cast %309 : vector<1x1x64xf32> to vector<1x64xf32>
    %311 = vector.broadcast %310 : vector<1x64xf32> to vector<32x64xf32>
    %312 = arith.addf %308, %311 : vector<32x64xf32>
    %313 = vector.extract_strided_slice %312 {offsets = [0, 32], sizes = [32, 8], strides = [1, 1]} : vector<32x64xf32> to vector<32x8xf32>
    %314 = vector.extract_strided_slice %312 {offsets = [0, 48], sizes = [32, 8], strides = [1, 1]} : vector<32x64xf32> to vector<32x8xf32>
    %315 = vector.extract_strided_slice %312 {offsets = [0, 0], sizes = [32, 8], strides = [1, 1]} : vector<32x64xf32> to vector<32x8xf32>
    %cst_184 = arith.constant dense<0.000000e+00> : vector<32x32xf32>
    %316 = tpu.matmul %315, %313, %cst_184 {dimension_numbers = #tpu.dot_dimension_numbers<[1], [1], [0], [0], [0, 0, 1, 0], [], []>} : vector<32x8xf32>, vector<32x8xf32>, vector<32x32xf32> -> vector<32x32xf32>
    %317 = arith.addf %316, %123 : vector<32x32xf32>
    %cst_185 = arith.constant dense<0xFF800000> : vector<32xf32>
    %318 = vector.multi_reduction <maximumf>, %317, %cst_185 [1] : vector<32x32xf32> to vector<32xf32>
    %319 = vector.shape_cast %318 : vector<32xf32> to vector<32x1xf32>
    %320 = vector.broadcast %319 : vector<32x1xf32> to vector<32x32xf32>
    %321 = arith.subf %317, %320 : vector<32x32xf32>
    %322 = math.exp %321 : vector<32x32xf32>
    %cst_186 = arith.constant dense<0.000000e+00> : vector<32xf32>
    %323 = vector.multi_reduction <add>, %322, %cst_186 [1] : vector<32x32xf32> to vector<32xf32>
    %324 = vector.shape_cast %323 : vector<32xf32> to vector<32x1xf32>
    %325 = tpu.reciprocal %324 {approx = true} : vector<32x1xf32> -> vector<32x1xf32>
    %326 = vector.broadcast %325 : vector<32x1xf32> to vector<32x32xf32>
    %327 = arith.mulf %322, %326 : vector<32x32xf32>
    %cst_187 = arith.constant dense<0.000000e+00> : vector<32x8xf32>
    %328 = tpu.matmul %327, %314, %cst_187 {dimension_numbers = #tpu.dot_dimension_numbers<[1], [0], [0], [1], [0, 0, 1, 1], [], []>} : vector<32x32xf32>, vector<32x8xf32>, vector<32x8xf32> -> vector<32x8xf32>
    %329 = vector.extract_strided_slice %312 {offsets = [0, 8], sizes = [32, 8], strides = [1, 1]} : vector<32x64xf32> to vector<32x8xf32>
    %cst_188 = arith.constant dense<0.000000e+00> : vector<32x32xf32>
    %330 = tpu.matmul %329, %313, %cst_188 {dimension_numbers = #tpu.dot_dimension_numbers<[1], [1], [0], [0], [0, 0, 1, 0], [], []>} : vector<32x8xf32>, vector<32x8xf32>, vector<32x32xf32> -> vector<32x32xf32>
    %331 = arith.addf %330, %123 : vector<32x32xf32>
    %cst_189 = arith.constant dense<0xFF800000> : vector<32xf32>
    %332 = vector.multi_reduction <maximumf>, %331, %cst_189 [1] : vector<32x32xf32> to vector<32xf32>
    %333 = vector.shape_cast %332 : vector<32xf32> to vector<32x1xf32>
    %334 = vector.broadcast %333 : vector<32x1xf32> to vector<32x32xf32>
    %335 = arith.subf %331, %334 : vector<32x32xf32>
    %336 = math.exp %335 : vector<32x32xf32>
    %cst_190 = arith.constant dense<0.000000e+00> : vector<32xf32>
    %337 = vector.multi_reduction <add>, %336, %cst_190 [1] : vector<32x32xf32> to vector<32xf32>
    %338 = vector.shape_cast %337 : vector<32xf32> to vector<32x1xf32>
    %339 = tpu.reciprocal %338 {approx = true} : vector<32x1xf32> -> vector<32x1xf32>
    %340 = vector.broadcast %339 : vector<32x1xf32> to vector<32x32xf32>
    %341 = arith.mulf %336, %340 : vector<32x32xf32>
    %cst_191 = arith.constant dense<0.000000e+00> : vector<32x8xf32>
    %342 = tpu.matmul %341, %314, %cst_191 {dimension_numbers = #tpu.dot_dimension_numbers<[1], [0], [0], [1], [0, 0, 1, 1], [], []>} : vector<32x32xf32>, vector<32x8xf32>, vector<32x8xf32> -> vector<32x8xf32>
    %343 = vector.extract_strided_slice %312 {offsets = [0, 40], sizes = [32, 8], strides = [1, 1]} : vector<32x64xf32> to vector<32x8xf32>
    %344 = vector.extract_strided_slice %312 {offsets = [0, 56], sizes = [32, 8], strides = [1, 1]} : vector<32x64xf32> to vector<32x8xf32>
    %345 = vector.extract_strided_slice %312 {offsets = [0, 16], sizes = [32, 8], strides = [1, 1]} : vector<32x64xf32> to vector<32x8xf32>
    %cst_192 = arith.constant dense<0.000000e+00> : vector<32x32xf32>
    %346 = tpu.matmul %345, %343, %cst_192 {dimension_numbers = #tpu.dot_dimension_numbers<[1], [1], [0], [0], [0, 0, 1, 0], [], []>} : vector<32x8xf32>, vector<32x8xf32>, vector<32x32xf32> -> vector<32x32xf32>
    %347 = arith.addf %346, %123 : vector<32x32xf32>
    %cst_193 = arith.constant dense<0xFF800000> : vector<32xf32>
    %348 = vector.multi_reduction <maximumf>, %347, %cst_193 [1] : vector<32x32xf32> to vector<32xf32>
    %349 = vector.shape_cast %348 : vector<32xf32> to vector<32x1xf32>
    %350 = vector.broadcast %349 : vector<32x1xf32> to vector<32x32xf32>
    %351 = arith.subf %347, %350 : vector<32x32xf32>
    %352 = math.exp %351 : vector<32x32xf32>
    %cst_194 = arith.constant dense<0.000000e+00> : vector<32xf32>
    %353 = vector.multi_reduction <add>, %352, %cst_194 [1] : vector<32x32xf32> to vector<32xf32>
    %354 = vector.shape_cast %353 : vector<32xf32> to vector<32x1xf32>
    %355 = tpu.reciprocal %354 {approx = true} : vector<32x1xf32> -> vector<32x1xf32>
    %356 = vector.broadcast %355 : vector<32x1xf32> to vector<32x32xf32>
    %357 = arith.mulf %352, %356 : vector<32x32xf32>
    %cst_195 = arith.constant dense<0.000000e+00> : vector<32x8xf32>
    %358 = tpu.matmul %357, %344, %cst_195 {dimension_numbers = #tpu.dot_dimension_numbers<[1], [0], [0], [1], [0, 0, 1, 1], [], []>} : vector<32x32xf32>, vector<32x8xf32>, vector<32x8xf32> -> vector<32x8xf32>
    %359 = vector.extract_strided_slice %312 {offsets = [0, 24], sizes = [32, 8], strides = [1, 1]} : vector<32x64xf32> to vector<32x8xf32>
    %cst_196 = arith.constant dense<0.000000e+00> : vector<32x32xf32>
    %360 = tpu.matmul %359, %343, %cst_196 {dimension_numbers = #tpu.dot_dimension_numbers<[1], [1], [0], [0], [0, 0, 1, 0], [], []>} : vector<32x8xf32>, vector<32x8xf32>, vector<32x32xf32> -> vector<32x32xf32>
    %361 = arith.addf %360, %123 : vector<32x32xf32>
    %cst_197 = arith.constant dense<0xFF800000> : vector<32xf32>
    %362 = vector.multi_reduction <maximumf>, %361, %cst_197 [1] : vector<32x32xf32> to vector<32xf32>
    %363 = vector.shape_cast %362 : vector<32xf32> to vector<32x1xf32>
    %364 = vector.broadcast %363 : vector<32x1xf32> to vector<32x32xf32>
    %365 = arith.subf %361, %364 : vector<32x32xf32>
    %366 = math.exp %365 : vector<32x32xf32>
    %cst_198 = arith.constant dense<0.000000e+00> : vector<32xf32>
    %367 = vector.multi_reduction <add>, %366, %cst_198 [1] : vector<32x32xf32> to vector<32xf32>
    %368 = vector.shape_cast %367 : vector<32xf32> to vector<32x1xf32>
    %369 = tpu.reciprocal %368 {approx = true} : vector<32x1xf32> -> vector<32x1xf32>
    %370 = vector.broadcast %369 : vector<32x1xf32> to vector<32x32xf32>
    %371 = arith.mulf %366, %370 : vector<32x32xf32>
    %cst_199 = arith.constant dense<0.000000e+00> : vector<32x8xf32>
    %372 = tpu.matmul %371, %344, %cst_199 {dimension_numbers = #tpu.dot_dimension_numbers<[1], [0], [0], [1], [0, 0, 1, 1], [], []>} : vector<32x32xf32>, vector<32x8xf32>, vector<32x8xf32> -> vector<32x8xf32>
    %373 = tpu.concatenate %328, %342, %358, %372 in 1 : vector<32x8xf32>, vector<32x8xf32>, vector<32x8xf32>, vector<32x8xf32> -> vector<32x32xf32>
    %c1_200 = arith.constant 1 : index
    %c0_201 = arith.constant 0 : index
    %c0_202 = arith.constant 0 : index
    %374 = vector.load %arg8[%c1_200, %c0_201, %c0_202] : memref<2x32x32xf32, #tpu.memory_space<vmem>>, vector<1x32x32xf32>
    %375 = vector.shape_cast %374 : vector<1x32x32xf32> to vector<32x32xf32>
    %cst_203 = arith.constant dense<0.000000e+00> : vector<32x32xf32>
    %376 = tpu.matmul %373, %375, %cst_203 {dimension_numbers = #tpu.dot_dimension_numbers<[1], [0], [0], [1], [0, 0, 1, 1], [], []>} : vector<32x32xf32>, vector<32x32xf32>, vector<32x32xf32> -> vector<32x32xf32>
    %377 = arith.addf %279, %376 : vector<32x32xf32>
    %c1_204 = arith.constant 1 : index
    %c0_205 = arith.constant 0 : index
    %c0_206 = arith.constant 0 : index
    %378 = vector.load %arg9[%c1_204, %c0_205, %c0_206] : memref<2x1x32xf32, #tpu.memory_space<vmem>>, vector<1x1x32xf32>
    %379 = vector.shape_cast %378 : vector<1x1x32xf32> to vector<1x32xf32>
    %380 = vector.broadcast %379 : vector<1x32xf32> to vector<32x32xf32>
    %381 = arith.addf %377, %380 : vector<32x32xf32>
    %c1_207 = arith.constant 1 : index
    %c0_208 = arith.constant 0 : index
    %c0_209 = arith.constant 0 : index
    %382 = vector.load %arg10[%c1_207, %c0_208, %c0_209] : memref<2x1x32xf32, #tpu.memory_space<vmem>>, vector<1x1x32xf32>
    %383 = vector.shape_cast %382 : vector<1x1x32xf32> to vector<1x32xf32>
    %c1_210 = arith.constant 1 : index
    %c0_211 = arith.constant 0 : index
    %c0_212 = arith.constant 0 : index
    %384 = vector.load %arg11[%c1_210, %c0_211, %c0_212] : memref<2x1x32xf32, #tpu.memory_space<vmem>>, vector<1x1x32xf32>
    %385 = vector.shape_cast %384 : vector<1x1x32xf32> to vector<1x32xf32>
    %cst_213 = arith.constant dense<0.000000e+00> : vector<32xf32>
    %386 = vector.multi_reduction <add>, %381, %cst_213 [1] : vector<32x32xf32> to vector<32xf32>
    %387 = vector.shape_cast %386 : vector<32xf32> to vector<32x1xf32>
    %cst_214 = arith.constant 3.200000e+01 : f32
    %388 = vector.broadcast %cst_214 : f32 to vector<32x1xf32>
    %389 = arith.divf %387, %388 : vector<32x1xf32>
    %390 = vector.broadcast %389 : vector<32x1xf32> to vector<32x32xf32>
    %391 = arith.subf %381, %390 : vector<32x32xf32>
    %392 = arith.mulf %391, %391 : vector<32x32xf32>
    %cst_215 = arith.constant dense<0.000000e+00> : vector<32xf32>
    %393 = vector.multi_reduction <add>, %392, %cst_215 [1] : vector<32x32xf32> to vector<32xf32>
    %394 = vector.shape_cast %393 : vector<32xf32> to vector<32x1xf32>
    %cst_216 = arith.constant 3.200000e+01 : f32
    %395 = vector.broadcast %cst_216 : f32 to vector<32x1xf32>
    %396 = arith.divf %394, %395 : vector<32x1xf32>
    %397 = vector.broadcast %389 : vector<32x1xf32> to vector<32x32xf32>
    %398 = arith.subf %381, %397 : vector<32x32xf32>
    %cst_217 = arith.constant 9.99999974E-6 : f32
    %399 = vector.broadcast %cst_217 : f32 to vector<32x1xf32>
    %400 = arith.addf %396, %399 : vector<32x1xf32>
    %401 = math.rsqrt %400 : vector<32x1xf32>
    %402 = vector.broadcast %401 : vector<32x1xf32> to vector<32x32xf32>
    %403 = arith.mulf %398, %402 : vector<32x32xf32>
    %404 = vector.broadcast %383 : vector<1x32xf32> to vector<32x32xf32>
    %405 = arith.mulf %403, %404 : vector<32x32xf32>
    %406 = vector.broadcast %385 : vector<1x32xf32> to vector<32x32xf32>
    %407 = arith.addf %405, %406 : vector<32x32xf32>
    %c1_218 = arith.constant 1 : index
    %c0_219 = arith.constant 0 : index
    %c0_220 = arith.constant 0 : index
    %408 = vector.load %arg12[%c1_218, %c0_219, %c0_220] : memref<2x32x64xf32, #tpu.memory_space<vmem>>, vector<1x32x64xf32>
    %409 = vector.shape_cast %408 : vector<1x32x64xf32> to vector<32x64xf32>
    %cst_221 = arith.constant dense<0.000000e+00> : vector<32x64xf32>
    %410 = tpu.matmul %407, %409, %cst_221 {dimension_numbers = #tpu.dot_dimension_numbers<[1], [0], [0], [1], [0, 0, 1, 1], [], []>} : vector<32x32xf32>, vector<32x64xf32>, vector<32x64xf32> -> vector<32x64xf32>
    %c1_222 = arith.constant 1 : index
    %c0_223 = arith.constant 0 : index
    %c0_224 = arith.constant 0 : index
    %411 = vector.load %arg13[%c1_222, %c0_223, %c0_224] : memref<2x1x64xf32, #tpu.memory_space<vmem>>, vector<1x1x64xf32>
    %412 = vector.shape_cast %411 : vector<1x1x64xf32> to vector<1x64xf32>
    %413 = vector.broadcast %412 : vector<1x64xf32> to vector<32x64xf32>
    %414 = arith.addf %410, %413 : vector<32x64xf32>
    %415 = arith.mulf %414, %414 : vector<32x64xf32>
    %416 = arith.mulf %414, %415 : vector<32x64xf32>
    %cst_225 = arith.constant 4.471500e-02 : f32
    %417 = vector.broadcast %cst_225 : f32 to vector<32x64xf32>
    %418 = arith.mulf %417, %416 : vector<32x64xf32>
    %419 = arith.addf %414, %418 : vector<32x64xf32>
    %cst_226 = arith.constant 0.797884583 : f32
    %420 = vector.broadcast %cst_226 : f32 to vector<32x64xf32>
    %421 = arith.mulf %420, %419 : vector<32x64xf32>
    %422 = math.tanh %421 : vector<32x64xf32>
    %cst_227 = arith.constant 1.000000e+00 : f32
    %423 = vector.broadcast %cst_227 : f32 to vector<32x64xf32>
    %424 = arith.addf %423, %422 : vector<32x64xf32>
    %cst_228 = arith.constant 5.000000e-01 : f32
    %425 = vector.broadcast %cst_228 : f32 to vector<32x64xf32>
    %426 = arith.mulf %425, %424 : vector<32x64xf32>
    %427 = arith.mulf %414, %426 : vector<32x64xf32>
    %c1_229 = arith.constant 1 : index
    %c0_230 = arith.constant 0 : index
    %c0_231 = arith.constant 0 : index
    %428 = vector.load %arg14[%c1_229, %c0_230, %c0_231] : memref<2x64x32xf32, #tpu.memory_space<vmem>>, vector<1x64x32xf32>
    %429 = vector.shape_cast %428 : vector<1x64x32xf32> to vector<64x32xf32>
    %cst_232 = arith.constant dense<0.000000e+00> : vector<32x32xf32>
    %430 = tpu.matmul %427, %429, %cst_232 {dimension_numbers = #tpu.dot_dimension_numbers<[1], [0], [0], [1], [0, 0, 1, 1], [], []>} : vector<32x64xf32>, vector<64x32xf32>, vector<32x32xf32> -> vector<32x32xf32>
    %431 = arith.addf %381, %430 : vector<32x32xf32>
    %c1_233 = arith.constant 1 : index
    %c0_234 = arith.constant 0 : index
    %c0_235 = arith.constant 0 : index
    %432 = vector.load %arg15[%c1_233, %c0_234, %c0_235] : memref<2x1x32xf32, #tpu.memory_space<vmem>>, vector<1x1x32xf32>
    %433 = vector.shape_cast %432 : vector<1x1x32xf32> to vector<1x32xf32>
    %434 = vector.broadcast %433 : vector<1x32xf32> to vector<32x32xf32>
    %435 = arith.addf %431, %434 : vector<32x32xf32>
    %c0_236 = arith.constant 0 : index
    %c0_237 = arith.constant 0 : index
    %436 = vector.load %arg16[%c0_236, %c0_237] : memref<32x512xf32, #tpu.memory_space<vmem>>, vector<32x512xf32>
    %cst_238 = arith.constant dense<0.000000e+00> : vector<32x512xf32>
    %437 = tpu.matmul %435, %436, %cst_238 {dimension_numbers = #tpu.dot_dimension_numbers<[1], [0], [0], [1], [0, 0, 1, 1], [], []>} : vector<32x32xf32>, vector<32x512xf32>, vector<32x512xf32> -> vector<32x512xf32>
    %c0_239 = arith.constant 0 : index
    %c0_240 = arith.constant 0 : index
    %438 = vector.load %arg17[%c0_239, %c0_240] : memref<1x512xf32, #tpu.memory_space<vmem>>, vector<1x512xf32>
    %439 = vector.broadcast %438 : vector<1x512xf32> to vector<32x512xf32>
    %440 = arith.addf %437, %439 : vector<32x512xf32>
    %441 = vector.extract_strided_slice %440 {offsets = [0, 0], sizes = [30, 512], strides = [1, 1]} : vector<32x512xf32> to vector<30x512xf32>
    %c0_241 = arith.constant 0 : index
    %c0_242 = arith.constant 0 : index
    %442 = vector.load %arg18[%c0_241, %c0_242] : memref<30x512xf32, #tpu.memory_space<vmem>>, vector<30x512xf32>
    tpu.vector_store %arg18[%c0_241, %c0_242], %441 {strides = array<i32>} : memref<30x512xf32, #tpu.memory_space<vmem>>, vector<30x512xf32>,
    return
  }
  func.func @transform_0(%arg0: i32, %arg1: memref<30xi32, #tpu.memory_space<smem>>) -> (i32, i32) {
    %c0_i32 = arith.constant 0 : i32
    %c0_i32_0 = arith.constant 0 : i32
    %c0_i32_1 = arith.constant 0 : i32
    return %c0_i32, %c0_i32_0 : i32, i32
  }
  func.func @transform_1(%arg0: i32, %arg1: memref<30xi32, #tpu.memory_space<smem>>) -> (i32, i32) {
    %c0_i32 = arith.constant 0 : i32
    %c0_i32_0 = arith.constant 0 : i32
    %c0_i32_1 = arith.constant 0 : i32
    return %c0_i32, %c0_i32_0 : i32, i32
  }
  func.func @transform_2(%arg0: i32, %arg1: memref<30xi32, #tpu.memory_space<smem>>) -> (i32, i32, i32) {
    %c0_i32 = arith.constant 0 : i32
    %c0_i32_0 = arith.constant 0 : i32
    %c0_i32_1 = arith.constant 0 : i32
    %c0_i32_2 = arith.constant 0 : i32
    return %c0_i32, %c0_i32_0, %c0_i32_1 : i32, i32, i32
  }
  func.func @transform_3(%arg0: i32, %arg1: memref<30xi32, #tpu.memory_space<smem>>) -> (i32, i32, i32) {
    %c0_i32 = arith.constant 0 : i32
    %c0_i32_0 = arith.constant 0 : i32
    %c0_i32_1 = arith.constant 0 : i32
    %c0_i32_2 = arith.constant 0 : i32
    return %c0_i32, %c0_i32_0, %c0_i32_1 : i32, i32, i32
  }
  func.func @transform_4(%arg0: i32, %arg1: memref<30xi32, #tpu.memory_space<smem>>) -> (i32, i32, i32) {
    %c0_i32 = arith.constant 0 : i32
    %c0_i32_0 = arith.constant 0 : i32
    %c0_i32_1 = arith.constant 0 : i32
    %c0_i32_2 = arith.constant 0 : i32
    return %c0_i32, %c0_i32_0, %c0_i32_1 : i32, i32, i32
  }
  func.func @transform_5(%arg0: i32, %arg1: memref<30xi32, #tpu.memory_space<smem>>) -> (i32, i32, i32) {
    %c0_i32 = arith.constant 0 : i32
    %c0_i32_0 = arith.constant 0 : i32
    %c0_i32_1 = arith.constant 0 : i32
    %c0_i32_2 = arith.constant 0 : i32
    return %c0_i32, %c0_i32_0, %c0_i32_1 : i32, i32, i32
  }
  func.func @transform_6(%arg0: i32, %arg1: memref<30xi32, #tpu.memory_space<smem>>) -> (i32, i32, i32) {
    %c0_i32 = arith.constant 0 : i32
    %c0_i32_0 = arith.constant 0 : i32
    %c0_i32_1 = arith.constant 0 : i32
    %c0_i32_2 = arith.constant 0 : i32
    return %c0_i32, %c0_i32_0, %c0_i32_1 : i32, i32, i32
  }
  func.func @transform_7(%arg0: i32, %arg1: memref<30xi32, #tpu.memory_space<smem>>) -> (i32, i32, i32) {
    %c0_i32 = arith.constant 0 : i32
    %c0_i32_0 = arith.constant 0 : i32
    %c0_i32_1 = arith.constant 0 : i32
    %c0_i32_2 = arith.constant 0 : i32
    return %c0_i32, %c0_i32_0, %c0_i32_1 : i32, i32, i32
  }
  func.func @transform_8(%arg0: i32, %arg1: memref<30xi32, #tpu.memory_space<smem>>) -> (i32, i32, i32) {
    %c0_i32 = arith.constant 0 : i32
    %c0_i32_0 = arith.constant 0 : i32
    %c0_i32_1 = arith.constant 0 : i32
    %c0_i32_2 = arith.constant 0 : i32
    return %c0_i32, %c0_i32_0, %c0_i32_1 : i32, i32, i32
  }
  func.func @transform_9(%arg0: i32, %arg1: memref<30xi32, #tpu.memory_space<smem>>) -> (i32, i32, i32) {
    %c0_i32 = arith.constant 0 : i32
    %c0_i32_0 = arith.constant 0 : i32
    %c0_i32_1 = arith.constant 0 : i32
    %c0_i32_2 = arith.constant 0 : i32
    return %c0_i32, %c0_i32_0, %c0_i32_1 : i32, i32, i32
  }
  func.func @transform_10(%arg0: i32, %arg1: memref<30xi32, #tpu.memory_space<smem>>) -> (i32, i32, i32) {
    %c0_i32 = arith.constant 0 : i32
    %c0_i32_0 = arith.constant 0 : i32
    %c0_i32_1 = arith.constant 0 : i32
    %c0_i32_2 = arith.constant 0 : i32
    return %c0_i32, %c0_i32_0, %c0_i32_1 : i32, i32, i32
  }
  func.func @transform_11(%arg0: i32, %arg1: memref<30xi32, #tpu.memory_space<smem>>) -> (i32, i32, i32) {
    %c0_i32 = arith.constant 0 : i32
    %c0_i32_0 = arith.constant 0 : i32
    %c0_i32_1 = arith.constant 0 : i32
    %c0_i32_2 = arith.constant 0 : i32
    return %c0_i32, %c0_i32_0, %c0_i32_1 : i32, i32, i32
  }
  func.func @transform_12(%arg0: i32, %arg1: memref<30xi32, #tpu.memory_space<smem>>) -> (i32, i32, i32) {
    %c0_i32 = arith.constant 0 : i32
    %c0_i32_0 = arith.constant 0 : i32
    %c0_i32_1 = arith.constant 0 : i32
    %c0_i32_2 = arith.constant 0 : i32
    return %c0_i32, %c0_i32_0, %c0_i32_1 : i32, i32, i32
  }
  func.func @transform_13(%arg0: i32, %arg1: memref<30xi32, #tpu.memory_space<smem>>) -> (i32, i32, i32) {
    %c0_i32 = arith.constant 0 : i32
    %c0_i32_0 = arith.constant 0 : i32
    %c0_i32_1 = arith.constant 0 : i32
    %c0_i32_2 = arith.constant 0 : i32
    return %c0_i32, %c0_i32_0, %c0_i32_1 : i32, i32, i32
  }
  func.func @transform_14(%arg0: i32, %arg1: memref<30xi32, #tpu.memory_space<smem>>) -> (i32, i32) {
    %c0_i32 = arith.constant 0 : i32
    %c0_i32_0 = arith.constant 0 : i32
    %c0_i32_1 = arith.constant 0 : i32
    return %c0_i32, %c0_i32_0 : i32, i32
  }
  func.func @transform_15(%arg0: i32, %arg1: memref<30xi32, #tpu.memory_space<smem>>) -> (i32, i32) {
    %c0_i32 = arith.constant 0 : i32
    %c0_i32_0 = arith.constant 0 : i32
    %c0_i32_1 = arith.constant 0 : i32
    return %c0_i32, %c0_i32_0 : i32, i32
  }
  func.func @transform_16(%arg0: i32, %arg1: memref<30xi32, #tpu.memory_space<smem>>) -> (i32, i32) {
    %c0_i32 = arith.constant 0 : i32
    %c0_i32_0 = arith.constant 0 : i32
    %c0_i32_1 = arith.constant 0 : i32
    return %c0_i32, %c0_i32_0 : i32, i32
  }
}

</mosaic_0001>

<llo_original>
// kernel: net_forward.1
$region0: #{net_forward.1}
  #allocation0 [shape = 'u32[]', space=smem, size = 0x4, offset = 0x4, fixed_abs, tag = 'smem constant byte address 0x4 - core index']
  #allocation1 [shape = 'u32[144,128]{1,0:T(1,128)}', space=vmem, size = 0x12000, scoped, tag = 'internal scratch']
  #allocation2 [shape = 'f32[32,32]{1,0:T(8,128)}', space=vmem, size = 0x4000, scoped, tag = 'scratch operand']
  #allocation3 [shape = 's32[1]{0}', space=sflag, size = 0x4, scoped, tag = 'scoped memory for net_forward.1']
  #allocation4 [shape = 'u8[512]{0}', space=smem, size = 0x200, scoped, tag = 'prefetched SMEM operand 0']
  %s0 = inlined_call_operand.vmem [shape: s32[30], index: 0, kind: input, shape index: {}]
  %s1 = inlined_call_operand.vmem [shape: f32[512,32], index: 1, kind: input, shape index: {}]
  %s2 = inlined_call_operand.vmem [shape: f32[32,32], index: 2, kind: input, shape index: {}]
  %s3 = inlined_call_operand.vmem [shape: f32[2,1,32], index: 3, kind: input, shape index: {}]
  %s4 = inlined_call_operand.vmem [shape: f32[2,1,32], index: 4, kind: input, shape index: {}]
  %s5 = inlined_call_operand.vmem [shape: f32[2,32,64], index: 5, kind: input, shape index: {}]
  %s6 = inlined_call_operand.vmem [shape: f32[2,1,64], index: 6, kind: input, shape index: {}]
  %s7 = inlined_call_operand.vmem [shape: f32[2,32,32], index: 7, kind: input, shape index: {}]
  %s8 = inlined_call_operand.vmem [shape: f32[2,1,32], index: 8, kind: input, shape index: {}]
  %s9 = inlined_call_operand.vmem [shape: f32[2,1,32], index: 9, kind: input, shape index: {}]
  %s10 = inlined_call_operand.vmem [shape: f32[2,1,32], index: 10, kind: input, shape index: {}]
  %s11 = inlined_call_operand.vmem [shape: f32[2,32,64], index: 11, kind: input, shape index: {}]
  %s12 = inlined_call_operand.vmem [shape: f32[2,1,64], index: 12, kind: input, shape index: {}]
  %s13 = inlined_call_operand.vmem [shape: f32[2,64,32], index: 13, kind: input, shape index: {}]
  %s14 = inlined_call_operand.vmem [shape: f32[2,1,32], index: 14, kind: input, shape index: {}]
  %s15 = inlined_call_operand.vmem [shape: f32[32,512], index: 15, kind: input, shape index: {}]
  %s16 = inlined_call_operand.vmem [shape: f32[1,512], index: 16, kind: input, shape index: {}]
  %s17 = inlined_call_operand.vmem [shape: f32[30,512], index: 17, kind: output, shape index: {}]
  %s18 = sld [smem:[#allocation0]]
  $region74: #{net_forward.1} parent=0
    _
  %s20 = ssub.s32 1, %s18
  %s21 = scalar_select 0, %s20, %s18
  %s22 = sshll.u32 %s0, 4
  %s23 = int_to_ptr.vmem [resolvable:$true] %s22
  %25 = dma.vmem_to_smem %s23, 16, [#allocation4], [#allocation3]
  %26 = dma.done [#allocation3], 16
  %27 = sfence
  // Predicated region
  $region2: #{net_forward.1} parent=0 // pred_check
    _
  $region3: #{net_forward.1} parent=0 // pred_check_branch
    %29 = sbr.rel (0) target = $region5
  $region4: #{net_forward.1} parent=0 // pred_region
    _
  $region5: #{net_forward.1} parent=0 // pred_fallthru
    _
  // Predicated region
  $region6: #{net_forward.1} parent=0 // pred_check
    _
  $region7: #{net_forward.1} parent=0 // pred_check_branch
    %31 = sbr.rel (0) target = $region9
  $region8: #{net_forward.1} parent=0 // pred_region
    _
  $region9: #{net_forward.1} parent=0 // pred_fallthru
    _
  // Predicated region
  $region10: #{net_forward.1} parent=0 // pred_check
    _
  $region11: #{net_forward.1} parent=0 // pred_check_branch
    %33 = sbr.rel (0) target = $region13
  $region12: #{net_forward.1} parent=0 // pred_region
    _
  $region13: #{net_forward.1} parent=0 // pred_fallthru
    _
  // Predicated region
  $region14: #{net_forward.1} parent=0 // pred_check
    _
  $region15: #{net_forward.1} parent=0 // pred_check_branch
    %35 = sbr.rel (0) target = $region17
  $region16: #{net_forward.1} parent=0 // pred_region
    _
  $region17: #{net_forward.1} parent=0 // pred_fallthru
    _
  // Predicated region
  $region18: #{net_forward.1} parent=0 // pred_check
    _
  $region19: #{net_forward.1} parent=0 // pred_check_branch
    %37 = sbr.rel (0) target = $region21
  $region20: #{net_forward.1} parent=0 // pred_region
    _
  $region21: #{net_forward.1} parent=0 // pred_fallthru
    _
  // Predicated region
  $region22: #{net_forward.1} parent=0 // pred_check
    _
  $region23: #{net_forward.1} parent=0 // pred_check_branch
    %39 = sbr.rel (0) target = $region25
  $region24: #{net_forward.1} parent=0 // pred_region
    _
  $region25: #{net_forward.1} parent=0 // pred_fallthru
    _
  // Predicated region
  $region26: #{net_forward.1} parent=0 // pred_check
    _
  $region27: #{net_forward.1} parent=0 // pred_check_branch
    %41 = sbr.rel (0) target = $region29
  $region28: #{net_forward.1} parent=0 // pred_region
    _
  $region29: #{net_forward.1} parent=0 // pred_fallthru
    _
  // Predicated region
  $region30: #{net_forward.1} parent=0 // pred_check
    _
  $region31: #{net_forward.1} parent=0 // pred_check_branch
    %43 = sbr.rel (0) target = $region33
  $region32: #{net_forward.1} parent=0 // pred_region
    _
  $region33: #{net_forward.1} parent=0 // pred_fallthru
    _
  // Predicated region
  $region34: #{net_forward.1} parent=0 // pred_check
    _
  $region35: #{net_forward.1} parent=0 // pred_check_branch
    %45 = sbr.rel (0) target = $region37
  $region36: #{net_forward.1} parent=0 // pred_region
    _
  $region37: #{net_forward.1} parent=0 // pred_fallthru
    _
  // Predicated region
  $region38: #{net_forward.1} parent=0 // pred_check
    _
  $region39: #{net_forward.1} parent=0 // pred_check_branch
    %47 = sbr.rel (0) target = $region41
  $region40: #{net_forward.1} parent=0 // pred_region
    _
  $region41: #{net_forward.1} parent=0 // pred_fallthru
    _
  // Predicated region
  $region42: #{net_forward.1} parent=0 // pred_check
    _
  $region43: #{net_forward.1} parent=0 // pred_check_branch
    %49 = sbr.rel (0) target = $region45
  $region44: #{net_forward.1} parent=0 // pred_region
    _
  $region45: #{net_forward.1} parent=0 // pred_fallthru
    _
  // Predicated region
  $region46: #{net_forward.1} parent=0 // pred_check
    _
  $region47: #{net_forward.1} parent=0 // pred_check_branch
    %51 = sbr.rel (0) target = $region49
  $region48: #{net_forward.1} parent=0 // pred_region
    _
  $region49: #{net_forward.1} parent=0 // pred_fallthru
    _
  // Predicated region
  $region50: #{net_forward.1} parent=0 // pred_check
    _
  $region51: #{net_forward.1} parent=0 // pred_check_branch
    %53 = sbr.rel (0) target = $region53
  $region52: #{net_forward.1} parent=0 // pred_region
    _
  $region53: #{net_forward.1} parent=0 // pred_fallthru
    _
  // Predicated region
  $region54: #{net_forward.1} parent=0 // pred_check
    _
  $region55: #{net_forward.1} parent=0 // pred_check_branch
    %55 = sbr.rel (0) target = $region57
  $region56: #{net_forward.1} parent=0 // pred_region
    _
  $region57: #{net_forward.1} parent=0 // pred_fallthru
    _
  // Predicated region
  $region58: #{net_forward.1} parent=0 // pred_check
    _
  $region59: #{net_forward.1} parent=0 // pred_check_branch
    %57 = sbr.rel (0) target = $region61
  $region60: #{net_forward.1} parent=0 // pred_region
    _
  $region61: #{net_forward.1} parent=0 // pred_fallthru
    _
  // Predicated region
  $region62: #{net_forward.1} parent=0 // pred_check
    _
  $region63: #{net_forward.1} parent=0 // pred_check_branch
    %59 = sbr.rel (0) target = $region65
  $region64: #{net_forward.1} parent=0 // pred_region
    _
  $region65: #{net_forward.1} parent=0 // pred_fallthru
    _
  %vm60 = vcmask 261120
  %61 = vst.msk [vmem:[#allocation2] sm:$0xff] %vm60, 0.0
  %62 = vst.msk [vmem:[#allocation2 + $0x8] sm:$0xff] %vm60, 0.0
  %63 = vst.msk [vmem:[#allocation2 + $0x10] sm:$0xff] %vm60, 0.0
  %64 = vst.msk [vmem:[#allocation2 + $0x18] sm:$0xff] %vm60, 0.0
  %s65 = sld [smem:[#allocation4]]
  %s66 = scalar_lea.vmem %s1, %s65
  %v67 = vld [vmem:[%s66] sm:$0x1]
  %vm68 = vcmask 253952
  %69 = vst.msk [vmem:[#allocation2] sm:$0x1] %vm68, %v67
  %s70 = sld [smem:[#allocation4 + $0x1]]
  %s71 = scalar_lea.vmem %s1, %s70
  %v72 = vld [vmem:[%s71] sm:$0x1]
  %73 = vst.msk [vmem:[#allocation2 + $0x1] sm:$0x1] %vm68, %v72
  %s74 = sld [smem:[#allocation4 + $0x2]]
  %s75 = scalar_lea.vmem %s1, %s74
  %v76 = vld [vmem:[%s75] sm:$0x1]
  %77 = vst.msk [vmem:[#allocation2 + $0x2] sm:$0x1] %vm68, %v76
  %s78 = sld [smem:[#allocation4 + $0x3]]
  %s79 = scalar_lea.vmem %s1, %s78
  %v80 = vld [vmem:[%s79] sm:$0x1]
  %81 = vst.msk [vmem:[#allocation2 + $0x3] sm:$0x1] %vm68, %v80
  %s82 = sld [smem:[#allocation4 + $0x4]]
  %s83 = scalar_lea.vmem %s1, %s82
  %v84 = vld [vmem:[%s83] sm:$0x1]
  %85 = vst.msk [vmem:[#allocation2 + $0x4] sm:$0x1] %vm68, %v84
  %s86 = sld [smem:[#allocation4 + $0x5]]
  %s87 = scalar_lea.vmem %s1, %s86
  %v88 = vld [vmem:[%s87] sm:$0x1]
  %89 = vst.msk [vmem:[#allocation2 + $0x5] sm:$0x1] %vm68, %v88
  %s90 = sld [smem:[#allocation4 + $0x6]]
  %s91 = scalar_lea.vmem %s1, %s90
  %v92 = vld [vmem:[%s91] sm:$0x1]
  %93 = vst.msk [vmem:[#allocation2 + $0x6] sm:$0x1] %vm68, %v92
  %s94 = sld [smem:[#allocation4 + $0x7]]
  %s95 = scalar_lea.vmem %s1, %s94
  %v96 = vld [vmem:[%s95] sm:$0x1]
  %97 = vst.msk [vmem:[#allocation2 + $0x7] sm:$0x1] %vm68, %v96
  %s98 = sld [smem:[#allocation4 + $0x8]]
  %s99 = scalar_lea.vmem %s1, %s98
  %v100 = vld [vmem:[%s99] sm:$0x1]
  %101 = vst.msk [vmem:[#allocation2 + $0x8] sm:$0x1] %vm68, %v100
  %s102 = sld [smem:[#allocation4 + $0x9]]
  %s103 = scalar_lea.vmem %s1, %s102
  %v104 = vld [vmem:[%s103] sm:$0x1]
  %105 = vst.msk [vmem:[#allocation2 + $0x9] sm:$0x1] %vm68, %v104
  %s106 = sld [smem:[#allocation4 + $0xa]]
  %s107 = scalar_lea.vmem %s1, %s106
  %v108 = vld [vmem:[%s107] sm:$0x1]
  %109 = vst.msk [vmem:[#allocation2 + $0xa] sm:$0x1] %vm68, %v108
  %s110 = sld [smem:[#allocation4 + $0xb]]
  %s111 = scalar_lea.vmem %s1, %s110
  %v112 = vld [vmem:[%s111] sm:$0x1]
  %113 = vst.msk [vmem:[#allocation2 + $0xb] sm:$0x1] %vm68, %v112
  %s114 = sld [smem:[#allocation4 + $0xc]]
  %s115 = scalar_lea.vmem %s1, %s114
  %v116 = vld [vmem:[%s115] sm:$0x1]
  %117 = vst.msk [vmem:[#allocation2 + $0xc] sm:$0x1] %vm68, %v116
  %s118 = sld [smem:[#allocation4 + $0xd]]
  %s119 = scalar_lea.vmem %s1, %s118
  %v120 = vld [vmem:[%s119] sm:$0x1]
  %121 = vst.msk [vmem:[#allocation2 + $0xd] sm:$0x1] %vm68, %v120
  %s122 = sld [smem:[#allocation4 + $0xe]]
  %s123 = scalar_lea.vmem %s1, %s122
  %v124 = vld [vmem:[%s123] sm:$0x1]
  %125 = vst.msk [vmem:[#allocation2 + $0xe] sm:$0x1] %vm68, %v124
  %s126 = sld [smem:[#allocation4 + $0xf]]
  %s127 = scalar_lea.vmem %s1, %s126
  %v128 = vld [vmem:[%s127] sm:$0x1]
  %129 = vst.msk [vmem:[#allocation2 + $0xf] sm:$0x1] %vm68, %v128
  %s130 = sld [smem:[#allocation4 + $0x10]]
  %s131 = scalar_lea.vmem %s1, %s130
  %v132 = vld [vmem:[%s131] sm:$0x1]
  %133 = vst.msk [vmem:[#allocation2 + $0x10] sm:$0x1] %vm68, %v132
  %s134 = sld [smem:[#allocation4 + $0x11]]
  %s135 = scalar_lea.vmem %s1, %s134
  %v136 = vld [vmem:[%s135] sm:$0x1]
  %137 = vst.msk [vmem:[#allocation2 + $0x11] sm:$0x1] %vm68, %v136
  %s138 = sld [smem:[#allocation4 + $0x12]]
  %s139 = scalar_lea.vmem %s1, %s138
  %v140 = vld [vmem:[%s139] sm:$0x1]
  %141 = vst.msk [vmem:[#allocation2 + $0x12] sm:$0x1] %vm68, %v140
  %s142 = sld [smem:[#allocation4 + $0x13]]
  %s143 = scalar_lea.vmem %s1, %s142
  %v144 = vld [vmem:[%s143] sm:$0x1]
  %145 = vst.msk [vmem:[#allocation2 + $0x13] sm:$0x1] %vm68, %v144
  %s146 = sld [smem:[#allocation4 + $0x14]]
  %s147 = scalar_lea.vmem %s1, %s146
  %v148 = vld [vmem:[%s147] sm:$0x1]
  %149 = vst.msk [vmem:[#allocation2 + $0x14] sm:$0x1] %vm68, %v148
  %s150 = sld [smem:[#allocation4 + $0x15]]
  %s151 = scalar_lea.vmem %s1, %s150
  %v152 = vld [vmem:[%s151] sm:$0x1]
  %153 = vst.msk [vmem:[#allocation2 + $0x15] sm:$0x1] %vm68, %v152
  %s154 = sld [smem:[#allocation4 + $0x16]]
  %s155 = scalar_lea.vmem %s1, %s154
  %v156 = vld [vmem:[%s155] sm:$0x1]
  %157 = vst.msk [vmem:[#allocation2 + $0x16] sm:$0x1] %vm68, %v156
  %s158 = sld [smem:[#allocation4 + $0x17]]
  %s159 = scalar_lea.vmem %s1, %s158
  %v160 = vld [vmem:[%s159] sm:$0x1]
  %161 = vst.msk [vmem:[#allocation2 + $0x17] sm:$0x1] %vm68, %v160
  %s162 = sld [smem:[#allocation4 + $0x18]]
  %s163 = scalar_lea.vmem %s1, %s162
  %v164 = vld [vmem:[%s163] sm:$0x1]
  %165 = vst.msk [vmem:[#allocation2 + $0x18] sm:$0x1] %vm68, %v164
  %s166 = sld [smem:[#allocation4 + $0x19]]
  %s167 = scalar_lea.vmem %s1, %s166
  %v168 = vld [vmem:[%s167] sm:$0x1]
  %169 = vst.msk [vmem:[#allocation2 + $0x19] sm:$0x1] %vm68, %v168
  %s170 = sld [smem:[#allocation4 + $0x1a]]
  %s171 = scalar_lea.vmem %s1, %s170
  %v172 = vld [vmem:[%s171] sm:$0x1]
  %173 = vst.msk [vmem:[#allocation2 + $0x1a] sm:$0x1] %vm68, %v172
  %s174 = sld [smem:[#allocation4 + $0x1b]]
  %s175 = scalar_lea.vmem %s1, %s174
  %v176 = vld [vmem:[%s175] sm:$0x1]
  %177 = vst.msk [vmem:[#allocation2 + $0x1b] sm:$0x1] %vm68, %v176
  %s178 = sld [smem:[#allocation4 + $0x1c]]
  %s179 = scalar_lea.vmem %s1, %s178
  %v180 = vld [vmem:[%s179] sm:$0x1]
  %181 = vst.msk [vmem:[#allocation2 + $0x1c] sm:$0x1] %vm68, %v180
  %s182 = sld [smem:[#allocation4 + $0x1d]]
  %s183 = scalar_lea.vmem %s1, %s182
  %v184 = vld [vmem:[%s183] sm:$0x1]
  %185 = vst.msk [vmem:[#allocation2 + $0x1d] sm:$0x1] %vm68, %v184
  %v186 = vld [vmem:[#allocation2] sm:$0xff]
  %v187 = vld [vmem:[#allocation2 + $0x8] sm:$0xff]
  %v188 = vld [vmem:[#allocation2 + $0x10] sm:$0xff]
  %v189 = vld [vmem:[#allocation2 + $0x18] sm:$0xff]
  %v190 = vld [vmem:[%s2] sm:$0xff]
  %v191 = vld [vmem:[%s2 + $0x8] sm:$0xff]
  %v192 = vld [vmem:[%s2 + $0x10] sm:$0xff]
  %v193 = vld [vmem:[%s2 + $0x18] sm:$0xff]
  %v194 = vld [vmem:[%s3] sm:$0x1]
  %v195 = vld [vmem:[%s4] sm:$0x1]
  %v196 = vsel %vm60, %v186, 0.0
  %197 = vadd.xlane.f32.xlu0 %v196
  %v198 = vpop.xlane.xlu0 %197
  %v199 = vsel %vm60, %v187, 0.0
  %200 = vadd.xlane.f32.xlu0 %v199
  %v201 = vpop.xlane.xlu0 %200
  %v202 = vsel %vm60, %v188, 0.0
  %203 = vadd.xlane.f32.xlu0 %v202
  %v204 = vpop.xlane.xlu0 %203
  %v205 = vsel %vm60, %v189, 0.0
  %206 = vadd.xlane.f32.xlu0 %v205
  %v207 = vpop.xlane.xlu0 %206
  %v208 = vrcp.pop 32.0
  %v209 = vmul.f32 %v198, %v208
  %v210 = vmul.f32 %v201, %v208
  %v211 = vmul.f32 %v204, %v208
  %v212 = vmul.f32 %v207, %v208
  %v213 = vsub.f32 %v186, %v209
  %v214 = vsub.f32 %v187, %v210
  %v215 = vsub.f32 %v188, %v211
  %v216 = vsub.f32 %v189, %v212
  %v217 = vmul.f32 %v213, %v213
  %v218 = vmul.f32 %v214, %v214
  %v219 = vmul.f32 %v215, %v215
  %v220 = vmul.f32 %v216, %v216
  %v221 = vsel %vm60, %v217, 0.0
  %222 = vadd.xlane.f32.xlu0 %v221
  %v223 = vpop.xlane.xlu0 %222
  %v224 = vsel %vm60, %v218, 0.0
  %225 = vadd.xlane.f32.xlu0 %v224
  %v226 = vpop.xlane.xlu0 %225
  %v227 = vsel %vm60, %v219, 0.0
  %228 = vadd.xlane.f32.xlu0 %v227
  %v229 = vpop.xlane.xlu0 %228
  %v230 = vsel %vm60, %v220, 0.0
  %231 = vadd.xlane.f32.xlu0 %v230
  %v232 = vpop.xlane.xlu0 %231
  %v233 = vmul.f32 %v223, %v208
  %v234 = vmul.f32 %v226, %v208
  %v235 = vmul.f32 %v229, %v208
  %v236 = vmul.f32 %v232, %v208
  %v237 = vadd.f32 %v233, 1e-05
  %v238 = vadd.f32 %v234, 1e-05
  %v239 = vadd.f32 %v235, 1e-05
  %v240 = vadd.f32 %v236, 1e-05
  %v241 = vrsqrt.pop %v237
  %v242 = vrsqrt.pop %v238
  %v243 = vrsqrt.pop %v239
  %v244 = vrsqrt.pop %v240
  %v245 = vmul.f32 %v213, %v241
  %v246 = vmul.f32 %v214, %v242
  %v247 = vmul.f32 %v215, %v243
  %v248 = vmul.f32 %v216, %v244
  %v250 = vlaneseq
  %v251 = vshrl.u32 %v250, 7
  %v252 = vsub.s32 0, %v251
  %v253 = vrot.slane %v194, %v252
  %v255 = vmul.f32 %v245, %v253
  %v256 = vmul.f32 %v246, %v253
  %v257 = vmul.f32 %v247, %v253
  %v258 = vmul.f32 %v248, %v253
  %v260 = vlaneseq
  %v261 = vshrl.u32 %v260, 7
  %v262 = vsub.s32 0, %v261
  %v263 = vrot.slane %v195, %v262
  %v265 = vadd.f32 %v255, %v263
  %v266 = vadd.f32 %v256, %v263
  %v267 = vadd.f32 %v257, %v263
  %v268 = vadd.f32 %v258, %v263
  %v269 = vld [vmem:[%s5] sm:$0xff]
  %v270 = vld [vmem:[%s5 + $0x8] sm:$0xff]
  %v271 = vld [vmem:[%s5 + $0x10] sm:$0xff]
  %v272 = vld [vmem:[%s5 + $0x18] sm:$0xff]
  %v273 = vld [vmem:[%s6] sm:$0x1]
  %v275 = vlaneseq
  %v276 = vshrl.u32 %v275, 7
  %v277 = vsub.s32 0, %v276
  %v278 = vrot.slane %v273, %v277
  %v281 = vsel %vm60, %v265, 0
  %v284 = vsel %vm60, %v266, 0
  %v287 = vsel %vm60, %v267, 0
  %v290 = vsel %vm60, %v268, 0
  %292 = vmatprep.subr.mxu0 0.0
  %293 = vmatpush1.msra.mxu0 0.0
  %294 = vmatprep.subr.mxu0 0.0
  %295 = vmatpush1.msra.mxu0 0.0
  %296 = vmatprep.subr.mxu0 0.0
  %297 = vmatpush1.msra.mxu0 0.0
  %298 = vmatprep.subr.mxu0 0.0
  %299 = vmatpush1.msra.mxu0 0.0
  %300 = vmatprep.subr.mxu0 0.0
  %301 = vmatpush1.msra.mxu0 0.0
  %302 = vmatprep.subr.mxu0 0.0
  %303 = vmatpush1.msra.mxu0 0.0
  %304 = vmatprep.subr.mxu0 0.0
  %305 = vmatpush1.msra.mxu0 0.0
  %306 = vmatprep.subr.mxu0 0.0
  %307 = vmatpush1.msra.mxu0 0.0
  %308 = vmatprep.subr.mxu0 0.0
  %309 = vmatpush1.msra.mxu0 0.0
  %310 = vmatprep.subr.mxu0 0.0
  %311 = vmatpush1.msra.mxu0 0.0
  %312 = vmatprep.subr.mxu0 0.0
  %313 = vmatpush1.msra.mxu0 0.0
  %314 = vmatprep.subr.mxu0 0.0
  %315 = vmatpush1.msra.mxu0 0.0
  %316 = vmatprep.subr.mxu0 0.0
  %317 = vmatpush1.msra.mxu0 %v272
  %318 = vmatprep.subr.mxu0 0.0
  %319 = vmatpush1.msra.mxu0 %v271
  %320 = vmatprep.subr.mxu0 0.0
  %321 = vmatpush1.msra.mxu0 %v270
  %322 = vmatprep.subr.mxu0 0.0
  %323 = vmatpush1.msra.mxu0 %v269
  %324 = vmatprep.subr.mxu0 0.0
  %325 = vmatpush2.msra.mxu0 0.0
  %326 = vmatprep.subr.mxu0 0.0
  %327 = vmatpush2.msra.mxu0 0.0
  %328 = vmatprep.subr.mxu0 0.0
  %329 = vmatpush2.msra.mxu0 0.0
  %330 = vmatprep.subr.mxu0 0.0
  %331 = vmatpush2.msra.mxu0 0.0
  %332 = vmatprep.subr.mxu0 0.0
  %333 = vmatpush2.msra.mxu0 0.0
  %334 = vmatprep.subr.mxu0 0.0
  %335 = vmatpush2.msra.mxu0 0.0
  %336 = vmatprep.subr.mxu0 0.0
  %337 = vmatpush2.msra.mxu0 0.0
  %338 = vmatprep.subr.mxu0 0.0
  %339 = vmatpush2.msra.mxu0 0.0
  %340 = vmatprep.subr.mxu0 0.0
  %341 = vmatpush2.msra.mxu0 0.0
  %342 = vmatprep.subr.mxu0 0.0
  %343 = vmatpush2.msra.mxu0 0.0
  %344 = vmatprep.subr.mxu0 0.0
  %345 = vmatpush2.msra.mxu0 0.0
  %346 = vmatprep.subr.mxu0 0.0
  %347 = vmatpush2.msra.mxu0 0.0
  %348 = vmatprep.subr.mxu0 0.0
  %349 = vmatpush2.msra.mxu0 0.0
  %350 = vmatprep.subr.mxu0 0.0
  %351 = vmatpush2.msra.mxu0 0.0
  %352 = vmatprep.subr.mxu0 0.0
  %353 = vmatpush2.msra.mxu0 0.0
  %354 = vmatprep.subr.mxu0 0.0
  %355 = vmatpush2.msra.mxu0 0.0
  %356 = vmatprep.mubr.f32.mxu0 0.0
  %357 = vmatmul.mubr.f32.gmra.mxu0 %v281
  %v358 = vpop.f32.mrf.mxu0
  %v359 = vadd.f32 %v278, %v358
  %v360 = vpop.f32.mrf.mxu0
  %361 = vmatprep.mubr.f32.mxu0 0.0
  %362 = vmatmul.mubr.f32.gmra.mxu0 %v284
  %v363 = vpop.f32.mrf.mxu0
  %v364 = vadd.f32 %v278, %v363
  %v365 = vpop.f32.mrf.mxu0
  %366 = vmatprep.mubr.f32.mxu0 0.0
  %367 = vmatmul.mubr.f32.gmra.mxu0 %v287
  %v368 = vpop.f32.mrf.mxu0
  %v369 = vadd.f32 %v278, %v368
  %v370 = vpop.f32.mrf.mxu0
  %371 = vmatprep.mubr.f32.mxu0 0.0
  %372 = vmatmul.mubr.f32.gmra.mxu0 %v290
  %v373 = vpop.f32.mrf.mxu0
  %v374 = vadd.f32 %v278, %v373
  %v375 = vpop.f32.mrf.mxu0
  %376 = vdwg.mxu0
  %381 = vrot.lane.b32.xlu0 %v359, 96
  %v382 = vpop.permute.xlu0 %381
  %383 = vrot.lane.b32.xlu0 %v364, 96
  %v384 = vpop.permute.xlu0 %383
  %385 = vrot.lane.b32.xlu0 %v369, 96
  %v386 = vpop.permute.xlu0 %385
  %387 = vrot.lane.b32.xlu0 %v374, 96
  %v388 = vpop.permute.xlu0 %387
  %vm389 = vcmask 64512
  %v390 = vsel %vm389, %v359, 0
  %v392 = vsel %vm389, %v364, 0
  %v394 = vsel %vm389, %v369, 0
  %v396 = vsel %vm389, %v374, 0
  %v398 = vsel %vm389, %v382, 0
  %v400 = vsel %vm389, %v384, 0
  %v402 = vsel %vm389, %v386, 0
  %v404 = vsel %vm389, %v388, 0
  %406 = vmatprep.subr.mxu0 0.0
  %407 = vmatpush1.xpose.msra.mxu0 0.0
  %408 = vmatprep.subr.mxu0 0.0
  %409 = vmatpush1.xpose.msra.mxu0 0.0
  %410 = vmatprep.subr.mxu0 0.0
  %411 = vmatpush1.xpose.msra.mxu0 0.0
  %412 = vmatprep.subr.mxu0 0.0
  %413 = vmatpush1.xpose.msra.mxu0 0.0
  %414 = vmatprep.subr.mxu0 0.0
  %415 = vmatpush1.xpose.msra.mxu0 0.0
  %416 = vmatprep.subr.mxu0 0.0
  %417 = vmatpush1.xpose.msra.mxu0 0.0
  %418 = vmatprep.subr.mxu0 0.0
  %419 = vmatpush1.xpose.msra.mxu0 0.0
  %420 = vmatprep.subr.mxu0 0.0
  %421 = vmatpush1.xpose.msra.mxu0 0.0
  %422 = vmatprep.subr.mxu0 0.0
  %423 = vmatpush1.xpose.msra.mxu0 0.0
  %424 = vmatprep.subr.mxu0 0.0
  %425 = vmatpush1.xpose.msra.mxu0 0.0
  %426 = vmatprep.subr.mxu0 0.0
  %427 = vmatpush1.xpose.msra.mxu0 0.0
  %428 = vmatprep.subr.mxu0 0.0
  %429 = vmatpush1.xpose.msra.mxu0 0.0
  %430 = vmatprep.subr.mxu0 0.0
  %431 = vmatpush1.xpose.msra.mxu0 %v404
  %432 = vmatprep.subr.mxu0 0.0
  %433 = vmatpush1.xpose.msra.mxu0 %v402
  %434 = vmatprep.subr.mxu0 0.0
  %435 = vmatpush1.xpose.msra.mxu0 %v400
  %436 = vmatprep.subr.mxu0 0.0
  %437 = vmatpush1.xpose.msra.mxu0 %v398
  %438 = vmatprep.subr.mxu0 0.0
  %439 = vmatpush2.xpose.msra.mxu0 0.0
  %440 = vmatprep.subr.mxu0 0.0
  %441 = vmatpush2.xpose.msra.mxu0 0.0
  %442 = vmatprep.subr.mxu0 0.0
  %443 = vmatpush2.xpose.msra.mxu0 0.0
  %444 = vmatprep.subr.mxu0 0.0
  %445 = vmatpush2.xpose.msra.mxu0 0.0
  %446 = vmatprep.subr.mxu0 0.0
  %447 = vmatpush2.xpose.msra.mxu0 0.0
  %448 = vmatprep.subr.mxu0 0.0
  %449 = vmatpush2.xpose.msra.mxu0 0.0
  %450 = vmatprep.subr.mxu0 0.0
  %451 = vmatpush2.xpose.msra.mxu0 0.0
  %452 = vmatprep.subr.mxu0 0.0
  %453 = vmatpush2.xpose.msra.mxu0 0.0
  %454 = vmatprep.subr.mxu0 0.0
  %455 = vmatpush2.xpose.msra.mxu0 0.0
  %456 = vmatprep.subr.mxu0 0.0
  %457 = vmatpush2.xpose.msra.mxu0 0.0
  %458 = vmatprep.subr.mxu0 0.0
  %459 = vmatpush2.xpose.msra.mxu0 0.0
  %460 = vmatprep.subr.mxu0 0.0
  %461 = vmatpush2.xpose.msra.mxu0 0.0
  %462 = vmatprep.subr.mxu0 0.0
  %463 = vmatpush2.xpose.msra.mxu0 0.0
  %464 = vmatprep.subr.mxu0 0.0
  %465 = vmatpush2.xpose.msra.mxu0 0.0
  %466 = vmatprep.subr.mxu0 0.0
  %467 = vmatpush2.xpose.msra.mxu0 0.0
  %468 = vmatprep.subr.mxu0 0.0
  %469 = vmatpush2.xpose.msra.mxu0 0.0
  %470 = vmatprep.mubr.f32.mxu0 0.0
  %471 = vmatmul.mubr.f32.gmra.mxu0 %v390
  %v472 = vpop.f32.mrf.mxu0
  %v473 = vadd.f32 %v190, %v472
  %v474 = vpop.f32.mrf.mxu0
  %475 = vmatprep.mubr.f32.mxu0 0.0
  %476 = vmatmul.mubr.f32.gmra.mxu0 %v392
  %v477 = vpop.f32.mrf.mxu0
  %v478 = vadd.f32 %v191, %v477
  %v479 = vpop.f32.mrf.mxu0
  %480 = vmatprep.mubr.f32.mxu0 0.0
  %481 = vmatmul.mubr.f32.gmra.mxu0 %v394
  %v482 = vpop.f32.mrf.mxu0
  %v483 = vadd.f32 %v192, %v482
  %v484 = vpop.f32.mrf.mxu0
  %485 = vmatprep.mubr.f32.mxu0 0.0
  %486 = vmatmul.mubr.f32.gmra.mxu0 %v396
  %v487 = vpop.f32.mrf.mxu0
  %v488 = vadd.f32 %v193, %v487
  %v489 = vpop.f32.mrf.mxu0
  %490 = vdwg.mxu0
  %v491 = vsel %vm60, %v473, -inf
  %492 = vmax.xlane.f32.xlu0 %v491
  %v493 = vpop.xlane.xlu0 %492
  %v494 = vsel %vm60, %v478, -inf
  %495 = vmax.xlane.f32.xlu0 %v494
  %v496 = vpop.xlane.xlu0 %495
  %v497 = vsel %vm60, %v483, -inf
  %498 = vmax.xlane.f32.xlu0 %v497
  %v499 = vpop.xlane.xlu0 %498
  %v500 = vsel %vm60, %v488, -inf
  %501 = vmax.xlane.f32.xlu0 %v500
  %v502 = vpop.xlane.xlu0 %501
  %v503 = vsub.f32 %v473, %v493
  %v504 = vsub.f32 %v478, %v496
  %v505 = vsub.f32 %v483, %v499
  %v506 = vsub.f32 %v488, %v502
  %v507 = vmul.f32 %v503, 1.442695
  %v508 = vpow.pop %v507
  %v509 = vmul.f32 %v504, 1.442695
  %v510 = vpow.pop %v509
  %v511 = vmul.f32 %v505, 1.442695
  %v512 = vpow.pop %v511
  %v513 = vmul.f32 %v506, 1.442695
  %v514 = vpow.pop %v513
  %v515 = vsel %vm60, %v508, 0.0
  %516 = vadd.xlane.f32.xlu0 %v515
  %v517 = vpop.xlane.xlu0 %516
  %v518 = vsel %vm60, %v510, 0.0
  %519 = vadd.xlane.f32.xlu0 %v518
  %v520 = vpop.xlane.xlu0 %519
  %v521 = vsel %vm60, %v512, 0.0
  %522 = vadd.xlane.f32.xlu0 %v521
  %v523 = vpop.xlane.xlu0 %522
  %v524 = vsel %vm60, %v514, 0.0
  %525 = vadd.xlane.f32.xlu0 %v524
  %v526 = vpop.xlane.xlu0 %525
  %v527 = vrcp.pop %v517
  %v528 = vrcp.pop %v520
  %v529 = vrcp.pop %v523
  %v530 = vrcp.pop %v526
  %v531 = vmul.f32 %v508, %v527
  %v532 = vmul.f32 %v510, %v528
  %v533 = vmul.f32 %v512, %v529
  %v534 = vmul.f32 %v514, %v530
  %535 = vrot.lane.b32.xlu0 %v359, 80
  %v536 = vpop.permute.xlu0 %535
  %537 = vrot.lane.b32.xlu0 %v364, 80
  %v538 = vpop.permute.xlu0 %537
  %539 = vrot.lane.b32.xlu0 %v369, 80
  %v540 = vpop.permute.xlu0 %539
  %541 = vrot.lane.b32.xlu0 %v374, 80
  %v542 = vpop.permute.xlu0 %541
  %v548 = vsel %vm60, %v531, 0
  %v551 = vsel %vm60, %v532, 0
  %v554 = vsel %vm60, %v533, 0
  %v557 = vsel %vm60, %v534, 0
  %559 = vmatprep.subr.mxu0 0.0
  %560 = vmatpush1.msra.mxu0 0.0
  %561 = vmatprep.subr.mxu0 0.0
  %562 = vmatpush1.msra.mxu0 0.0
  %563 = vmatprep.subr.mxu0 0.0
  %564 = vmatpush1.msra.mxu0 0.0
  %565 = vmatprep.subr.mxu0 0.0
  %566 = vmatpush1.msra.mxu0 0.0
  %567 = vmatprep.subr.mxu0 0.0
  %568 = vmatpush1.msra.mxu0 0.0
  %569 = vmatprep.subr.mxu0 0.0
  %570 = vmatpush1.msra.mxu0 0.0
  %571 = vmatprep.subr.mxu0 0.0
  %572 = vmatpush1.msra.mxu0 0.0
  %573 = vmatprep.subr.mxu0 0.0
  %574 = vmatpush1.msra.mxu0 0.0
  %575 = vmatprep.subr.mxu0 0.0
  %576 = vmatpush1.msra.mxu0 0.0
  %577 = vmatprep.subr.mxu0 0.0
  %578 = vmatpush1.msra.mxu0 0.0
  %579 = vmatprep.subr.mxu0 0.0
  %580 = vmatpush1.msra.mxu0 0.0
  %581 = vmatprep.subr.mxu0 0.0
  %582 = vmatpush1.msra.mxu0 0.0
  %583 = vmatprep.subr.mxu0 0.0
  %584 = vmatpush1.msra.mxu0 %v542
  %585 = vmatprep.subr.mxu0 0.0
  %586 = vmatpush1.msra.mxu0 %v540
  %587 = vmatprep.subr.mxu0 0.0
  %588 = vmatpush1.msra.mxu0 %v538
  %589 = vmatprep.subr.mxu0 0.0
  %590 = vmatpush1.msra.mxu0 %v536
  %591 = vmatprep.subr.mxu0 0.0
  %592 = vmatpush2.msra.mxu0 0.0
  %593 = vmatprep.subr.mxu0 0.0
  %594 = vmatpush2.msra.mxu0 0.0
  %595 = vmatprep.subr.mxu0 0.0
  %596 = vmatpush2.msra.mxu0 0.0
  %597 = vmatprep.subr.mxu0 0.0
  %598 = vmatpush2.msra.mxu0 0.0
  %599 = vmatprep.subr.mxu0 0.0
  %600 = vmatpush2.msra.mxu0 0.0
  %601 = vmatprep.subr.mxu0 0.0
  %602 = vmatpush2.msra.mxu0 0.0
  %603 = vmatprep.subr.mxu0 0.0
  %604 = vmatpush2.msra.mxu0 0.0
  %605 = vmatprep.subr.mxu0 0.0
  %606 = vmatpush2.msra.mxu0 0.0
  %607 = vmatprep.subr.mxu0 0.0
  %608 = vmatpush2.msra.mxu0 0.0
  %609 = vmatprep.subr.mxu0 0.0
  %610 = vmatpush2.msra.mxu0 0.0
  %611 = vmatprep.subr.mxu0 0.0
  %612 = vmatpush2.msra.mxu0 0.0
  %613 = vmatprep.subr.mxu0 0.0
  %614 = vmatpush2.msra.mxu0 0.0
  %615 = vmatprep.subr.mxu0 0.0
  %616 = vmatpush2.msra.mxu0 0.0
  %617 = vmatprep.subr.mxu0 0.0
  %618 = vmatpush2.msra.mxu0 0.0
  %619 = vmatprep.subr.mxu0 0.0
  %620 = vmatpush2.msra.mxu0 0.0
  %621 = vmatprep.subr.mxu0 0.0
  %622 = vmatpush2.msra.mxu0 0.0
  %623 = vmatprep.mubr.f32.mxu0 0.0
  %624 = vmatmul.mubr.f32.gmra.mxu0 %v548
  %v625 = vpop.f32.mrf.mxu0
  %v626 = vadd.f32 0.0, %v625
  %v627 = vpop.f32.mrf.mxu0
  %628 = vmatprep.mubr.f32.mxu0 0.0
  %629 = vmatmul.mubr.f32.gmra.mxu0 %v551
  %v630 = vpop.f32.mrf.mxu0
  %v631 = vadd.f32 0.0, %v630
  %v632 = vpop.f32.mrf.mxu0
  %633 = vmatprep.mubr.f32.mxu0 0.0
  %634 = vmatmul.mubr.f32.gmra.mxu0 %v554
  %v635 = vpop.f32.mrf.mxu0
  %v636 = vadd.f32 0.0, %v635
  %v637 = vpop.f32.mrf.mxu0
  %638 = vmatprep.mubr.f32.mxu0 0.0
  %639 = vmatmul.mubr.f32.gmra.mxu0 %v557
  %v640 = vpop.f32.mrf.mxu0
  %v641 = vadd.f32 0.0, %v640
  %v642 = vpop.f32.mrf.mxu0
  %643 = vdwg.mxu0
  %644 = vrot.lane.b32.xlu0 %v359, 120
  %v645 = vpop.permute.xlu0 %644
  %646 = vrot.lane.b32.xlu0 %v364, 120
  %v647 = vpop.permute.xlu0 %646
  %648 = vrot.lane.b32.xlu0 %v369, 120
  %v649 = vpop.permute.xlu0 %648
  %650 = vrot.lane.b32.xlu0 %v374, 120
  %v651 = vpop.permute.xlu0 %650
  %v652 = vsel %vm389, %v645, 0
  %v654 = vsel %vm389, %v647, 0
  %v656 = vsel %vm389, %v649, 0
  %v658 = vsel %vm389, %v651, 0
  %660 = vmatprep.subr.mxu0 0.0
  %661 = vmatpush1.xpose.msra.mxu0 0.0
  %662 = vmatprep.subr.mxu0 0.0
  %663 = vmatpush1.xpose.msra.mxu0 0.0
  %664 = vmatprep.subr.mxu0 0.0
  %665 = vmatpush1.xpose.msra.mxu0 0.0
  %666 = vmatprep.subr.mxu0 0.0
  %667 = vmatpush1.xpose.msra.mxu0 0.0
  %668 = vmatprep.subr.mxu0 0.0
  %669 = vmatpush1.xpose.msra.mxu0 0.0
  %670 = vmatprep.subr.mxu0 0.0
  %671 = vmatpush1.xpose.msra.mxu0 0.0
  %672 = vmatprep.subr.mxu0 0.0
  %673 = vmatpush1.xpose.msra.mxu0 0.0
  %674 = vmatprep.subr.mxu0 0.0
  %675 = vmatpush1.xpose.msra.mxu0 0.0
  %676 = vmatprep.subr.mxu0 0.0
  %677 = vmatpush1.xpose.msra.mxu0 0.0
  %678 = vmatprep.subr.mxu0 0.0
  %679 = vmatpush1.xpose.msra.mxu0 0.0
  %680 = vmatprep.subr.mxu0 0.0
  %681 = vmatpush1.xpose.msra.mxu0 0.0
  %682 = vmatprep.subr.mxu0 0.0
  %683 = vmatpush1.xpose.msra.mxu0 0.0
  %684 = vmatprep.subr.mxu0 0.0
  %685 = vmatpush1.xpose.msra.mxu0 %v404
  %686 = vmatprep.subr.mxu0 0.0
  %687 = vmatpush1.xpose.msra.mxu0 %v402
  %688 = vmatprep.subr.mxu0 0.0
  %689 = vmatpush1.xpose.msra.mxu0 %v400
  %690 = vmatprep.subr.mxu0 0.0
  %691 = vmatpush1.xpose.msra.mxu0 %v398
  %692 = vmatprep.subr.mxu0 0.0
  %693 = vmatpush2.xpose.msra.mxu0 0.0
  %694 = vmatprep.subr.mxu0 0.0
  %695 = vmatpush2.xpose.msra.mxu0 0.0
  %696 = vmatprep.subr.mxu0 0.0
  %697 = vmatpush2.xpose.msra.mxu0 0.0
  %698 = vmatprep.subr.mxu0 0.0
  %699 = vmatpush2.xpose.msra.mxu0 0.0
  %700 = vmatprep.subr.mxu0 0.0
  %701 = vmatpush2.xpose.msra.mxu0 0.0
  %702 = vmatprep.subr.mxu0 0.0
  %703 = vmatpush2.xpose.msra.mxu0 0.0
  %704 = vmatprep.subr.mxu0 0.0
  %705 = vmatpush2.xpose.msra.mxu0 0.0
  %706 = vmatprep.subr.mxu0 0.0
  %707 = vmatpush2.xpose.msra.mxu0 0.0
  %708 = vmatprep.subr.mxu0 0.0
  %709 = vmatpush2.xpose.msra.mxu0 0.0
  %710 = vmatprep.subr.mxu0 0.0
  %711 = vmatpush2.xpose.msra.mxu0 0.0
  %712 = vmatprep.subr.mxu0 0.0
  %713 = vmatpush2.xpose.msra.mxu0 0.0
  %714 = vmatprep.subr.mxu0 0.0
  %715 = vmatpush2.xpose.msra.mxu0 0.0
  %716 = vmatprep.subr.mxu0 0.0
  %717 = vmatpush2.xpose.msra.mxu0 0.0
  %718 = vmatprep.subr.mxu0 0.0
  %719 = vmatpush2.xpose.msra.mxu0 0.0
  %720 = vmatprep.subr.mxu0 0.0
  %721 = vmatpush2.xpose.msra.mxu0 0.0
  %722 = vmatprep.subr.mxu0 0.0
  %723 = vmatpush2.xpose.msra.mxu0 0.0
  %724 = vmatprep.mubr.f32.mxu0 0.0
  %725 = vmatmul.mubr.f32.gmra.mxu0 %v652
  %v726 = vpop.f32.mrf.mxu0
  %v727 = vadd.f32 %v190, %v726
  %v728 = vpop.f32.mrf.mxu0
  %729 = vmatprep.mubr.f32.mxu0 0.0
  %730 = vmatmul.mubr.f32.gmra.mxu0 %v654
  %v731 = vpop.f32.mrf.mxu0
  %v732 = vadd.f32 %v191, %v731
  %v733 = vpop.f32.mrf.mxu0
  %734 = vmatprep.mubr.f32.mxu0 0.0
  %735 = vmatmul.mubr.f32.gmra.mxu0 %v656
  %v736 = vpop.f32.mrf.mxu0
  %v737 = vadd.f32 %v192, %v736
  %v738 = vpop.f32.mrf.mxu0
  %739 = vmatprep.mubr.f32.mxu0 0.0
  %740 = vmatmul.mubr.f32.gmra.mxu0 %v658
  %v741 = vpop.f32.mrf.mxu0
  %v742 = vadd.f32 %v193, %v741
  %v743 = vpop.f32.mrf.mxu0
  %744 = vdwg.mxu0
  %v745 = vsel %vm60, %v727, -inf
  %746 = vmax.xlane.f32.xlu0 %v745
  %v747 = vpop.xlane.xlu0 %746
  %v748 = vsel %vm60, %v732, -inf
  %749 = vmax.xlane.f32.xlu0 %v748
  %v750 = vpop.xlane.xlu0 %749
  %v751 = vsel %vm60, %v737, -inf
  %752 = vmax.xlane.f32.xlu0 %v751
  %v753 = vpop.xlane.xlu0 %752
  %v754 = vsel %vm60, %v742, -inf
  %755 = vmax.xlane.f32.xlu0 %v754
  %v756 = vpop.xlane.xlu0 %755
  %v757 = vsub.f32 %v727, %v747
  %v758 = vsub.f32 %v732, %v750
  %v759 = vsub.f32 %v737, %v753
  %v760 = vsub.f32 %v742, %v756
  %v761 = vmul.f32 %v757, 1.442695
  %v762 = vpow.pop %v761
  %v763 = vmul.f32 %v758, 1.442695
  %v764 = vpow.pop %v763
  %v765 = vmul.f32 %v759, 1.442695
  %v766 = vpow.pop %v765
  %v767 = vmul.f32 %v760, 1.442695
  %v768 = vpow.pop %v767
  %v769 = vsel %vm60, %v762, 0.0
  %770 = vadd.xlane.f32.xlu0 %v769
  %v771 = vpop.xlane.xlu0 %770
  %v772 = vsel %vm60, %v764, 0.0
  %773 = vadd.xlane.f32.xlu0 %v772
  %v774 = vpop.xlane.xlu0 %773
  %v775 = vsel %vm60, %v766, 0.0
  %776 = vadd.xlane.f32.xlu0 %v775
  %v777 = vpop.xlane.xlu0 %776
  %v778 = vsel %vm60, %v768, 0.0
  %779 = vadd.xlane.f32.xlu0 %v778
  %v780 = vpop.xlane.xlu0 %779
  %v781 = vrcp.pop %v771
  %v782 = vrcp.pop %v774
  %v783 = vrcp.pop %v777
  %v784 = vrcp.pop %v780
  %v785 = vmul.f32 %v762, %v781
  %v786 = vmul.f32 %v764, %v782
  %v787 = vmul.f32 %v766, %v783
  %v788 = vmul.f32 %v768, %v784
  %v790 = vsel %vm60, %v785, 0
  %v793 = vsel %vm60, %v786, 0
  %v796 = vsel %vm60, %v787, 0
  %v799 = vsel %vm60, %v788, 0
  %801 = vmatprep.subr.mxu0 0.0
  %802 = vmatpush1.msra.mxu0 0.0
  %803 = vmatprep.subr.mxu0 0.0
  %804 = vmatpush1.msra.mxu0 0.0
  %805 = vmatprep.subr.mxu0 0.0
  %806 = vmatpush1.msra.mxu0 0.0
  %807 = vmatprep.subr.mxu0 0.0
  %808 = vmatpush1.msra.mxu0 0.0
  %809 = vmatprep.subr.mxu0 0.0
  %810 = vmatpush1.msra.mxu0 0.0
  %811 = vmatprep.subr.mxu0 0.0
  %812 = vmatpush1.msra.mxu0 0.0
  %813 = vmatprep.subr.mxu0 0.0
  %814 = vmatpush1.msra.mxu0 0.0
  %815 = vmatprep.subr.mxu0 0.0
  %816 = vmatpush1.msra.mxu0 0.0
  %817 = vmatprep.subr.mxu0 0.0
  %818 = vmatpush1.msra.mxu0 0.0
  %819 = vmatprep.subr.mxu0 0.0
  %820 = vmatpush1.msra.mxu0 0.0
  %821 = vmatprep.subr.mxu0 0.0
  %822 = vmatpush1.msra.mxu0 0.0
  %823 = vmatprep.subr.mxu0 0.0
  %824 = vmatpush1.msra.mxu0 0.0
  %825 = vmatprep.subr.mxu0 0.0
  %826 = vmatpush1.msra.mxu0 %v542
  %827 = vmatprep.subr.mxu0 0.0
  %828 = vmatpush1.msra.mxu0 %v540
  %829 = vmatprep.subr.mxu0 0.0
  %830 = vmatpush1.msra.mxu0 %v538
  %831 = vmatprep.subr.mxu0 0.0
  %832 = vmatpush1.msra.mxu0 %v536
  %833 = vmatprep.subr.mxu0 0.0
  %834 = vmatpush2.msra.mxu0 0.0
  %835 = vmatprep.subr.mxu0 0.0
  %836 = vmatpush2.msra.mxu0 0.0
  %837 = vmatprep.subr.mxu0 0.0
  %838 = vmatpush2.msra.mxu0 0.0
  %839 = vmatprep.subr.mxu0 0.0
  %840 = vmatpush2.msra.mxu0 0.0
  %841 = vmatprep.subr.mxu0 0.0
  %842 = vmatpush2.msra.mxu0 0.0
  %843 = vmatprep.subr.mxu0 0.0
  %844 = vmatpush2.msra.mxu0 0.0
  %845 = vmatprep.subr.mxu0 0.0
  %846 = vmatpush2.msra.mxu0 0.0
  %847 = vmatprep.subr.mxu0 0.0
  %848 = vmatpush2.msra.mxu0 0.0
  %849 = vmatprep.subr.mxu0 0.0
  %850 = vmatpush2.msra.mxu0 0.0
  %851 = vmatprep.subr.mxu0 0.0
  %852 = vmatpush2.msra.mxu0 0.0
  %853 = vmatprep.subr.mxu0 0.0
  %854 = vmatpush2.msra.mxu0 0.0
  %855 = vmatprep.subr.mxu0 0.0
  %856 = vmatpush2.msra.mxu0 0.0
  %857 = vmatprep.subr.mxu0 0.0
  %858 = vmatpush2.msra.mxu0 0.0
  %859 = vmatprep.subr.mxu0 0.0
  %860 = vmatpush2.msra.mxu0 0.0
  %861 = vmatprep.subr.mxu0 0.0
  %862 = vmatpush2.msra.mxu0 0.0
  %863 = vmatprep.subr.mxu0 0.0
  %864 = vmatpush2.msra.mxu0 0.0
  %865 = vmatprep.mubr.f32.mxu0 0.0
  %866 = vmatmul.mubr.f32.gmra.mxu0 %v790
  %v867 = vpop.f32.mrf.mxu0
  %v868 = vadd.f32 0.0, %v867
  %v869 = vpop.f32.mrf.mxu0
  %870 = vmatprep.mubr.f32.mxu0 0.0
  %871 = vmatmul.mubr.f32.gmra.mxu0 %v793
  %v872 = vpop.f32.mrf.mxu0
  %v873 = vadd.f32 0.0, %v872
  %v874 = vpop.f32.mrf.mxu0
  %875 = vmatprep.mubr.f32.mxu0 0.0
  %876 = vmatmul.mubr.f32.gmra.mxu0 %v796
  %v877 = vpop.f32.mrf.mxu0
  %v878 = vadd.f32 0.0, %v877
  %v879 = vpop.f32.mrf.mxu0
  %880 = vmatprep.mubr.f32.mxu0 0.0
  %881 = vmatmul.mubr.f32.gmra.mxu0 %v799
  %v882 = vpop.f32.mrf.mxu0
  %v883 = vadd.f32 0.0, %v882
  %v884 = vpop.f32.mrf.mxu0
  %885 = vdwg.mxu0
  %886 = vrot.lane.b32.xlu0 %v359, 112
  %v887 = vpop.permute.xlu0 %886
  %888 = vrot.lane.b32.xlu0 %v364, 112
  %v889 = vpop.permute.xlu0 %888
  %890 = vrot.lane.b32.xlu0 %v369, 112
  %v891 = vpop.permute.xlu0 %890
  %892 = vrot.lane.b32.xlu0 %v374, 112
  %v893 = vpop.permute.xlu0 %892
  %894 = vrot.lane.b32.xlu0 %v359, 88
  %v895 = vpop.permute.xlu0 %894
  %896 = vrot.lane.b32.xlu0 %v364, 88
  %v897 = vpop.permute.xlu0 %896
  %898 = vrot.lane.b32.xlu0 %v369, 88
  %v899 = vpop.permute.xlu0 %898
  %900 = vrot.lane.b32.xlu0 %v374, 88
  %v901 = vpop.permute.xlu0 %900
  %v902 = vsel %vm389, %v887, 0
  %v904 = vsel %vm389, %v889, 0
  %v906 = vsel %vm389, %v891, 0
  %v908 = vsel %vm389, %v893, 0
  %v910 = vsel %vm389, %v895, 0
  %v912 = vsel %vm389, %v897, 0
  %v914 = vsel %vm389, %v899, 0
  %v916 = vsel %vm389, %v901, 0
  %918 = vmatprep.subr.mxu0 0.0
  %919 = vmatpush1.xpose.msra.mxu0 0.0
  %920 = vmatprep.subr.mxu0 0.0
  %921 = vmatpush1.xpose.msra.mxu0 0.0
  %922 = vmatprep.subr.mxu0 0.0
  %923 = vmatpush1.xpose.msra.mxu0 0.0
  %924 = vmatprep.subr.mxu0 0.0
  %925 = vmatpush1.xpose.msra.mxu0 0.0
  %926 = vmatprep.subr.mxu0 0.0
  %927 = vmatpush1.xpose.msra.mxu0 0.0
  %928 = vmatprep.subr.mxu0 0.0
  %929 = vmatpush1.xpose.msra.mxu0 0.0
  %930 = vmatprep.subr.mxu0 0.0
  %931 = vmatpush1.xpose.msra.mxu0 0.0
  %932 = vmatprep.subr.mxu0 0.0
  %933 = vmatpush1.xpose.msra.mxu0 0.0
  %934 = vmatprep.subr.mxu0 0.0
  %935 = vmatpush1.xpose.msra.mxu0 0.0
  %936 = vmatprep.subr.mxu0 0.0
  %937 = vmatpush1.xpose.msra.mxu0 0.0
  %938 = vmatprep.subr.mxu0 0.0
  %939 = vmatpush1.xpose.msra.mxu0 0.0
  %940 = vmatprep.subr.mxu0 0.0
  %941 = vmatpush1.xpose.msra.mxu0 0.0
  %942 = vmatprep.subr.mxu0 0.0
  %943 = vmatpush1.xpose.msra.mxu0 %v916
  %944 = vmatprep.subr.mxu0 0.0
  %945 = vmatpush1.xpose.msra.mxu0 %v914
  %946 = vmatprep.subr.mxu0 0.0
  %947 = vmatpush1.xpose.msra.mxu0 %v912
  %948 = vmatprep.subr.mxu0 0.0
  %949 = vmatpush1.xpose.msra.mxu0 %v910
  %950 = vmatprep.subr.mxu0 0.0
  %951 = vmatpush2.xpose.msra.mxu0 0.0
  %952 = vmatprep.subr.mxu0 0.0
  %953 = vmatpush2.xpose.msra.mxu0 0.0
  %954 = vmatprep.subr.mxu0 0.0
  %955 = vmatpush2.xpose.msra.mxu0 0.0
  %956 = vmatprep.subr.mxu0 0.0
  %957 = vmatpush2.xpose.msra.mxu0 0.0
  %958 = vmatprep.subr.mxu0 0.0
  %959 = vmatpush2.xpose.msra.mxu0 0.0
  %960 = vmatprep.subr.mxu0 0.0
  %961 = vmatpush2.xpose.msra.mxu0 0.0
  %962 = vmatprep.subr.mxu0 0.0
  %963 = vmatpush2.xpose.msra.mxu0 0.0
  %964 = vmatprep.subr.mxu0 0.0
  %965 = vmatpush2.xpose.msra.mxu0 0.0
  %966 = vmatprep.subr.mxu0 0.0
  %967 = vmatpush2.xpose.msra.mxu0 0.0
  %968 = vmatprep.subr.mxu0 0.0
  %969 = vmatpush2.xpose.msra.mxu0 0.0
  %970 = vmatprep.subr.mxu0 0.0
  %971 = vmatpush2.xpose.msra.mxu0 0.0
  %972 = vmatprep.subr.mxu0 0.0
  %973 = vmatpush2.xpose.msra.mxu0 0.0
  %974 = vmatprep.subr.mxu0 0.0
  %975 = vmatpush2.xpose.msra.mxu0 0.0
  %976 = vmatprep.subr.mxu0 0.0
  %977 = vmatpush2.xpose.msra.mxu0 0.0
  %978 = vmatprep.subr.mxu0 0.0
  %979 = vmatpush2.xpose.msra.mxu0 0.0
  %980 = vmatprep.subr.mxu0 0.0
  %981 = vmatpush2.xpose.msra.mxu0 0.0
  %982 = vmatprep.mubr.f32.mxu0 0.0
  %983 = vmatmul.mubr.f32.gmra.mxu0 %v902
  %v984 = vpop.f32.mrf.mxu0
  %v985 = vadd.f32 %v190, %v984
  %v986 = vpop.f32.mrf.mxu0
  %987 = vmatprep.mubr.f32.mxu0 0.0
  %988 = vmatmul.mubr.f32.gmra.mxu0 %v904
  %v989 = vpop.f32.mrf.mxu0
  %v990 = vadd.f32 %v191, %v989
  %v991 = vpop.f32.mrf.mxu0
  %992 = vmatprep.mubr.f32.mxu0 0.0
  %993 = vmatmul.mubr.f32.gmra.mxu0 %v906
  %v994 = vpop.f32.mrf.mxu0
  %v995 = vadd.f32 %v192, %v994
  %v996 = vpop.f32.mrf.mxu0
  %997 = vmatprep.mubr.f32.mxu0 0.0
  %998 = vmatmul.mubr.f32.gmra.mxu0 %v908
  %v999 = vpop.f32.mrf.mxu0
  %v1000 = vadd.f32 %v193, %v999
  %v1001 = vpop.f32.mrf.mxu0
  %1002 = vdwg.mxu0
  %v1003 = vsel %vm60, %v985, -inf
  %1004 = vmax.xlane.f32.xlu0 %v1003
  %v1005 = vpop.xlane.xlu0 %1004
  %v1006 = vsel %vm60, %v990, -inf
  %1007 = vmax.xlane.f32.xlu0 %v1006
  %v1008 = vpop.xlane.xlu0 %1007
  %v1009 = vsel %vm60, %v995, -inf
  %1010 = vmax.xlane.f32.xlu0 %v1009
  %v1011 = vpop.xlane.xlu0 %1010
  %v1012 = vsel %vm60, %v1000, -inf
  %1013 = vmax.xlane.f32.xlu0 %v1012
  %v1014 = vpop.xlane.xlu0 %1013
  %v1015 = vsub.f32 %v985, %v1005
  %v1016 = vsub.f32 %v990, %v1008
  %v1017 = vsub.f32 %v995, %v1011
  %v1018 = vsub.f32 %v1000, %v1014
  %v1019 = vmul.f32 %v1015, 1.442695
  %v1020 = vpow.pop %v1019
  %v1021 = vmul.f32 %v1016, 1.442695
  %v1022 = vpow.pop %v1021
  %v1023 = vmul.f32 %v1017, 1.442695
  %v1024 = vpow.pop %v1023
  %v1025 = vmul.f32 %v1018, 1.442695
  %v1026 = vpow.pop %v1025
  %v1027 = vsel %vm60, %v1020, 0.0
  %1028 = vadd.xlane.f32.xlu0 %v1027
  %v1029 = vpop.xlane.xlu0 %1028
  %v1030 = vsel %vm60, %v1022, 0.0
  %1031 = vadd.xlane.f32.xlu0 %v1030
  %v1032 = vpop.xlane.xlu0 %1031
  %v1033 = vsel %vm60, %v1024, 0.0
  %1034 = vadd.xlane.f32.xlu0 %v1033
  %v1035 = vpop.xlane.xlu0 %1034
  %v1036 = vsel %vm60, %v1026, 0.0
  %1037 = vadd.xlane.f32.xlu0 %v1036
  %v1038 = vpop.xlane.xlu0 %1037
  %v1039 = vrcp.pop %v1029
  %v1040 = vrcp.pop %v1032
  %v1041 = vrcp.pop %v1035
  %v1042 = vrcp.pop %v1038
  %v1043 = vmul.f32 %v1020, %v1039
  %v1044 = vmul.f32 %v1022, %v1040
  %v1045 = vmul.f32 %v1024, %v1041
  %v1046 = vmul.f32 %v1026, %v1042
  %1047 = vrot.lane.b32.xlu0 %v359, 72
  %v1048 = vpop.permute.xlu0 %1047
  %1049 = vrot.lane.b32.xlu0 %v364, 72
  %v1050 = vpop.permute.xlu0 %1049
  %1051 = vrot.lane.b32.xlu0 %v369, 72
  %v1052 = vpop.permute.xlu0 %1051
  %1053 = vrot.lane.b32.xlu0 %v374, 72
  %v1054 = vpop.permute.xlu0 %1053
  %v1060 = vsel %vm60, %v1043, 0
  %v1063 = vsel %vm60, %v1044, 0
  %v1066 = vsel %vm60, %v1045, 0
  %v1069 = vsel %vm60, %v1046, 0
  %1071 = vmatprep.subr.mxu0 0.0
  %1072 = vmatpush1.msra.mxu0 0.0
  %1073 = vmatprep.subr.mxu0 0.0
  %1074 = vmatpush1.msra.mxu0 0.0
  %1075 = vmatprep.subr.mxu0 0.0
  %1076 = vmatpush1.msra.mxu0 0.0
  %1077 = vmatprep.subr.mxu0 0.0
  %1078 = vmatpush1.msra.mxu0 0.0
  %1079 = vmatprep.subr.mxu0 0.0
  %1080 = vmatpush1.msra.mxu0 0.0
  %1081 = vmatprep.subr.mxu0 0.0
  %1082 = vmatpush1.msra.mxu0 0.0
  %1083 = vmatprep.subr.mxu0 0.0
  %1084 = vmatpush1.msra.mxu0 0.0
  %1085 = vmatprep.subr.mxu0 0.0
  %1086 = vmatpush1.msra.mxu0 0.0
  %1087 = vmatprep.subr.mxu0 0.0
  %1088 = vmatpush1.msra.mxu0 0.0
  %1089 = vmatprep.subr.mxu0 0.0
  %1090 = vmatpush1.msra.mxu0 0.0
  %1091 = vmatprep.subr.mxu0 0.0
  %1092 = vmatpush1.msra.mxu0 0.0
  %1093 = vmatprep.subr.mxu0 0.0
  %1094 = vmatpush1.msra.mxu0 0.0
  %1095 = vmatprep.subr.mxu0 0.0
  %1096 = vmatpush1.msra.mxu0 %v1054
  %1097 = vmatprep.subr.mxu0 0.0
  %1098 = vmatpush1.msra.mxu0 %v1052
  %1099 = vmatprep.subr.mxu0 0.0
  %1100 = vmatpush1.msra.mxu0 %v1050
  %1101 = vmatprep.subr.mxu0 0.0
  %1102 = vmatpush1.msra.mxu0 %v1048
  %1103 = vmatprep.subr.mxu0 0.0
  %1104 = vmatpush2.msra.mxu0 0.0
  %1105 = vmatprep.subr.mxu0 0.0
  %1106 = vmatpush2.msra.mxu0 0.0
  %1107 = vmatprep.subr.mxu0 0.0
  %1108 = vmatpush2.msra.mxu0 0.0
  %1109 = vmatprep.subr.mxu0 0.0
  %1110 = vmatpush2.msra.mxu0 0.0
  %1111 = vmatprep.subr.mxu0 0.0
  %1112 = vmatpush2.msra.mxu0 0.0
  %1113 = vmatprep.subr.mxu0 0.0
  %1114 = vmatpush2.msra.mxu0 0.0
  %1115 = vmatprep.subr.mxu0 0.0
  %1116 = vmatpush2.msra.mxu0 0.0
  %1117 = vmatprep.subr.mxu0 0.0
  %1118 = vmatpush2.msra.mxu0 0.0
  %1119 = vmatprep.subr.mxu0 0.0
  %1120 = vmatpush2.msra.mxu0 0.0
  %1121 = vmatprep.subr.mxu0 0.0
  %1122 = vmatpush2.msra.mxu0 0.0
  %1123 = vmatprep.subr.mxu0 0.0
  %1124 = vmatpush2.msra.mxu0 0.0
  %1125 = vmatprep.subr.mxu0 0.0
  %1126 = vmatpush2.msra.mxu0 0.0
  %1127 = vmatprep.subr.mxu0 0.0
  %1128 = vmatpush2.msra.mxu0 0.0
  %1129 = vmatprep.subr.mxu0 0.0
  %1130 = vmatpush2.msra.mxu0 0.0
  %1131 = vmatprep.subr.mxu0 0.0
  %1132 = vmatpush2.msra.mxu0 0.0
  %1133 = vmatprep.subr.mxu0 0.0
  %1134 = vmatpush2.msra.mxu0 0.0
  %1135 = vmatprep.mubr.f32.mxu0 0.0
  %1136 = vmatmul.mubr.f32.gmra.mxu0 %v1060
  %v1137 = vpop.f32.mrf.mxu0
  %v1138 = vadd.f32 0.0, %v1137
  %v1139 = vpop.f32.mrf.mxu0
  %1140 = vmatprep.mubr.f32.mxu0 0.0
  %1141 = vmatmul.mubr.f32.gmra.mxu0 %v1063
  %v1142 = vpop.f32.mrf.mxu0
  %v1143 = vadd.f32 0.0, %v1142
  %v1144 = vpop.f32.mrf.mxu0
  %1145 = vmatprep.mubr.f32.mxu0 0.0
  %1146 = vmatmul.mubr.f32.gmra.mxu0 %v1066
  %v1147 = vpop.f32.mrf.mxu0
  %v1148 = vadd.f32 0.0, %v1147
  %v1149 = vpop.f32.mrf.mxu0
  %1150 = vmatprep.mubr.f32.mxu0 0.0
  %1151 = vmatmul.mubr.f32.gmra.mxu0 %v1069
  %v1152 = vpop.f32.mrf.mxu0
  %v1153 = vadd.f32 0.0, %v1152
  %v1154 = vpop.f32.mrf.mxu0
  %1155 = vdwg.mxu0
  %1156 = vrot.lane.b32.xlu0 %v359, 104
  %v1157 = vpop.permute.xlu0 %1156
  %1158 = vrot.lane.b32.xlu0 %v364, 104
  %v1159 = vpop.permute.xlu0 %1158
  %1160 = vrot.lane.b32.xlu0 %v369, 104
  %v1161 = vpop.permute.xlu0 %1160
  %1162 = vrot.lane.b32.xlu0 %v374, 104
  %v1163 = vpop.permute.xlu0 %1162
  %v1164 = vsel %vm389, %v1157, 0
  %v1166 = vsel %vm389, %v1159, 0
  %v1168 = vsel %vm389, %v1161, 0
  %v1170 = vsel %vm389, %v1163, 0
  %1172 = vmatprep.subr.mxu0 0.0
  %1173 = vmatpush1.xpose.msra.mxu0 0.0
  %1174 = vmatprep.subr.mxu0 0.0
  %1175 = vmatpush1.xpose.msra.mxu0 0.0
  %1176 = vmatprep.subr.mxu0 0.0
  %1177 = vmatpush1.xpose.msra.mxu0 0.0
  %1178 = vmatprep.subr.mxu0 0.0
  %1179 = vmatpush1.xpose.msra.mxu0 0.0
  %1180 = vmatprep.subr.mxu0 0.0
  %1181 = vmatpush1.xpose.msra.mxu0 0.0
  %1182 = vmatprep.subr.mxu0 0.0
  %1183 = vmatpush1.xpose.msra.mxu0 0.0
  %1184 = vmatprep.subr.mxu0 0.0
  %1185 = vmatpush1.xpose.msra.mxu0 0.0
  %1186 = vmatprep.subr.mxu0 0.0
  %1187 = vmatpush1.xpose.msra.mxu0 0.0
  %1188 = vmatprep.subr.mxu0 0.0
  %1189 = vmatpush1.xpose.msra.mxu0 0.0
  %1190 = vmatprep.subr.mxu0 0.0
  %1191 = vmatpush1.xpose.msra.mxu0 0.0
  %1192 = vmatprep.subr.mxu0 0.0
  %1193 = vmatpush1.xpose.msra.mxu0 0.0
  %1194 = vmatprep.subr.mxu0 0.0
  %1195 = vmatpush1.xpose.msra.mxu0 0.0
  %1196 = vmatprep.subr.mxu0 0.0
  %1197 = vmatpush1.xpose.msra.mxu0 %v916
  %1198 = vmatprep.subr.mxu0 0.0
  %1199 = vmatpush1.xpose.msra.mxu0 %v914
  %1200 = vmatprep.subr.mxu0 0.0
  %1201 = vmatpush1.xpose.msra.mxu0 %v912
  %1202 = vmatprep.subr.mxu0 0.0
  %1203 = vmatpush1.xpose.msra.mxu0 %v910
  %1204 = vmatprep.subr.mxu0 0.0
  %1205 = vmatpush2.xpose.msra.mxu0 0.0
  %1206 = vmatprep.subr.mxu0 0.0
  %1207 = vmatpush2.xpose.msra.mxu0 0.0
  %1208 = vmatprep.subr.mxu0 0.0
  %1209 = vmatpush2.xpose.msra.mxu0 0.0
  %1210 = vmatprep.subr.mxu0 0.0
  %1211 = vmatpush2.xpose.msra.mxu0 0.0
  %1212 = vmatprep.subr.mxu0 0.0
  %1213 = vmatpush2.xpose.msra.mxu0 0.0
  %1214 = vmatprep.subr.mxu0 0.0
  %1215 = vmatpush2.xpose.msra.mxu0 0.0
  %1216 = vmatprep.subr.mxu0 0.0
  %1217 = vmatpush2.xpose.msra.mxu0 0.0
  %1218 = vmatprep.subr.mxu0 0.0
  %1219 = vmatpush2.xpose.msra.mxu0 0.0
  %1220 = vmatprep.subr.mxu0 0.0
  %1221 = vmatpush2.xpose.msra.mxu0 0.0
  %1222 = vmatprep.subr.mxu0 0.0
  %1223 = vmatpush2.xpose.msra.mxu0 0.0
  %1224 = vmatprep.subr.mxu0 0.0
  %1225 = vmatpush2.xpose.msra.mxu0 0.0
  %1226 = vmatprep.subr.mxu0 0.0
  %1227 = vmatpush2.xpose.msra.mxu0 0.0
  %1228 = vmatprep.subr.mxu0 0.0
  %1229 = vmatpush2.xpose.msra.mxu0 0.0
  %1230 = vmatprep.subr.mxu0 0.0
  %1231 = vmatpush2.xpose.msra.mxu0 0.0
  %1232 = vmatprep.subr.mxu0 0.0
  %1233 = vmatpush2.xpose.msra.mxu0 0.0
  %1234 = vmatprep.subr.mxu0 0.0
  %1235 = vmatpush2.xpose.msra.mxu0 0.0
  %1236 = vmatprep.mubr.f32.mxu0 0.0
  %1237 = vmatmul.mubr.f32.gmra.mxu0 %v1164
  %v1238 = vpop.f32.mrf.mxu0
  %v1239 = vadd.f32 %v190, %v1238
  %v1240 = vpop.f32.mrf.mxu0
  %1241 = vmatprep.mubr.f32.mxu0 0.0
  %1242 = vmatmul.mubr.f32.gmra.mxu0 %v1166
  %v1243 = vpop.f32.mrf.mxu0
  %v1244 = vadd.f32 %v191, %v1243
  %v1245 = vpop.f32.mrf.mxu0
  %1246 = vmatprep.mubr.f32.mxu0 0.0
  %1247 = vmatmul.mubr.f32.gmra.mxu0 %v1168
  %v1248 = vpop.f32.mrf.mxu0
  %v1249 = vadd.f32 %v192, %v1248
  %v1250 = vpop.f32.mrf.mxu0
  %1251 = vmatprep.mubr.f32.mxu0 0.0
  %1252 = vmatmul.mubr.f32.gmra.mxu0 %v1170
  %v1253 = vpop.f32.mrf.mxu0
  %v1254 = vadd.f32 %v193, %v1253
  %v1255 = vpop.f32.mrf.mxu0
  %1256 = vdwg.mxu0
  %v1257 = vsel %vm60, %v1239, -inf
  %1258 = vmax.xlane.f32.xlu0 %v1257
  %v1259 = vpop.xlane.xlu0 %1258
  %v1260 = vsel %vm60, %v1244, -inf
  %1261 = vmax.xlane.f32.xlu0 %v1260
  %v1262 = vpop.xlane.xlu0 %1261
  %v1263 = vsel %vm60, %v1249, -inf
  %1264 = vmax.xlane.f32.xlu0 %v1263
  %v1265 = vpop.xlane.xlu0 %1264
  %v1266 = vsel %vm60, %v1254, -inf
  %1267 = vmax.xlane.f32.xlu0 %v1266
  %v1268 = vpop.xlane.xlu0 %1267
  %v1269 = vsub.f32 %v1239, %v1259
  %v1270 = vsub.f32 %v1244, %v1262
  %v1271 = vsub.f32 %v1249, %v1265
  %v1272 = vsub.f32 %v1254, %v1268
  %v1273 = vmul.f32 %v1269, 1.442695
  %v1274 = vpow.pop %v1273
  %v1275 = vmul.f32 %v1270, 1.442695
  %v1276 = vpow.pop %v1275
  %v1277 = vmul.f32 %v1271, 1.442695
  %v1278 = vpow.pop %v1277
  %v1279 = vmul.f32 %v1272, 1.442695
  %v1280 = vpow.pop %v1279
  %v1281 = vsel %vm60, %v1274, 0.0
  %1282 = vadd.xlane.f32.xlu0 %v1281
  %v1283 = vpop.xlane.xlu0 %1282
  %v1284 = vsel %vm60, %v1276, 0.0
  %1285 = vadd.xlane.f32.xlu0 %v1284
  %v1286 = vpop.xlane.xlu0 %1285
  %v1287 = vsel %vm60, %v1278, 0.0
  %1288 = vadd.xlane.f32.xlu0 %v1287
  %v1289 = vpop.xlane.xlu0 %1288
  %v1290 = vsel %vm60, %v1280, 0.0
  %1291 = vadd.xlane.f32.xlu0 %v1290
  %v1292 = vpop.xlane.xlu0 %1291
  %v1293 = vrcp.pop %v1283
  %v1294 = vrcp.pop %v1286
  %v1295 = vrcp.pop %v1289
  %v1296 = vrcp.pop %v1292
  %v1297 = vmul.f32 %v1274, %v1293
  %v1298 = vmul.f32 %v1276, %v1294
  %v1299 = vmul.f32 %v1278, %v1295
  %v1300 = vmul.f32 %v1280, %v1296
  %v1302 = vsel %vm60, %v1297, 0
  %v1305 = vsel %vm60, %v1298, 0
  %v1308 = vsel %vm60, %v1299, 0
  %v1311 = vsel %vm60, %v1300, 0
  %1313 = vmatprep.subr.mxu0 0.0
  %1314 = vmatpush1.msra.mxu0 0.0
  %1315 = vmatprep.subr.mxu0 0.0
  %1316 = vmatpush1.msra.mxu0 0.0
  %1317 = vmatprep.subr.mxu0 0.0
  %1318 = vmatpush1.msra.mxu0 0.0
  %1319 = vmatprep.subr.mxu0 0.0
  %1320 = vmatpush1.msra.mxu0 0.0
  %1321 = vmatprep.subr.mxu0 0.0
  %1322 = vmatpush1.msra.mxu0 0.0
  %1323 = vmatprep.subr.mxu0 0.0
  %1324 = vmatpush1.msra.mxu0 0.0
  %1325 = vmatprep.subr.mxu0 0.0
  %1326 = vmatpush1.msra.mxu0 0.0
  %1327 = vmatprep.subr.mxu0 0.0
  %1328 = vmatpush1.msra.mxu0 0.0
  %1329 = vmatprep.subr.mxu0 0.0
  %1330 = vmatpush1.msra.mxu0 0.0
  %1331 = vmatprep.subr.mxu0 0.0
  %1332 = vmatpush1.msra.mxu0 0.0
  %1333 = vmatprep.subr.mxu0 0.0
  %1334 = vmatpush1.msra.mxu0 0.0
  %1335 = vmatprep.subr.mxu0 0.0
  %1336 = vmatpush1.msra.mxu0 0.0
  %1337 = vmatprep.subr.mxu0 0.0
  %1338 = vmatpush1.msra.mxu0 %v1054
  %1339 = vmatprep.subr.mxu0 0.0
  %1340 = vmatpush1.msra.mxu0 %v1052
  %1341 = vmatprep.subr.mxu0 0.0
  %1342 = vmatpush1.msra.mxu0 %v1050
  %1343 = vmatprep.subr.mxu0 0.0
  %1344 = vmatpush1.msra.mxu0 %v1048
  %1345 = vmatprep.subr.mxu0 0.0
  %1346 = vmatpush2.msra.mxu0 0.0
  %1347 = vmatprep.subr.mxu0 0.0
  %1348 = vmatpush2.msra.mxu0 0.0
  %1349 = vmatprep.subr.mxu0 0.0
  %1350 = vmatpush2.msra.mxu0 0.0
  %1351 = vmatprep.subr.mxu0 0.0
  %1352 = vmatpush2.msra.mxu0 0.0
  %1353 = vmatprep.subr.mxu0 0.0
  %1354 = vmatpush2.msra.mxu0 0.0
  %1355 = vmatprep.subr.mxu0 0.0
  %1356 = vmatpush2.msra.mxu0 0.0
  %1357 = vmatprep.subr.mxu0 0.0
  %1358 = vmatpush2.msra.mxu0 0.0
  %1359 = vmatprep.subr.mxu0 0.0
  %1360 = vmatpush2.msra.mxu0 0.0
  %1361 = vmatprep.subr.mxu0 0.0
  %1362 = vmatpush2.msra.mxu0 0.0
  %1363 = vmatprep.subr.mxu0 0.0
  %1364 = vmatpush2.msra.mxu0 0.0
  %1365 = vmatprep.subr.mxu0 0.0
  %1366 = vmatpush2.msra.mxu0 0.0
  %1367 = vmatprep.subr.mxu0 0.0
  %1368 = vmatpush2.msra.mxu0 0.0
  %1369 = vmatprep.subr.mxu0 0.0
  %1370 = vmatpush2.msra.mxu0 0.0
  %1371 = vmatprep.subr.mxu0 0.0
  %1372 = vmatpush2.msra.mxu0 0.0
  %1373 = vmatprep.subr.mxu0 0.0
  %1374 = vmatpush2.msra.mxu0 0.0
  %1375 = vmatprep.subr.mxu0 0.0
  %1376 = vmatpush2.msra.mxu0 0.0
  %1377 = vmatprep.mubr.f32.mxu0 0.0
  %1378 = vmatmul.mubr.f32.gmra.mxu0 %v1302
  %v1379 = vpop.f32.mrf.mxu0
  %v1380 = vadd.f32 0.0, %v1379
  %v1381 = vpop.f32.mrf.mxu0
  %1382 = vmatprep.mubr.f32.mxu0 0.0
  %1383 = vmatmul.mubr.f32.gmra.mxu0 %v1305
  %v1384 = vpop.f32.mrf.mxu0
  %v1385 = vadd.f32 0.0, %v1384
  %v1386 = vpop.f32.mrf.mxu0
  %1387 = vmatprep.mubr.f32.mxu0 0.0
  %1388 = vmatmul.mubr.f32.gmra.mxu0 %v1308
  %v1389 = vpop.f32.mrf.mxu0
  %v1390 = vadd.f32 0.0, %v1389
  %v1391 = vpop.f32.mrf.mxu0
  %1392 = vmatprep.mubr.f32.mxu0 0.0
  %1393 = vmatmul.mubr.f32.gmra.mxu0 %v1311
  %v1394 = vpop.f32.mrf.mxu0
  %v1395 = vadd.f32 0.0, %v1394
  %v1396 = vpop.f32.mrf.mxu0
  %1397 = vdwg.mxu0
  %1402 = vrot.lane.b32.xlu0 %v868, 8
  %v1403 = vpop.permute.xlu0 %1402
  %1404 = vrot.lane.b32.xlu0 %v873, 8
  %v1405 = vpop.permute.xlu0 %1404
  %1406 = vrot.lane.b32.xlu0 %v878, 8
  %v1407 = vpop.permute.xlu0 %1406
  %1408 = vrot.lane.b32.xlu0 %v883, 8
  %v1409 = vpop.permute.xlu0 %1408
  %1418 = vrot.lane.b32.xlu0 %v1138, 16
  %v1419 = vpop.permute.xlu0 %1418
  %1420 = vrot.lane.b32.xlu0 %v1143, 16
  %v1421 = vpop.permute.xlu0 %1420
  %1422 = vrot.lane.b32.xlu0 %v1148, 16
  %v1423 = vpop.permute.xlu0 %1422
  %1424 = vrot.lane.b32.xlu0 %v1153, 16
  %v1425 = vpop.permute.xlu0 %1424
  %1434 = vrot.lane.b32.xlu0 %v1380, 24
  %v1435 = vpop.permute.xlu0 %1434
  %1436 = vrot.lane.b32.xlu0 %v1385, 24
  %v1437 = vpop.permute.xlu0 %1436
  %1438 = vrot.lane.b32.xlu0 %v1390, 24
  %v1439 = vpop.permute.xlu0 %1438
  %1440 = vrot.lane.b32.xlu0 %v1395, 24
  %v1441 = vpop.permute.xlu0 %1440
  %v1446 = vsel %vm389, %v626, %v1403
  %v1447 = vsel %vm389, %v631, %v1405
  %v1448 = vsel %vm389, %v636, %v1407
  %v1449 = vsel %vm389, %v641, %v1409
  %vm1450 = vcmask 130048
  %v1451 = vsel %vm1450, %v1446, %v1419
  %v1452 = vsel %vm1450, %v1447, %v1421
  %v1453 = vsel %vm1450, %v1448, %v1423
  %v1454 = vsel %vm1450, %v1449, %v1425
  %vm1455 = vcmask 195584
  %v1456 = vsel %vm1455, %v1451, %v1435
  %v1457 = vsel %vm1455, %v1452, %v1437
  %v1458 = vsel %vm1455, %v1453, %v1439
  %v1459 = vsel %vm1455, %v1454, %v1441
  %v1460 = vld [vmem:[%s7] sm:$0xff]
  %v1461 = vld [vmem:[%s7 + $0x8] sm:$0xff]
  %v1462 = vld [vmem:[%s7 + $0x10] sm:$0xff]
  %v1463 = vld [vmem:[%s7 + $0x18] sm:$0xff]
  %v1465 = vsel %vm60, %v1456, 0
  %v1468 = vsel %vm60, %v1457, 0
  %v1471 = vsel %vm60, %v1458, 0
  %v1474 = vsel %vm60, %v1459, 0
  %1476 = vmatprep.subr.mxu0 0.0
  %1477 = vmatpush1.msra.mxu0 0.0
  %1478 = vmatprep.subr.mxu0 0.0
  %1479 = vmatpush1.msra.mxu0 0.0
  %1480 = vmatprep.subr.mxu0 0.0
  %1481 = vmatpush1.msra.mxu0 0.0
  %1482 = vmatprep.subr.mxu0 0.0
  %1483 = vmatpush1.msra.mxu0 0.0
  %1484 = vmatprep.subr.mxu0 0.0
  %1485 = vmatpush1.msra.mxu0 0.0
  %1486 = vmatprep.subr.mxu0 0.0
  %1487 = vmatpush1.msra.mxu0 0.0
  %1488 = vmatprep.subr.mxu0 0.0
  %1489 = vmatpush1.msra.mxu0 0.0
  %1490 = vmatprep.subr.mxu0 0.0
  %1491 = vmatpush1.msra.mxu0 0.0
  %1492 = vmatprep.subr.mxu0 0.0
  %1493 = vmatpush1.msra.mxu0 0.0
  %1494 = vmatprep.subr.mxu0 0.0
  %1495 = vmatpush1.msra.mxu0 0.0
  %1496 = vmatprep.subr.mxu0 0.0
  %1497 = vmatpush1.msra.mxu0 0.0
  %1498 = vmatprep.subr.mxu0 0.0
  %1499 = vmatpush1.msra.mxu0 0.0
  %1500 = vmatprep.subr.mxu0 0.0
  %1501 = vmatpush1.msra.mxu0 %v1463
  %1502 = vmatprep.subr.mxu0 0.0
  %1503 = vmatpush1.msra.mxu0 %v1462
  %1504 = vmatprep.subr.mxu0 0.0
  %1505 = vmatpush1.msra.mxu0 %v1461
  %1506 = vmatprep.subr.mxu0 0.0
  %1507 = vmatpush1.msra.mxu0 %v1460
  %1508 = vmatprep.subr.mxu0 0.0
  %1509 = vmatpush2.msra.mxu0 0.0
  %1510 = vmatprep.subr.mxu0 0.0
  %1511 = vmatpush2.msra.mxu0 0.0
  %1512 = vmatprep.subr.mxu0 0.0
  %1513 = vmatpush2.msra.mxu0 0.0
  %1514 = vmatprep.subr.mxu0 0.0
  %1515 = vmatpush2.msra.mxu0 0.0
  %1516 = vmatprep.subr.mxu0 0.0
  %1517 = vmatpush2.msra.mxu0 0.0
  %1518 = vmatprep.subr.mxu0 0.0
  %1519 = vmatpush2.msra.mxu0 0.0
  %1520 = vmatprep.subr.mxu0 0.0
  %1521 = vmatpush2.msra.mxu0 0.0
  %1522 = vmatprep.subr.mxu0 0.0
  %1523 = vmatpush2.msra.mxu0 0.0
  %1524 = vmatprep.subr.mxu0 0.0
  %1525 = vmatpush2.msra.mxu0 0.0
  %1526 = vmatprep.subr.mxu0 0.0
  %1527 = vmatpush2.msra.mxu0 0.0
  %1528 = vmatprep.subr.mxu0 0.0
  %1529 = vmatpush2.msra.mxu0 0.0
  %1530 = vmatprep.subr.mxu0 0.0
  %1531 = vmatpush2.msra.mxu0 0.0
  %1532 = vmatprep.subr.mxu0 0.0
  %1533 = vmatpush2.msra.mxu0 0.0
  %1534 = vmatprep.subr.mxu0 0.0
  %1535 = vmatpush2.msra.mxu0 0.0
  %1536 = vmatprep.subr.mxu0 0.0
  %1537 = vmatpush2.msra.mxu0 0.0
  %1538 = vmatprep.subr.mxu0 0.0
  %1539 = vmatpush2.msra.mxu0 0.0
  %1540 = vmatprep.mubr.f32.mxu0 0.0
  %1541 = vmatmul.mubr.f32.gmra.mxu0 %v1465
  %v1542 = vpop.f32.mrf.mxu0
  %v1543 = vadd.f32 0.0, %v1542
  %v1544 = vpop.f32.mrf.mxu0
  %1545 = vmatprep.mubr.f32.mxu0 0.0
  %1546 = vmatmul.mubr.f32.gmra.mxu0 %v1468
  %v1547 = vpop.f32.mrf.mxu0
  %v1548 = vadd.f32 0.0, %v1547
  %v1549 = vpop.f32.mrf.mxu0
  %1550 = vmatprep.mubr.f32.mxu0 0.0
  %1551 = vmatmul.mubr.f32.gmra.mxu0 %v1471
  %v1552 = vpop.f32.mrf.mxu0
  %v1553 = vadd.f32 0.0, %v1552
  %v1554 = vpop.f32.mrf.mxu0
  %1555 = vmatprep.mubr.f32.mxu0 0.0
  %1556 = vmatmul.mubr.f32.gmra.mxu0 %v1474
  %v1557 = vpop.f32.mrf.mxu0
  %v1558 = vadd.f32 0.0, %v1557
  %v1559 = vpop.f32.mrf.mxu0
  %1560 = vdwg.mxu0
  %v1561 = vadd.f32 %v186, %v1543
  %v1562 = vadd.f32 %v187, %v1548
  %v1563 = vadd.f32 %v188, %v1553
  %v1564 = vadd.f32 %v189, %v1558
  %v1565 = vld [vmem:[%s8] sm:$0x1]
  %v1567 = vlaneseq
  %v1568 = vshrl.u32 %v1567, 7
  %v1569 = vsub.s32 0, %v1568
  %v1570 = vrot.slane %v1565, %v1569
  %v1572 = vadd.f32 %v1561, %v1570
  %v1573 = vadd.f32 %v1562, %v1570
  %v1574 = vadd.f32 %v1563, %v1570
  %v1575 = vadd.f32 %v1564, %v1570
  %v1576 = vld [vmem:[%s9] sm:$0x1]
  %v1577 = vld [vmem:[%s10] sm:$0x1]
  %v1578 = vsel %vm60, %v1572, 0.0
  %1579 = vadd.xlane.f32.xlu0 %v1578
  %v1580 = vpop.xlane.xlu0 %1579
  %v1581 = vsel %vm60, %v1573, 0.0
  %1582 = vadd.xlane.f32.xlu0 %v1581
  %v1583 = vpop.xlane.xlu0 %1582
  %v1584 = vsel %vm60, %v1574, 0.0
  %1585 = vadd.xlane.f32.xlu0 %v1584
  %v1586 = vpop.xlane.xlu0 %1585
  %v1587 = vsel %vm60, %v1575, 0.0
  %1588 = vadd.xlane.f32.xlu0 %v1587
  %v1589 = vpop.xlane.xlu0 %1588
  %v1590 = vmul.f32 %v1580, %v208
  %v1591 = vmul.f32 %v1583, %v208
  %v1592 = vmul.f32 %v1586, %v208
  %v1593 = vmul.f32 %v1589, %v208
  %v1594 = vsub.f32 %v1572, %v1590
  %v1595 = vsub.f32 %v1573, %v1591
  %v1596 = vsub.f32 %v1574, %v1592
  %v1597 = vsub.f32 %v1575, %v1593
  %v1598 = vmul.f32 %v1594, %v1594
  %v1599 = vmul.f32 %v1595, %v1595
  %v1600 = vmul.f32 %v1596, %v1596
  %v1601 = vmul.f32 %v1597, %v1597
  %v1602 = vsel %vm60, %v1598, 0.0
  %1603 = vadd.xlane.f32.xlu0 %v1602
  %v1604 = vpop.xlane.xlu0 %1603
  %v1605 = vsel %vm60, %v1599, 0.0
  %1606 = vadd.xlane.f32.xlu0 %v1605
  %v1607 = vpop.xlane.xlu0 %1606
  %v1608 = vsel %vm60, %v1600, 0.0
  %1609 = vadd.xlane.f32.xlu0 %v1608
  %v1610 = vpop.xlane.xlu0 %1609
  %v1611 = vsel %vm60, %v1601, 0.0
  %1612 = vadd.xlane.f32.xlu0 %v1611
  %v1613 = vpop.xlane.xlu0 %1612
  %v1614 = vmul.f32 %v1604, %v208
  %v1615 = vmul.f32 %v1607, %v208
  %v1616 = vmul.f32 %v1610, %v208
  %v1617 = vmul.f32 %v1613, %v208
  %v1618 = vadd.f32 %v1614, 1e-05
  %v1619 = vadd.f32 %v1615, 1e-05
  %v1620 = vadd.f32 %v1616, 1e-05
  %v1621 = vadd.f32 %v1617, 1e-05
  %v1622 = vrsqrt.pop %v1618
  %v1623 = vrsqrt.pop %v1619
  %v1624 = vrsqrt.pop %v1620
  %v1625 = vrsqrt.pop %v1621
  %v1626 = vmul.f32 %v1594, %v1622
  %v1627 = vmul.f32 %v1595, %v1623
  %v1628 = vmul.f32 %v1596, %v1624
  %v1629 = vmul.f32 %v1597, %v1625
  %v1631 = vlaneseq
  %v1632 = vshrl.u32 %v1631, 7
  %v1633 = vsub.s32 0, %v1632
  %v1634 = vrot.slane %v1576, %v1633
  %v1636 = vmul.f32 %v1626, %v1634
  %v1637 = vmul.f32 %v1627, %v1634
  %v1638 = vmul.f32 %v1628, %v1634
  %v1639 = vmul.f32 %v1629, %v1634
  %v1641 = vlaneseq
  %v1642 = vshrl.u32 %v1641, 7
  %v1643 = vsub.s32 0, %v1642
  %v1644 = vrot.slane %v1577, %v1643
  %v1646 = vadd.f32 %v1636, %v1644
  %v1647 = vadd.f32 %v1637, %v1644
  %v1648 = vadd.f32 %v1638, %v1644
  %v1649 = vadd.f32 %v1639, %v1644
  %v1650 = vld [vmem:[%s11] sm:$0xff]
  %v1651 = vld [vmem:[%s11 + $0x8] sm:$0xff]
  %v1652 = vld [vmem:[%s11 + $0x10] sm:$0xff]
  %v1653 = vld [vmem:[%s11 + $0x18] sm:$0xff]
  %v1654 = vld [vmem:[%s12] sm:$0x1]
  %v1656 = vlaneseq
  %v1657 = vshrl.u32 %v1656, 7
  %v1658 = vsub.s32 0, %v1657
  %v1659 = vrot.slane %v1654, %v1658
  %v1662 = vsel %vm60, %v1646, 0
  %v1665 = vsel %vm60, %v1647, 0
  %v1668 = vsel %vm60, %v1648, 0
  %v1671 = vsel %vm60, %v1649, 0
  %1673 = vmatprep.subr.mxu0 0.0
  %1674 = vmatpush1.msra.mxu0 0.0
  %1675 = vmatprep.subr.mxu0 0.0
  %1676 = vmatpush1.msra.mxu0 0.0
  %1677 = vmatprep.subr.mxu0 0.0
  %1678 = vmatpush1.msra.mxu0 0.0
  %1679 = vmatprep.subr.mxu0 0.0
  %1680 = vmatpush1.msra.mxu0 0.0
  %1681 = vmatprep.subr.mxu0 0.0
  %1682 = vmatpush1.msra.mxu0 0.0
  %1683 = vmatprep.subr.mxu0 0.0
  %1684 = vmatpush1.msra.mxu0 0.0
  %1685 = vmatprep.subr.mxu0 0.0
  %1686 = vmatpush1.msra.mxu0 0.0
  %1687 = vmatprep.subr.mxu0 0.0
  %1688 = vmatpush1.msra.mxu0 0.0
  %1689 = vmatprep.subr.mxu0 0.0
  %1690 = vmatpush1.msra.mxu0 0.0
  %1691 = vmatprep.subr.mxu0 0.0
  %1692 = vmatpush1.msra.mxu0 0.0
  %1693 = vmatprep.subr.mxu0 0.0
  %1694 = vmatpush1.msra.mxu0 0.0
  %1695 = vmatprep.subr.mxu0 0.0
  %1696 = vmatpush1.msra.mxu0 0.0
  %1697 = vmatprep.subr.mxu0 0.0
  %1698 = vmatpush1.msra.mxu0 %v1653
  %1699 = vmatprep.subr.mxu0 0.0
  %1700 = vmatpush1.msra.mxu0 %v1652
  %1701 = vmatprep.subr.mxu0 0.0
  %1702 = vmatpush1.msra.mxu0 %v1651
  %1703 = vmatprep.subr.mxu0 0.0
  %1704 = vmatpush1.msra.mxu0 %v1650
  %1705 = vmatprep.subr.mxu0 0.0
  %1706 = vmatpush2.msra.mxu0 0.0
  %1707 = vmatprep.subr.mxu0 0.0
  %1708 = vmatpush2.msra.mxu0 0.0
  %1709 = vmatprep.subr.mxu0 0.0
  %1710 = vmatpush2.msra.mxu0 0.0
  %1711 = vmatprep.subr.mxu0 0.0
  %1712 = vmatpush2.msra.mxu0 0.0
  %1713 = vmatprep.subr.mxu0 0.0
  %1714 = vmatpush2.msra.mxu0 0.0
  %1715 = vmatprep.subr.mxu0 0.0
  %1716 = vmatpush2.msra.mxu0 0.0
  %1717 = vmatprep.subr.mxu0 0.0
  %1718 = vmatpush2.msra.mxu0 0.0
  %1719 = vmatprep.subr.mxu0 0.0
  %1720 = vmatpush2.msra.mxu0 0.0
  %1721 = vmatprep.subr.mxu0 0.0
  %1722 = vmatpush2.msra.mxu0 0.0
  %1723 = vmatprep.subr.mxu0 0.0
  %1724 = vmatpush2.msra.mxu0 0.0
  %1725 = vmatprep.subr.mxu0 0.0
  %1726 = vmatpush2.msra.mxu0 0.0
  %1727 = vmatprep.subr.mxu0 0.0
  %1728 = vmatpush2.msra.mxu0 0.0
  %1729 = vmatprep.subr.mxu0 0.0
  %1730 = vmatpush2.msra.mxu0 0.0
  %1731 = vmatprep.subr.mxu0 0.0
  %1732 = vmatpush2.msra.mxu0 0.0
  %1733 = vmatprep.subr.mxu0 0.0
  %1734 = vmatpush2.msra.mxu0 0.0
  %1735 = vmatprep.subr.mxu0 0.0
  %1736 = vmatpush2.msra.mxu0 0.0
  %1737 = vmatprep.mubr.f32.mxu0 0.0
  %1738 = vmatmul.mubr.f32.gmra.mxu0 %v1662
  %v1739 = vpop.f32.mrf.mxu0
  %v1740 = vadd.f32 %v1659, %v1739
  %v1741 = vpop.f32.mrf.mxu0
  %1742 = vmatprep.mubr.f32.mxu0 0.0
  %1743 = vmatmul.mubr.f32.gmra.mxu0 %v1665
  %v1744 = vpop.f32.mrf.mxu0
  %v1745 = vadd.f32 %v1659, %v1744
  %v1746 = vpop.f32.mrf.mxu0
  %1747 = vmatprep.mubr.f32.mxu0 0.0
  %1748 = vmatmul.mubr.f32.gmra.mxu0 %v1668
  %v1749 = vpop.f32.mrf.mxu0
  %v1750 = vadd.f32 %v1659, %v1749
  %v1751 = vpop.f32.mrf.mxu0
  %1752 = vmatprep.mubr.f32.mxu0 0.0
  %1753 = vmatmul.mubr.f32.gmra.mxu0 %v1671
  %v1754 = vpop.f32.mrf.mxu0
  %v1755 = vadd.f32 %v1659, %v1754
  %v1756 = vpop.f32.mrf.mxu0
  %1757 = vdwg.mxu0
  %v1758 = vmul.f32 %v1740, %v1740
  %v1759 = vmul.f32 %v1745, %v1745
  %v1760 = vmul.f32 %v1750, %v1750
  %v1761 = vmul.f32 %v1755, %v1755
  %v1762 = vmul.f32 %v1740, %v1758
  %v1763 = vmul.f32 %v1745, %v1759
  %v1764 = vmul.f32 %v1750, %v1760
  %v1765 = vmul.f32 %v1755, %v1761
  %v1766 = vmul.f32 %v1762, 0.044715
  %v1767 = vmul.f32 %v1763, 0.044715
  %v1768 = vmul.f32 %v1764, 0.044715
  %v1769 = vmul.f32 %v1765, 0.044715
  %v1770 = vadd.f32 %v1740, %v1766
  %v1771 = vadd.f32 %v1745, %v1767
  %v1772 = vadd.f32 %v1750, %v1768
  %v1773 = vadd.f32 %v1755, %v1769
  %v1774 = vmul.f32 %v1770, 0.7978846
  %v1775 = vmul.f32 %v1771, 0.7978846
  %v1776 = vmul.f32 %v1772, 0.7978846
  %v1777 = vmul.f32 %v1773, 0.7978846
  %v1778 = vtanh.pop %v1774
  %v1779 = vtanh.pop %v1775
  %v1780 = vtanh.pop %v1776
  %v1781 = vtanh.pop %v1777
  %v1782 = vadd.f32 %v1778, 1.0
  %v1783 = vadd.f32 %v1779, 1.0
  %v1784 = vadd.f32 %v1780, 1.0
  %v1785 = vadd.f32 %v1781, 1.0
  %v1786 = vmul.f32 %v1782, 0.5
  %v1787 = vmul.f32 %v1783, 0.5
  %v1788 = vmul.f32 %v1784, 0.5
  %v1789 = vmul.f32 %v1785, 0.5
  %v1790 = vmul.f32 %v1740, %v1786
  %v1791 = vmul.f32 %v1745, %v1787
  %v1792 = vmul.f32 %v1750, %v1788
  %v1793 = vmul.f32 %v1755, %v1789
  %v1794 = vld [vmem:[%s13] sm:$0xff]
  %v1795 = vld [vmem:[%s13 + $0x8] sm:$0xff]
  %v1796 = vld [vmem:[%s13 + $0x10] sm:$0xff]
  %v1797 = vld [vmem:[%s13 + $0x18] sm:$0xff]
  %v1798 = vld [vmem:[%s13 + $0x20] sm:$0xff]
  %v1799 = vld [vmem:[%s13 + $0x28] sm:$0xff]
  %v1800 = vld [vmem:[%s13 + $0x30] sm:$0xff]
  %v1801 = vld [vmem:[%s13 + $0x38] sm:$0xff]
  %vm1802 = vcmask 523264
  %v1804 = vsel %vm1802, %v1790, 0
  %v1807 = vsel %vm1802, %v1791, 0
  %v1810 = vsel %vm1802, %v1792, 0
  %v1813 = vsel %vm1802, %v1793, 0
  %1815 = vmatprep.subr.mxu0 0.0
  %1816 = vmatpush1.msra.mxu0 0.0
  %1817 = vmatprep.subr.mxu0 0.0
  %1818 = vmatpush1.msra.mxu0 0.0
  %1819 = vmatprep.subr.mxu0 0.0
  %1820 = vmatpush1.msra.mxu0 0.0
  %1821 = vmatprep.subr.mxu0 0.0
  %1822 = vmatpush1.msra.mxu0 0.0
  %1823 = vmatprep.subr.mxu0 0.0
  %1824 = vmatpush1.msra.mxu0 0.0
  %1825 = vmatprep.subr.mxu0 0.0
  %1826 = vmatpush1.msra.mxu0 0.0
  %1827 = vmatprep.subr.mxu0 0.0
  %1828 = vmatpush1.msra.mxu0 0.0
  %1829 = vmatprep.subr.mxu0 0.0
  %1830 = vmatpush1.msra.mxu0 0.0
  %1831 = vmatprep.subr.mxu0 0.0
  %1832 = vmatpush1.msra.mxu0 %v1801
  %1833 = vmatprep.subr.mxu0 0.0
  %1834 = vmatpush1.msra.mxu0 %v1800
  %1835 = vmatprep.subr.mxu0 0.0
  %1836 = vmatpush1.msra.mxu0 %v1799
  %1837 = vmatprep.subr.mxu0 0.0
  %1838 = vmatpush1.msra.mxu0 %v1798
  %1839 = vmatprep.subr.mxu0 0.0
  %1840 = vmatpush1.msra.mxu0 %v1797
  %1841 = vmatprep.subr.mxu0 0.0
  %1842 = vmatpush1.msra.mxu0 %v1796
  %1843 = vmatprep.subr.mxu0 0.0
  %1844 = vmatpush1.msra.mxu0 %v1795
  %1845 = vmatprep.subr.mxu0 0.0
  %1846 = vmatpush1.msra.mxu0 %v1794
  %1847 = vmatprep.subr.mxu0 0.0
  %1848 = vmatpush2.msra.mxu0 0.0
  %1849 = vmatprep.subr.mxu0 0.0
  %1850 = vmatpush2.msra.mxu0 0.0
  %1851 = vmatprep.subr.mxu0 0.0
  %1852 = vmatpush2.msra.mxu0 0.0
  %1853 = vmatprep.subr.mxu0 0.0
  %1854 = vmatpush2.msra.mxu0 0.0
  %1855 = vmatprep.subr.mxu0 0.0
  %1856 = vmatpush2.msra.mxu0 0.0
  %1857 = vmatprep.subr.mxu0 0.0
  %1858 = vmatpush2.msra.mxu0 0.0
  %1859 = vmatprep.subr.mxu0 0.0
  %1860 = vmatpush2.msra.mxu0 0.0
  %1861 = vmatprep.subr.mxu0 0.0
  %1862 = vmatpush2.msra.mxu0 0.0
  %1863 = vmatprep.subr.mxu0 0.0
  %1864 = vmatpush2.msra.mxu0 0.0
  %1865 = vmatprep.subr.mxu0 0.0
  %1866 = vmatpush2.msra.mxu0 0.0
  %1867 = vmatprep.subr.mxu0 0.0
  %1868 = vmatpush2.msra.mxu0 0.0
  %1869 = vmatprep.subr.mxu0 0.0
  %1870 = vmatpush2.msra.mxu0 0.0
  %1871 = vmatprep.subr.mxu0 0.0
  %1872 = vmatpush2.msra.mxu0 0.0
  %1873 = vmatprep.subr.mxu0 0.0
  %1874 = vmatpush2.msra.mxu0 0.0
  %1875 = vmatprep.subr.mxu0 0.0
  %1876 = vmatpush2.msra.mxu0 0.0
  %1877 = vmatprep.subr.mxu0 0.0
  %1878 = vmatpush2.msra.mxu0 0.0
  %1879 = vmatprep.mubr.f32.mxu0 0.0
  %1880 = vmatmul.mubr.f32.gmra.mxu0 %v1804
  %v1881 = vpop.f32.mrf.mxu0
  %v1882 = vadd.f32 0.0, %v1881
  %v1883 = vpop.f32.mrf.mxu0
  %1884 = vmatprep.mubr.f32.mxu0 0.0
  %1885 = vmatmul.mubr.f32.gmra.mxu0 %v1807
  %v1886 = vpop.f32.mrf.mxu0
  %v1887 = vadd.f32 0.0, %v1886
  %v1888 = vpop.f32.mrf.mxu0
  %1889 = vmatprep.mubr.f32.mxu0 0.0
  %1890 = vmatmul.mubr.f32.gmra.mxu0 %v1810
  %v1891 = vpop.f32.mrf.mxu0
  %v1892 = vadd.f32 0.0, %v1891
  %v1893 = vpop.f32.mrf.mxu0
  %1894 = vmatprep.mubr.f32.mxu0 0.0
  %1895 = vmatmul.mubr.f32.gmra.mxu0 %v1813
  %v1896 = vpop.f32.mrf.mxu0
  %v1897 = vadd.f32 0.0, %v1896
  %v1898 = vpop.f32.mrf.mxu0
  %1899 = vdwg.mxu0
  %v1900 = vadd.f32 %v1572, %v1882
  %v1901 = vadd.f32 %v1573, %v1887
  %v1902 = vadd.f32 %v1574, %v1892
  %v1903 = vadd.f32 %v1575, %v1897
  %v1904 = vld [vmem:[%s14] sm:$0x1]
  %v1906 = vlaneseq
  %v1907 = vshrl.u32 %v1906, 7
  %v1908 = vsub.s32 0, %v1907
  %v1909 = vrot.slane %v1904, %v1908
  %v1911 = vadd.f32 %v1900, %v1909
  %v1912 = vadd.f32 %v1901, %v1909
  %v1913 = vadd.f32 %v1902, %v1909
  %v1914 = vadd.f32 %v1903, %v1909
  %s1915 = scalar_lea.vmem %s3, 1
  %v1916 = vld [vmem:[%s1915] sm:$0x1]
  %s1917 = scalar_lea.vmem %s4, 1
  %v1918 = vld [vmem:[%s1917] sm:$0x1]
  %v1919 = vsel %vm60, %v1911, 0.0
  %1920 = vadd.xlane.f32.xlu0 %v1919
  %v1921 = vpop.xlane.xlu0 %1920
  %v1922 = vsel %vm60, %v1912, 0.0
  %1923 = vadd.xlane.f32.xlu0 %v1922
  %v1924 = vpop.xlane.xlu0 %1923
  %v1925 = vsel %vm60, %v1913, 0.0
  %1926 = vadd.xlane.f32.xlu0 %v1925
  %v1927 = vpop.xlane.xlu0 %1926
  %v1928 = vsel %vm60, %v1914, 0.0
  %1929 = vadd.xlane.f32.xlu0 %v1928
  %v1930 = vpop.xlane.xlu0 %1929
  %v1931 = vmul.f32 %v1921, %v208
  %v1932 = vmul.f32 %v1924, %v208
  %v1933 = vmul.f32 %v1927, %v208
  %v1934 = vmul.f32 %v1930, %v208
  %v1935 = vsub.f32 %v1911, %v1931
  %v1936 = vsub.f32 %v1912, %v1932
  %v1937 = vsub.f32 %v1913, %v1933
  %v1938 = vsub.f32 %v1914, %v1934
  %v1939 = vmul.f32 %v1935, %v1935
  %v1940 = vmul.f32 %v1936, %v1936
  %v1941 = vmul.f32 %v1937, %v1937
  %v1942 = vmul.f32 %v1938, %v1938
  %v1943 = vsel %vm60, %v1939, 0.0
  %1944 = vadd.xlane.f32.xlu0 %v1943
  %v1945 = vpop.xlane.xlu0 %1944
  %v1946 = vsel %vm60, %v1940, 0.0
  %1947 = vadd.xlane.f32.xlu0 %v1946
  %v1948 = vpop.xlane.xlu0 %1947
  %v1949 = vsel %vm60, %v1941, 0.0
  %1950 = vadd.xlane.f32.xlu0 %v1949
  %v1951 = vpop.xlane.xlu0 %1950
  %v1952 = vsel %vm60, %v1942, 0.0
  %1953 = vadd.xlane.f32.xlu0 %v1952
  %v1954 = vpop.xlane.xlu0 %1953
  %v1955 = vmul.f32 %v1945, %v208
  %v1956 = vmul.f32 %v1948, %v208
  %v1957 = vmul.f32 %v1951, %v208
  %v1958 = vmul.f32 %v1954, %v208
  %v1959 = vadd.f32 %v1955, 1e-05
  %v1960 = vadd.f32 %v1956, 1e-05
  %v1961 = vadd.f32 %v1957, 1e-05
  %v1962 = vadd.f32 %v1958, 1e-05
  %v1963 = vrsqrt.pop %v1959
  %v1964 = vrsqrt.pop %v1960
  %v1965 = vrsqrt.pop %v1961
  %v1966 = vrsqrt.pop %v1962
  %v1967 = vmul.f32 %v1935, %v1963
  %v1968 = vmul.f32 %v1936, %v1964
  %v1969 = vmul.f32 %v1937, %v1965
  %v1970 = vmul.f32 %v1938, %v1966
  %v1972 = vlaneseq
  %v1973 = vshrl.u32 %v1972, 7
  %v1974 = vsub.s32 0, %v1973
  %v1975 = vrot.slane %v1916, %v1974
  %v1977 = vmul.f32 %v1967, %v1975
  %v1978 = vmul.f32 %v1968, %v1975
  %v1979 = vmul.f32 %v1969, %v1975
  %v1980 = vmul.f32 %v1970, %v1975
  %v1982 = vlaneseq
  %v1983 = vshrl.u32 %v1982, 7
  %v1984 = vsub.s32 0, %v1983
  %v1985 = vrot.slane %v1918, %v1984
  %v1987 = vadd.f32 %v1977, %v1985
  %v1988 = vadd.f32 %v1978, %v1985
  %v1989 = vadd.f32 %v1979, %v1985
  %v1990 = vadd.f32 %v1980, %v1985
  %s1991 = scalar_lea.vmem %s5, 32
  %v1992 = vld [vmem:[%s1991] sm:$0xff]
  %v1993 = vld [vmem:[%s1991 + $0x8] sm:$0xff]
  %v1994 = vld [vmem:[%s1991 + $0x10] sm:$0xff]
  %v1995 = vld [vmem:[%s1991 + $0x18] sm:$0xff]
  %s1996 = scalar_lea.vmem %s6, 1
  %v1997 = vld [vmem:[%s1996] sm:$0x1]
  %v1999 = vlaneseq
  %v2000 = vshrl.u32 %v1999, 7
  %v2001 = vsub.s32 0, %v2000
  %v2002 = vrot.slane %v1997, %v2001
  %v2005 = vsel %vm60, %v1987, 0
  %v2008 = vsel %vm60, %v1988, 0
  %v2011 = vsel %vm60, %v1989, 0
  %v2014 = vsel %vm60, %v1990, 0
  %2016 = vmatprep.subr.mxu0 0.0
  %2017 = vmatpush1.msra.mxu0 0.0
  %2018 = vmatprep.subr.mxu0 0.0
  %2019 = vmatpush1.msra.mxu0 0.0
  %2020 = vmatprep.subr.mxu0 0.0
  %2021 = vmatpush1.msra.mxu0 0.0
  %2022 = vmatprep.subr.mxu0 0.0
  %2023 = vmatpush1.msra.mxu0 0.0
  %2024 = vmatprep.subr.mxu0 0.0
  %2025 = vmatpush1.msra.mxu0 0.0
  %2026 = vmatprep.subr.mxu0 0.0
  %2027 = vmatpush1.msra.mxu0 0.0
  %2028 = vmatprep.subr.mxu0 0.0
  %2029 = vmatpush1.msra.mxu0 0.0
  %2030 = vmatprep.subr.mxu0 0.0
  %2031 = vmatpush1.msra.mxu0 0.0
  %2032 = vmatprep.subr.mxu0 0.0
  %2033 = vmatpush1.msra.mxu0 0.0
  %2034 = vmatprep.subr.mxu0 0.0
  %2035 = vmatpush1.msra.mxu0 0.0
  %2036 = vmatprep.subr.mxu0 0.0
  %2037 = vmatpush1.msra.mxu0 0.0
  %2038 = vmatprep.subr.mxu0 0.0
  %2039 = vmatpush1.msra.mxu0 0.0
  %2040 = vmatprep.subr.mxu0 0.0
  %2041 = vmatpush1.msra.mxu0 %v1995
  %2042 = vmatprep.subr.mxu0 0.0
  %2043 = vmatpush1.msra.mxu0 %v1994
  %2044 = vmatprep.subr.mxu0 0.0
  %2045 = vmatpush1.msra.mxu0 %v1993
  %2046 = vmatprep.subr.mxu0 0.0
  %2047 = vmatpush1.msra.mxu0 %v1992
  %2048 = vmatprep.subr.mxu0 0.0
  %2049 = vmatpush2.msra.mxu0 0.0
  %2050 = vmatprep.subr.mxu0 0.0
  %2051 = vmatpush2.msra.mxu0 0.0
  %2052 = vmatprep.subr.mxu0 0.0
  %2053 = vmatpush2.msra.mxu0 0.0
  %2054 = vmatprep.subr.mxu0 0.0
  %2055 = vmatpush2.msra.mxu0 0.0
  %2056 = vmatprep.subr.mxu0 0.0
  %2057 = vmatpush2.msra.mxu0 0.0
  %2058 = vmatprep.subr.mxu0 0.0
  %2059 = vmatpush2.msra.mxu0 0.0
  %2060 = vmatprep.subr.mxu0 0.0
  %2061 = vmatpush2.msra.mxu0 0.0
  %2062 = vmatprep.subr.mxu0 0.0
  %2063 = vmatpush2.msra.mxu0 0.0
  %2064 = vmatprep.subr.mxu0 0.0
  %2065 = vmatpush2.msra.mxu0 0.0
  %2066 = vmatprep.subr.mxu0 0.0
  %2067 = vmatpush2.msra.mxu0 0.0
  %2068 = vmatprep.subr.mxu0 0.0
  %2069 = vmatpush2.msra.mxu0 0.0
  %2070 = vmatprep.subr.mxu0 0.0
  %2071 = vmatpush2.msra.mxu0 0.0
  %2072 = vmatprep.subr.mxu0 0.0
  %2073 = vmatpush2.msra.mxu0 0.0
  %2074 = vmatprep.subr.mxu0 0.0
  %2075 = vmatpush2.msra.mxu0 0.0
  %2076 = vmatprep.subr.mxu0 0.0
  %2077 = vmatpush2.msra.mxu0 0.0
  %2078 = vmatprep.subr.mxu0 0.0
  %2079 = vmatpush2.msra.mxu0 0.0
  %2080 = vmatprep.mubr.f32.mxu0 0.0
  %2081 = vmatmul.mubr.f32.gmra.mxu0 %v2005
  %v2082 = vpop.f32.mrf.mxu0
  %v2083 = vadd.f32 %v2002, %v2082
  %v2084 = vpop.f32.mrf.mxu0
  %2085 = vmatprep.mubr.f32.mxu0 0.0
  %2086 = vmatmul.mubr.f32.gmra.mxu0 %v2008
  %v2087 = vpop.f32.mrf.mxu0
  %v2088 = vadd.f32 %v2002, %v2087
  %v2089 = vpop.f32.mrf.mxu0
  %2090 = vmatprep.mubr.f32.mxu0 0.0
  %2091 = vmatmul.mubr.f32.gmra.mxu0 %v2011
  %v2092 = vpop.f32.mrf.mxu0
  %v2093 = vadd.f32 %v2002, %v2092
  %v2094 = vpop.f32.mrf.mxu0
  %2095 = vmatprep.mubr.f32.mxu0 0.0
  %2096 = vmatmul.mubr.f32.gmra.mxu0 %v2014
  %v2097 = vpop.f32.mrf.mxu0
  %v2098 = vadd.f32 %v2002, %v2097
  %v2099 = vpop.f32.mrf.mxu0
  %2100 = vdwg.mxu0
  %2105 = vrot.lane.b32.xlu0 %v2083, 96
  %v2106 = vpop.permute.xlu0 %2105
  %2107 = vrot.lane.b32.xlu0 %v2088, 96
  %v2108 = vpop.permute.xlu0 %2107
  %2109 = vrot.lane.b32.xlu0 %v2093, 96
  %v2110 = vpop.permute.xlu0 %2109
  %2111 = vrot.lane.b32.xlu0 %v2098, 96
  %v2112 = vpop.permute.xlu0 %2111
  %v2113 = vsel %vm389, %v2083, 0
  %v2115 = vsel %vm389, %v2088, 0
  %v2117 = vsel %vm389, %v2093, 0
  %v2119 = vsel %vm389, %v2098, 0
  %v2121 = vsel %vm389, %v2106, 0
  %v2123 = vsel %vm389, %v2108, 0
  %v2125 = vsel %vm389, %v2110, 0
  %v2127 = vsel %vm389, %v2112, 0
  %2129 = vmatprep.subr.mxu0 0.0
  %2130 = vmatpush1.xpose.msra.mxu0 0.0
  %2131 = vmatprep.subr.mxu0 0.0
  %2132 = vmatpush1.xpose.msra.mxu0 0.0
  %2133 = vmatprep.subr.mxu0 0.0
  %2134 = vmatpush1.xpose.msra.mxu0 0.0
  %2135 = vmatprep.subr.mxu0 0.0
  %2136 = vmatpush1.xpose.msra.mxu0 0.0
  %2137 = vmatprep.subr.mxu0 0.0
  %2138 = vmatpush1.xpose.msra.mxu0 0.0
  %2139 = vmatprep.subr.mxu0 0.0
  %2140 = vmatpush1.xpose.msra.mxu0 0.0
  %2141 = vmatprep.subr.mxu0 0.0
  %2142 = vmatpush1.xpose.msra.mxu0 0.0
  %2143 = vmatprep.subr.mxu0 0.0
  %2144 = vmatpush1.xpose.msra.mxu0 0.0
  %2145 = vmatprep.subr.mxu0 0.0
  %2146 = vmatpush1.xpose.msra.mxu0 0.0
  %2147 = vmatprep.subr.mxu0 0.0
  %2148 = vmatpush1.xpose.msra.mxu0 0.0
  %2149 = vmatprep.subr.mxu0 0.0
  %2150 = vmatpush1.xpose.msra.mxu0 0.0
  %2151 = vmatprep.subr.mxu0 0.0
  %2152 = vmatpush1.xpose.msra.mxu0 0.0
  %2153 = vmatprep.subr.mxu0 0.0
  %2154 = vmatpush1.xpose.msra.mxu0 %v2127
  %2155 = vmatprep.subr.mxu0 0.0
  %2156 = vmatpush1.xpose.msra.mxu0 %v2125
  %2157 = vmatprep.subr.mxu0 0.0
  %2158 = vmatpush1.xpose.msra.mxu0 %v2123
  %2159 = vmatprep.subr.mxu0 0.0
  %2160 = vmatpush1.xpose.msra.mxu0 %v2121
  %2161 = vmatprep.subr.mxu0 0.0
  %2162 = vmatpush2.xpose.msra.mxu0 0.0
  %2163 = vmatprep.subr.mxu0 0.0
  %2164 = vmatpush2.xpose.msra.mxu0 0.0
  %2165 = vmatprep.subr.mxu0 0.0
  %2166 = vmatpush2.xpose.msra.mxu0 0.0
  %2167 = vmatprep.subr.mxu0 0.0
  %2168 = vmatpush2.xpose.msra.mxu0 0.0
  %2169 = vmatprep.subr.mxu0 0.0
  %2170 = vmatpush2.xpose.msra.mxu0 0.0
  %2171 = vmatprep.subr.mxu0 0.0
  %2172 = vmatpush2.xpose.msra.mxu0 0.0
  %2173 = vmatprep.subr.mxu0 0.0
  %2174 = vmatpush2.xpose.msra.mxu0 0.0
  %2175 = vmatprep.subr.mxu0 0.0
  %2176 = vmatpush2.xpose.msra.mxu0 0.0
  %2177 = vmatprep.subr.mxu0 0.0
  %2178 = vmatpush2.xpose.msra.mxu0 0.0
  %2179 = vmatprep.subr.mxu0 0.0
  %2180 = vmatpush2.xpose.msra.mxu0 0.0
  %2181 = vmatprep.subr.mxu0 0.0
  %2182 = vmatpush2.xpose.msra.mxu0 0.0
  %2183 = vmatprep.subr.mxu0 0.0
  %2184 = vmatpush2.xpose.msra.mxu0 0.0
  %2185 = vmatprep.subr.mxu0 0.0
  %2186 = vmatpush2.xpose.msra.mxu0 0.0
  %2187 = vmatprep.subr.mxu0 0.0
  %2188 = vmatpush2.xpose.msra.mxu0 0.0
  %2189 = vmatprep.subr.mxu0 0.0
  %2190 = vmatpush2.xpose.msra.mxu0 0.0
  %2191 = vmatprep.subr.mxu0 0.0
  %2192 = vmatpush2.xpose.msra.mxu0 0.0
  %2193 = vmatprep.mubr.f32.mxu0 0.0
  %2194 = vmatmul.mubr.f32.gmra.mxu0 %v2113
  %v2195 = vpop.f32.mrf.mxu0
  %v2196 = vadd.f32 %v190, %v2195
  %v2197 = vpop.f32.mrf.mxu0
  %2198 = vmatprep.mubr.f32.mxu0 0.0
  %2199 = vmatmul.mubr.f32.gmra.mxu0 %v2115
  %v2200 = vpop.f32.mrf.mxu0
  %v2201 = vadd.f32 %v191, %v2200
  %v2202 = vpop.f32.mrf.mxu0
  %2203 = vmatprep.mubr.f32.mxu0 0.0
  %2204 = vmatmul.mubr.f32.gmra.mxu0 %v2117
  %v2205 = vpop.f32.mrf.mxu0
  %v2206 = vadd.f32 %v192, %v2205
  %v2207 = vpop.f32.mrf.mxu0
  %2208 = vmatprep.mubr.f32.mxu0 0.0
  %2209 = vmatmul.mubr.f32.gmra.mxu0 %v2119
  %v2210 = vpop.f32.mrf.mxu0
  %v2211 = vadd.f32 %v193, %v2210
  %v2212 = vpop.f32.mrf.mxu0
  %2213 = vdwg.mxu0
  %v2214 = vsel %vm60, %v2196, -inf
  %2215 = vmax.xlane.f32.xlu0 %v2214
  %v2216 = vpop.xlane.xlu0 %2215
  %v2217 = vsel %vm60, %v2201, -inf
  %2218 = vmax.xlane.f32.xlu0 %v2217
  %v2219 = vpop.xlane.xlu0 %2218
  %v2220 = vsel %vm60, %v2206, -inf
  %2221 = vmax.xlane.f32.xlu0 %v2220
  %v2222 = vpop.xlane.xlu0 %2221
  %v2223 = vsel %vm60, %v2211, -inf
  %2224 = vmax.xlane.f32.xlu0 %v2223
  %v2225 = vpop.xlane.xlu0 %2224
  %v2226 = vsub.f32 %v2196, %v2216
  %v2227 = vsub.f32 %v2201, %v2219
  %v2228 = vsub.f32 %v2206, %v2222
  %v2229 = vsub.f32 %v2211, %v2225
  %v2230 = vmul.f32 %v2226, 1.442695
  %v2231 = vpow.pop %v2230
  %v2232 = vmul.f32 %v2227, 1.442695
  %v2233 = vpow.pop %v2232
  %v2234 = vmul.f32 %v2228, 1.442695
  %v2235 = vpow.pop %v2234
  %v2236 = vmul.f32 %v2229, 1.442695
  %v2237 = vpow.pop %v2236
  %v2238 = vsel %vm60, %v2231, 0.0
  %2239 = vadd.xlane.f32.xlu0 %v2238
  %v2240 = vpop.xlane.xlu0 %2239
  %v2241 = vsel %vm60, %v2233, 0.0
  %2242 = vadd.xlane.f32.xlu0 %v2241
  %v2243 = vpop.xlane.xlu0 %2242
  %v2244 = vsel %vm60, %v2235, 0.0
  %2245 = vadd.xlane.f32.xlu0 %v2244
  %v2246 = vpop.xlane.xlu0 %2245
  %v2247 = vsel %vm60, %v2237, 0.0
  %2248 = vadd.xlane.f32.xlu0 %v2247
  %v2249 = vpop.xlane.xlu0 %2248
  %v2250 = vrcp.pop %v2240
  %v2251 = vrcp.pop %v2243
  %v2252 = vrcp.pop %v2246
  %v2253 = vrcp.pop %v2249
  %v2254 = vmul.f32 %v2231, %v2250
  %v2255 = vmul.f32 %v2233, %v2251
  %v2256 = vmul.f32 %v2235, %v2252
  %v2257 = vmul.f32 %v2237, %v2253
  %2258 = vrot.lane.b32.xlu0 %v2083, 80
  %v2259 = vpop.permute.xlu0 %2258
  %2260 = vrot.lane.b32.xlu0 %v2088, 80
  %v2261 = vpop.permute.xlu0 %2260
  %2262 = vrot.lane.b32.xlu0 %v2093, 80
  %v2263 = vpop.permute.xlu0 %2262
  %2264 = vrot.lane.b32.xlu0 %v2098, 80
  %v2265 = vpop.permute.xlu0 %2264
  %v2271 = vsel %vm60, %v2254, 0
  %v2274 = vsel %vm60, %v2255, 0
  %v2277 = vsel %vm60, %v2256, 0
  %v2280 = vsel %vm60, %v2257, 0
  %2282 = vmatprep.subr.mxu0 0.0
  %2283 = vmatpush1.msra.mxu0 0.0
  %2284 = vmatprep.subr.mxu0 0.0
  %2285 = vmatpush1.msra.mxu0 0.0
  %2286 = vmatprep.subr.mxu0 0.0
  %2287 = vmatpush1.msra.mxu0 0.0
  %2288 = vmatprep.subr.mxu0 0.0
  %2289 = vmatpush1.msra.mxu0 0.0
  %2290 = vmatprep.subr.mxu0 0.0
  %2291 = vmatpush1.msra.mxu0 0.0
  %2292 = vmatprep.subr.mxu0 0.0
  %2293 = vmatpush1.msra.mxu0 0.0
  %2294 = vmatprep.subr.mxu0 0.0
  %2295 = vmatpush1.msra.mxu0 0.0
  %2296 = vmatprep.subr.mxu0 0.0
  %2297 = vmatpush1.msra.mxu0 0.0
  %2298 = vmatprep.subr.mxu0 0.0
  %2299 = vmatpush1.msra.mxu0 0.0
  %2300 = vmatprep.subr.mxu0 0.0
  %2301 = vmatpush1.msra.mxu0 0.0
  %2302 = vmatprep.subr.mxu0 0.0
  %2303 = vmatpush1.msra.mxu0 0.0
  %2304 = vmatprep.subr.mxu0 0.0
  %2305 = vmatpush1.msra.mxu0 0.0
  %2306 = vmatprep.subr.mxu0 0.0
  %2307 = vmatpush1.msra.mxu0 %v2265
  %2308 = vmatprep.subr.mxu0 0.0
  %2309 = vmatpush1.msra.mxu0 %v2263
  %2310 = vmatprep.subr.mxu0 0.0
  %2311 = vmatpush1.msra.mxu0 %v2261
  %2312 = vmatprep.subr.mxu0 0.0
  %2313 = vmatpush1.msra.mxu0 %v2259
  %2314 = vmatprep.subr.mxu0 0.0
  %2315 = vmatpush2.msra.mxu0 0.0
  %2316 = vmatprep.subr.mxu0 0.0
  %2317 = vmatpush2.msra.mxu0 0.0
  %2318 = vmatprep.subr.mxu0 0.0
  %2319 = vmatpush2.msra.mxu0 0.0
  %2320 = vmatprep.subr.mxu0 0.0
  %2321 = vmatpush2.msra.mxu0 0.0
  %2322 = vmatprep.subr.mxu0 0.0
  %2323 = vmatpush2.msra.mxu0 0.0
  %2324 = vmatprep.subr.mxu0 0.0
  %2325 = vmatpush2.msra.mxu0 0.0
  %2326 = vmatprep.subr.mxu0 0.0
  %2327 = vmatpush2.msra.mxu0 0.0
  %2328 = vmatprep.subr.mxu0 0.0
  %2329 = vmatpush2.msra.mxu0 0.0
  %2330 = vmatprep.subr.mxu0 0.0
  %2331 = vmatpush2.msra.mxu0 0.0
  %2332 = vmatprep.subr.mxu0 0.0
  %2333 = vmatpush2.msra.mxu0 0.0
  %2334 = vmatprep.subr.mxu0 0.0
  %2335 = vmatpush2.msra.mxu0 0.0
  %2336 = vmatprep.subr.mxu0 0.0
  %2337 = vmatpush2.msra.mxu0 0.0
  %2338 = vmatprep.subr.mxu0 0.0
  %2339 = vmatpush2.msra.mxu0 0.0
  %2340 = vmatprep.subr.mxu0 0.0
  %2341 = vmatpush2.msra.mxu0 0.0
  %2342 = vmatprep.subr.mxu0 0.0
  %2343 = vmatpush2.msra.mxu0 0.0
  %2344 = vmatprep.subr.mxu0 0.0
  %2345 = vmatpush2.msra.mxu0 0.0
  %2346 = vmatprep.mubr.f32.mxu0 0.0
  %2347 = vmatmul.mubr.f32.gmra.mxu0 %v2271
  %v2348 = vpop.f32.mrf.mxu0
  %v2349 = vadd.f32 0.0, %v2348
  %v2350 = vpop.f32.mrf.mxu0
  %2351 = vmatprep.mubr.f32.mxu0 0.0
  %2352 = vmatmul.mubr.f32.gmra.mxu0 %v2274
  %v2353 = vpop.f32.mrf.mxu0
  %v2354 = vadd.f32 0.0, %v2353
  %v2355 = vpop.f32.mrf.mxu0
  %2356 = vmatprep.mubr.f32.mxu0 0.0
  %2357 = vmatmul.mubr.f32.gmra.mxu0 %v2277
  %v2358 = vpop.f32.mrf.mxu0
  %v2359 = vadd.f32 0.0, %v2358
  %v2360 = vpop.f32.mrf.mxu0
  %2361 = vmatprep.mubr.f32.mxu0 0.0
  %2362 = vmatmul.mubr.f32.gmra.mxu0 %v2280
  %v2363 = vpop.f32.mrf.mxu0
  %v2364 = vadd.f32 0.0, %v2363
  %v2365 = vpop.f32.mrf.mxu0
  %2366 = vdwg.mxu0
  %2367 = vrot.lane.b32.xlu0 %v2083, 120
  %v2368 = vpop.permute.xlu0 %2367
  %2369 = vrot.lane.b32.xlu0 %v2088, 120
  %v2370 = vpop.permute.xlu0 %2369
  %2371 = vrot.lane.b32.xlu0 %v2093, 120
  %v2372 = vpop.permute.xlu0 %2371
  %2373 = vrot.lane.b32.xlu0 %v2098, 120
  %v2374 = vpop.permute.xlu0 %2373
  %v2375 = vsel %vm389, %v2368, 0
  %v2377 = vsel %vm389, %v2370, 0
  %v2379 = vsel %vm389, %v2372, 0
  %v2381 = vsel %vm389, %v2374, 0
  %2383 = vmatprep.subr.mxu0 0.0
  %2384 = vmatpush1.xpose.msra.mxu0 0.0
  %2385 = vmatprep.subr.mxu0 0.0
  %2386 = vmatpush1.xpose.msra.mxu0 0.0
  %2387 = vmatprep.subr.mxu0 0.0
  %2388 = vmatpush1.xpose.msra.mxu0 0.0
  %2389 = vmatprep.subr.mxu0 0.0
  %2390 = vmatpush1.xpose.msra.mxu0 0.0
  %2391 = vmatprep.subr.mxu0 0.0
  %2392 = vmatpush1.xpose.msra.mxu0 0.0
  %2393 = vmatprep.subr.mxu0 0.0
  %2394 = vmatpush1.xpose.msra.mxu0 0.0
  %2395 = vmatprep.subr.mxu0 0.0
  %2396 = vmatpush1.xpose.msra.mxu0 0.0
  %2397 = vmatprep.subr.mxu0 0.0
  %2398 = vmatpush1.xpose.msra.mxu0 0.0
  %2399 = vmatprep.subr.mxu0 0.0
  %2400 = vmatpush1.xpose.msra.mxu0 0.0
  %2401 = vmatprep.subr.mxu0 0.0
  %2402 = vmatpush1.xpose.msra.mxu0 0.0
  %2403 = vmatprep.subr.mxu0 0.0
  %2404 = vmatpush1.xpose.msra.mxu0 0.0
  %2405 = vmatprep.subr.mxu0 0.0
  %2406 = vmatpush1.xpose.msra.mxu0 0.0
  %2407 = vmatprep.subr.mxu0 0.0
  %2408 = vmatpush1.xpose.msra.mxu0 %v2127
  %2409 = vmatprep.subr.mxu0 0.0
  %2410 = vmatpush1.xpose.msra.mxu0 %v2125
  %2411 = vmatprep.subr.mxu0 0.0
  %2412 = vmatpush1.xpose.msra.mxu0 %v2123
  %2413 = vmatprep.subr.mxu0 0.0
  %2414 = vmatpush1.xpose.msra.mxu0 %v2121
  %2415 = vmatprep.subr.mxu0 0.0
  %2416 = vmatpush2.xpose.msra.mxu0 0.0
  %2417 = vmatprep.subr.mxu0 0.0
  %2418 = vmatpush2.xpose.msra.mxu0 0.0
  %2419 = vmatprep.subr.mxu0 0.0
  %2420 = vmatpush2.xpose.msra.mxu0 0.0
  %2421 = vmatprep.subr.mxu0 0.0
  %2422 = vmatpush2.xpose.msra.mxu0 0.0
  %2423 = vmatprep.subr.mxu0 0.0
  %2424 = vmatpush2.xpose.msra.mxu0 0.0
  %2425 = vmatprep.subr.mxu0 0.0
  %2426 = vmatpush2.xpose.msra.mxu0 0.0
  %2427 = vmatprep.subr.mxu0 0.0
  %2428 = vmatpush2.xpose.msra.mxu0 0.0
  %2429 = vmatprep.subr.mxu0 0.0
  %2430 = vmatpush2.xpose.msra.mxu0 0.0
  %2431 = vmatprep.subr.mxu0 0.0
  %2432 = vmatpush2.xpose.msra.mxu0 0.0
  %2433 = vmatprep.subr.mxu0 0.0
  %2434 = vmatpush2.xpose.msra.mxu0 0.0
  %2435 = vmatprep.subr.mxu0 0.0
  %2436 = vmatpush2.xpose.msra.mxu0 0.0
  %2437 = vmatprep.subr.mxu0 0.0
  %2438 = vmatpush2.xpose.msra.mxu0 0.0
  %2439 = vmatprep.subr.mxu0 0.0
  %2440 = vmatpush2.xpose.msra.mxu0 0.0
  %2441 = vmatprep.subr.mxu0 0.0
  %2442 = vmatpush2.xpose.msra.mxu0 0.0
  %2443 = vmatprep.subr.mxu0 0.0
  %2444 = vmatpush2.xpose.msra.mxu0 0.0
  %2445 = vmatprep.subr.mxu0 0.0
  %2446 = vmatpush2.xpose.msra.mxu0 0.0
  %2447 = vmatprep.mubr.f32.mxu0 0.0
  %2448 = vmatmul.mubr.f32.gmra.mxu0 %v2375
  %v2449 = vpop.f32.mrf.mxu0
  %v2450 = vadd.f32 %v190, %v2449
  %v2451 = vpop.f32.mrf.mxu0
  %2452 = vmatprep.mubr.f32.mxu0 0.0
  %2453 = vmatmul.mubr.f32.gmra.mxu0 %v2377
  %v2454 = vpop.f32.mrf.mxu0
  %v2455 = vadd.f32 %v191, %v2454
  %v2456 = vpop.f32.mrf.mxu0
  %2457 = vmatprep.mubr.f32.mxu0 0.0
  %2458 = vmatmul.mubr.f32.gmra.mxu0 %v2379
  %v2459 = vpop.f32.mrf.mxu0
  %v2460 = vadd.f32 %v192, %v2459
  %v2461 = vpop.f32.mrf.mxu0
  %2462 = vmatprep.mubr.f32.mxu0 0.0
  %2463 = vmatmul.mubr.f32.gmra.mxu0 %v2381
  %v2464 = vpop.f32.mrf.mxu0
  %v2465 = vadd.f32 %v193, %v2464
  %v2466 = vpop.f32.mrf.mxu0
  %2467 = vdwg.mxu0
  %v2468 = vsel %vm60, %v2450, -inf
  %2469 = vmax.xlane.f32.xlu0 %v2468
  %v2470 = vpop.xlane.xlu0 %2469
  %v2471 = vsel %vm60, %v2455, -inf
  %2472 = vmax.xlane.f32.xlu0 %v2471
  %v2473 = vpop.xlane.xlu0 %2472
  %v2474 = vsel %vm60, %v2460, -inf
  %2475 = vmax.xlane.f32.xlu0 %v2474
  %v2476 = vpop.xlane.xlu0 %2475
  %v2477 = vsel %vm60, %v2465, -inf
  %2478 = vmax.xlane.f32.xlu0 %v2477
  %v2479 = vpop.xlane.xlu0 %2478
  %v2480 = vsub.f32 %v2450, %v2470
  %v2481 = vsub.f32 %v2455, %v2473
  %v2482 = vsub.f32 %v2460, %v2476
  %v2483 = vsub.f32 %v2465, %v2479
  %v2484 = vmul.f32 %v2480, 1.442695
  %v2485 = vpow.pop %v2484
  %v2486 = vmul.f32 %v2481, 1.442695
  %v2487 = vpow.pop %v2486
  %v2488 = vmul.f32 %v2482, 1.442695
  %v2489 = vpow.pop %v2488
  %v2490 = vmul.f32 %v2483, 1.442695
  %v2491 = vpow.pop %v2490
  %v2492 = vsel %vm60, %v2485, 0.0
  %2493 = vadd.xlane.f32.xlu0 %v2492
  %v2494 = vpop.xlane.xlu0 %2493
  %v2495 = vsel %vm60, %v2487, 0.0
  %2496 = vadd.xlane.f32.xlu0 %v2495
  %v2497 = vpop.xlane.xlu0 %2496
  %v2498 = vsel %vm60, %v2489, 0.0
  %2499 = vadd.xlane.f32.xlu0 %v2498
  %v2500 = vpop.xlane.xlu0 %2499
  %v2501 = vsel %vm60, %v2491, 0.0
  %2502 = vadd.xlane.f32.xlu0 %v2501
  %v2503 = vpop.xlane.xlu0 %2502
  %v2504 = vrcp.pop %v2494
  %v2505 = vrcp.pop %v2497
  %v2506 = vrcp.pop %v2500
  %v2507 = vrcp.pop %v2503
  %v2508 = vmul.f32 %v2485, %v2504
  %v2509 = vmul.f32 %v2487, %v2505
  %v2510 = vmul.f32 %v2489, %v2506
  %v2511 = vmul.f32 %v2491, %v2507
  %v2513 = vsel %vm60, %v2508, 0
  %v2516 = vsel %vm60, %v2509, 0
  %v2519 = vsel %vm60, %v2510, 0
  %v2522 = vsel %vm60, %v2511, 0
  %2524 = vmatprep.subr.mxu0 0.0
  %2525 = vmatpush1.msra.mxu0 0.0
  %2526 = vmatprep.subr.mxu0 0.0
  %2527 = vmatpush1.msra.mxu0 0.0
  %2528 = vmatprep.subr.mxu0 0.0
  %2529 = vmatpush1.msra.mxu0 0.0
  %2530 = vmatprep.subr.mxu0 0.0
  %2531 = vmatpush1.msra.mxu0 0.0
  %2532 = vmatprep.subr.mxu0 0.0
  %2533 = vmatpush1.msra.mxu0 0.0
  %2534 = vmatprep.subr.mxu0 0.0
  %2535 = vmatpush1.msra.mxu0 0.0
  %2536 = vmatprep.subr.mxu0 0.0
  %2537 = vmatpush1.msra.mxu0 0.0
  %2538 = vmatprep.subr.mxu0 0.0
  %2539 = vmatpush1.msra.mxu0 0.0
  %2540 = vmatprep.subr.mxu0 0.0
  %2541 = vmatpush1.msra.mxu0 0.0
  %2542 = vmatprep.subr.mxu0 0.0
  %2543 = vmatpush1.msra.mxu0 0.0
  %2544 = vmatprep.subr.mxu0 0.0
  %2545 = vmatpush1.msra.mxu0 0.0
  %2546 = vmatprep.subr.mxu0 0.0
  %2547 = vmatpush1.msra.mxu0 0.0
  %2548 = vmatprep.subr.mxu0 0.0
  %2549 = vmatpush1.msra.mxu0 %v2265
  %2550 = vmatprep.subr.mxu0 0.0
  %2551 = vmatpush1.msra.mxu0 %v2263
  %2552 = vmatprep.subr.mxu0 0.0
  %2553 = vmatpush1.msra.mxu0 %v2261
  %2554 = vmatprep.subr.mxu0 0.0
  %2555 = vmatpush1.msra.mxu0 %v2259
  %2556 = vmatprep.subr.mxu0 0.0
  %2557 = vmatpush2.msra.mxu0 0.0
  %2558 = vmatprep.subr.mxu0 0.0
  %2559 = vmatpush2.msra.mxu0 0.0
  %2560 = vmatprep.subr.mxu0 0.0
  %2561 = vmatpush2.msra.mxu0 0.0
  %2562 = vmatprep.subr.mxu0 0.0
  %2563 = vmatpush2.msra.mxu0 0.0
  %2564 = vmatprep.subr.mxu0 0.0
  %2565 = vmatpush2.msra.mxu0 0.0
  %2566 = vmatprep.subr.mxu0 0.0
  %2567 = vmatpush2.msra.mxu0 0.0
  %2568 = vmatprep.subr.mxu0 0.0
  %2569 = vmatpush2.msra.mxu0 0.0
  %2570 = vmatprep.subr.mxu0 0.0
  %2571 = vmatpush2.msra.mxu0 0.0
  %2572 = vmatprep.subr.mxu0 0.0
  %2573 = vmatpush2.msra.mxu0 0.0
  %2574 = vmatprep.subr.mxu0 0.0
  %2575 = vmatpush2.msra.mxu0 0.0
  %2576 = vmatprep.subr.mxu0 0.0
  %2577 = vmatpush2.msra.mxu0 0.0
  %2578 = vmatprep.subr.mxu0 0.0
  %2579 = vmatpush2.msra.mxu0 0.0
  %2580 = vmatprep.subr.mxu0 0.0
  %2581 = vmatpush2.msra.mxu0 0.0
  %2582 = vmatprep.subr.mxu0 0.0
  %2583 = vmatpush2.msra.mxu0 0.0
  %2584 = vmatprep.subr.mxu0 0.0
  %2585 = vmatpush2.msra.mxu0 0.0
  %2586 = vmatprep.subr.mxu0 0.0
  %2587 = vmatpush2.msra.mxu0 0.0
  %2588 = vmatprep.mubr.f32.mxu0 0.0
  %2589 = vmatmul.mubr.f32.gmra.mxu0 %v2513
  %v2590 = vpop.f32.mrf.mxu0
  %v2591 = vadd.f32 0.0, %v2590
  %v2592 = vpop.f32.mrf.mxu0
  %2593 = vmatprep.mubr.f32.mxu0 0.0
  %2594 = vmatmul.mubr.f32.gmra.mxu0 %v2516
  %v2595 = vpop.f32.mrf.mxu0
  %v2596 = vadd.f32 0.0, %v2595
  %v2597 = vpop.f32.mrf.mxu0
  %2598 = vmatprep.mubr.f32.mxu0 0.0
  %2599 = vmatmul.mubr.f32.gmra.mxu0 %v2519
  %v2600 = vpop.f32.mrf.mxu0
  %v2601 = vadd.f32 0.0, %v2600
  %v2602 = vpop.f32.mrf.mxu0
  %2603 = vmatprep.mubr.f32.mxu0 0.0
  %2604 = vmatmul.mubr.f32.gmra.mxu0 %v2522
  %v2605 = vpop.f32.mrf.mxu0
  %v2606 = vadd.f32 0.0, %v2605
  %v2607 = vpop.f32.mrf.mxu0
  %2608 = vdwg.mxu0
  %2609 = vrot.lane.b32.xlu0 %v2083, 112
  %v2610 = vpop.permute.xlu0 %2609
  %2611 = vrot.lane.b32.xlu0 %v2088, 112
  %v2612 = vpop.permute.xlu0 %2611
  %2613 = vrot.lane.b32.xlu0 %v2093, 112
  %v2614 = vpop.permute.xlu0 %2613
  %2615 = vrot.lane.b32.xlu0 %v2098, 112
  %v2616 = vpop.permute.xlu0 %2615
  %2617 = vrot.lane.b32.xlu0 %v2083, 88
  %v2618 = vpop.permute.xlu0 %2617
  %2619 = vrot.lane.b32.xlu0 %v2088, 88
  %v2620 = vpop.permute.xlu0 %2619
  %2621 = vrot.lane.b32.xlu0 %v2093, 88
  %v2622 = vpop.permute.xlu0 %2621
  %2623 = vrot.lane.b32.xlu0 %v2098, 88
  %v2624 = vpop.permute.xlu0 %2623
  %v2625 = vsel %vm389, %v2610, 0
  %v2627 = vsel %vm389, %v2612, 0
  %v2629 = vsel %vm389, %v2614, 0
  %v2631 = vsel %vm389, %v2616, 0
  %v2633 = vsel %vm389, %v2618, 0
  %v2635 = vsel %vm389, %v2620, 0
  %v2637 = vsel %vm389, %v2622, 0
  %v2639 = vsel %vm389, %v2624, 0
  %2641 = vmatprep.subr.mxu0 0.0
  %2642 = vmatpush1.xpose.msra.mxu0 0.0
  %2643 = vmatprep.subr.mxu0 0.0
  %2644 = vmatpush1.xpose.msra.mxu0 0.0
  %2645 = vmatprep.subr.mxu0 0.0
  %2646 = vmatpush1.xpose.msra.mxu0 0.0
  %2647 = vmatprep.subr.mxu0 0.0
  %2648 = vmatpush1.xpose.msra.mxu0 0.0
  %2649 = vmatprep.subr.mxu0 0.0
  %2650 = vmatpush1.xpose.msra.mxu0 0.0
  %2651 = vmatprep.subr.mxu0 0.0
  %2652 = vmatpush1.xpose.msra.mxu0 0.0
  %2653 = vmatprep.subr.mxu0 0.0
  %2654 = vmatpush1.xpose.msra.mxu0 0.0
  %2655 = vmatprep.subr.mxu0 0.0
  %2656 = vmatpush1.xpose.msra.mxu0 0.0
  %2657 = vmatprep.subr.mxu0 0.0
  %2658 = vmatpush1.xpose.msra.mxu0 0.0
  %2659 = vmatprep.subr.mxu0 0.0
  %2660 = vmatpush1.xpose.msra.mxu0 0.0
  %2661 = vmatprep.subr.mxu0 0.0
  %2662 = vmatpush1.xpose.msra.mxu0 0.0
  %2663 = vmatprep.subr.mxu0 0.0
  %2664 = vmatpush1.xpose.msra.mxu0 0.0
  %2665 = vmatprep.subr.mxu0 0.0
  %2666 = vmatpush1.xpose.msra.mxu0 %v2639
  %2667 = vmatprep.subr.mxu0 0.0
  %2668 = vmatpush1.xpose.msra.mxu0 %v2637
  %2669 = vmatprep.subr.mxu0 0.0
  %2670 = vmatpush1.xpose.msra.mxu0 %v2635
  %2671 = vmatprep.subr.mxu0 0.0
  %2672 = vmatpush1.xpose.msra.mxu0 %v2633
  %2673 = vmatprep.subr.mxu0 0.0
  %2674 = vmatpush2.xpose.msra.mxu0 0.0
  %2675 = vmatprep.subr.mxu0 0.0
  %2676 = vmatpush2.xpose.msra.mxu0 0.0
  %2677 = vmatprep.subr.mxu0 0.0
  %2678 = vmatpush2.xpose.msra.mxu0 0.0
  %2679 = vmatprep.subr.mxu0 0.0
  %2680 = vmatpush2.xpose.msra.mxu0 0.0
  %2681 = vmatprep.subr.mxu0 0.0
  %2682 = vmatpush2.xpose.msra.mxu0 0.0
  %2683 = vmatprep.subr.mxu0 0.0
  %2684 = vmatpush2.xpose.msra.mxu0 0.0
  %2685 = vmatprep.subr.mxu0 0.0
  %2686 = vmatpush2.xpose.msra.mxu0 0.0
  %2687 = vmatprep.subr.mxu0 0.0
  %2688 = vmatpush2.xpose.msra.mxu0 0.0
  %2689 = vmatprep.subr.mxu0 0.0
  %2690 = vmatpush2.xpose.msra.mxu0 0.0
  %2691 = vmatprep.subr.mxu0 0.0
  %2692 = vmatpush2.xpose.msra.mxu0 0.0
  %2693 = vmatprep.subr.mxu0 0.0
  %2694 = vmatpush2.xpose.msra.mxu0 0.0
  %2695 = vmatprep.subr.mxu0 0.0
  %2696 = vmatpush2.xpose.msra.mxu0 0.0
  %2697 = vmatprep.subr.mxu0 0.0
  %2698 = vmatpush2.xpose.msra.mxu0 0.0
  %2699 = vmatprep.subr.mxu0 0.0
  %2700 = vmatpush2.xpose.msra.mxu0 0.0
  %2701 = vmatprep.subr.mxu0 0.0
  %2702 = vmatpush2.xpose.msra.mxu0 0.0
  %2703 = vmatprep.subr.mxu0 0.0
  %2704 = vmatpush2.xpose.msra.mxu0 0.0
  %2705 = vmatprep.mubr.f32.mxu0 0.0
  %2706 = vmatmul.mubr.f32.gmra.mxu0 %v2625
  %v2707 = vpop.f32.mrf.mxu0
  %v2708 = vadd.f32 %v190, %v2707
  %v2709 = vpop.f32.mrf.mxu0
  %2710 = vmatprep.mubr.f32.mxu0 0.0
  %2711 = vmatmul.mubr.f32.gmra.mxu0 %v2627
  %v2712 = vpop.f32.mrf.mxu0
  %v2713 = vadd.f32 %v191, %v2712
  %v2714 = vpop.f32.mrf.mxu0
  %2715 = vmatprep.mubr.f32.mxu0 0.0
  %2716 = vmatmul.mubr.f32.gmra.mxu0 %v2629
  %v2717 = vpop.f32.mrf.mxu0
  %v2718 = vadd.f32 %v192, %v2717
  %v2719 = vpop.f32.mrf.mxu0
  %2720 = vmatprep.mubr.f32.mxu0 0.0
  %2721 = vmatmul.mubr.f32.gmra.mxu0 %v2631
  %v2722 = vpop.f32.mrf.mxu0
  %v2723 = vadd.f32 %v193, %v2722
  %v2724 = vpop.f32.mrf.mxu0
  %2725 = vdwg.mxu0
  %v2726 = vsel %vm60, %v2708, -inf
  %2727 = vmax.xlane.f32.xlu0 %v2726
  %v2728 = vpop.xlane.xlu0 %2727
  %v2729 = vsel %vm60, %v2713, -inf
  %2730 = vmax.xlane.f32.xlu0 %v2729
  %v2731 = vpop.xlane.xlu0 %2730
  %v2732 = vsel %vm60, %v2718, -inf
  %2733 = vmax.xlane.f32.xlu0 %v2732
  %v2734 = vpop.xlane.xlu0 %2733
  %v2735 = vsel %vm60, %v2723, -inf
  %2736 = vmax.xlane.f32.xlu0 %v2735
  %v2737 = vpop.xlane.xlu0 %2736
  %v2738 = vsub.f32 %v2708, %v2728
  %v2739 = vsub.f32 %v2713, %v2731
  %v2740 = vsub.f32 %v2718, %v2734
  %v2741 = vsub.f32 %v2723, %v2737
  %v2742 = vmul.f32 %v2738, 1.442695
  %v2743 = vpow.pop %v2742
  %v2744 = vmul.f32 %v2739, 1.442695
  %v2745 = vpow.pop %v2744
  %v2746 = vmul.f32 %v2740, 1.442695
  %v2747 = vpow.pop %v2746
  %v2748 = vmul.f32 %v2741, 1.442695
  %v2749 = vpow.pop %v2748
  %v2750 = vsel %vm60, %v2743, 0.0
  %2751 = vadd.xlane.f32.xlu0 %v2750
  %v2752 = vpop.xlane.xlu0 %2751
  %v2753 = vsel %vm60, %v2745, 0.0
  %2754 = vadd.xlane.f32.xlu0 %v2753
  %v2755 = vpop.xlane.xlu0 %2754
  %v2756 = vsel %vm60, %v2747, 0.0
  %2757 = vadd.xlane.f32.xlu0 %v2756
  %v2758 = vpop.xlane.xlu0 %2757
  %v2759 = vsel %vm60, %v2749, 0.0
  %2760 = vadd.xlane.f32.xlu0 %v2759
  %v2761 = vpop.xlane.xlu0 %2760
  %v2762 = vrcp.pop %v2752
  %v2763 = vrcp.pop %v2755
  %v2764 = vrcp.pop %v2758
  %v2765 = vrcp.pop %v2761
  %v2766 = vmul.f32 %v2743, %v2762
  %v2767 = vmul.f32 %v2745, %v2763
  %v2768 = vmul.f32 %v2747, %v2764
  %v2769 = vmul.f32 %v2749, %v2765
  %2770 = vrot.lane.b32.xlu0 %v2083, 72
  %v2771 = vpop.permute.xlu0 %2770
  %2772 = vrot.lane.b32.xlu0 %v2088, 72
  %v2773 = vpop.permute.xlu0 %2772
  %2774 = vrot.lane.b32.xlu0 %v2093, 72
  %v2775 = vpop.permute.xlu0 %2774
  %2776 = vrot.lane.b32.xlu0 %v2098, 72
  %v2777 = vpop.permute.xlu0 %2776
  %v2783 = vsel %vm60, %v2766, 0
  %v2786 = vsel %vm60, %v2767, 0
  %v2789 = vsel %vm60, %v2768, 0
  %v2792 = vsel %vm60, %v2769, 0
  %2794 = vmatprep.subr.mxu0 0.0
  %2795 = vmatpush1.msra.mxu0 0.0
  %2796 = vmatprep.subr.mxu0 0.0
  %2797 = vmatpush1.msra.mxu0 0.0
  %2798 = vmatprep.subr.mxu0 0.0
  %2799 = vmatpush1.msra.mxu0 0.0
  %2800 = vmatprep.subr.mxu0 0.0
  %2801 = vmatpush1.msra.mxu0 0.0
  %2802 = vmatprep.subr.mxu0 0.0
  %2803 = vmatpush1.msra.mxu0 0.0
  %2804 = vmatprep.subr.mxu0 0.0
  %2805 = vmatpush1.msra.mxu0 0.0
  %2806 = vmatprep.subr.mxu0 0.0
  %2807 = vmatpush1.msra.mxu0 0.0
  %2808 = vmatprep.subr.mxu0 0.0
  %2809 = vmatpush1.msra.mxu0 0.0
  %2810 = vmatprep.subr.mxu0 0.0
  %2811 = vmatpush1.msra.mxu0 0.0
  %2812 = vmatprep.subr.mxu0 0.0
  %2813 = vmatpush1.msra.mxu0 0.0
  %2814 = vmatprep.subr.mxu0 0.0
  %2815 = vmatpush1.msra.mxu0 0.0
  %2816 = vmatprep.subr.mxu0 0.0
  %2817 = vmatpush1.msra.mxu0 0.0
  %2818 = vmatprep.subr.mxu0 0.0
  %2819 = vmatpush1.msra.mxu0 %v2777
  %2820 = vmatprep.subr.mxu0 0.0
  %2821 = vmatpush1.msra.mxu0 %v2775
  %2822 = vmatprep.subr.mxu0 0.0
  %2823 = vmatpush1.msra.mxu0 %v2773
  %2824 = vmatprep.subr.mxu0 0.0
  %2825 = vmatpush1.msra.mxu0 %v2771
  %2826 = vmatprep.subr.mxu0 0.0
  %2827 = vmatpush2.msra.mxu0 0.0
  %2828 = vmatprep.subr.mxu0 0.0
  %2829 = vmatpush2.msra.mxu0 0.0
  %2830 = vmatprep.subr.mxu0 0.0
  %2831 = vmatpush2.msra.mxu0 0.0
  %2832 = vmatprep.subr.mxu0 0.0
  %2833 = vmatpush2.msra.mxu0 0.0
  %2834 = vmatprep.subr.mxu0 0.0
  %2835 = vmatpush2.msra.mxu0 0.0
  %2836 = vmatprep.subr.mxu0 0.0
  %2837 = vmatpush2.msra.mxu0 0.0
  %2838 = vmatprep.subr.mxu0 0.0
  %2839 = vmatpush2.msra.mxu0 0.0
  %2840 = vmatprep.subr.mxu0 0.0
  %2841 = vmatpush2.msra.mxu0 0.0
  %2842 = vmatprep.subr.mxu0 0.0
  %2843 = vmatpush2.msra.mxu0 0.0
  %2844 = vmatprep.subr.mxu0 0.0
  %2845 = vmatpush2.msra.mxu0 0.0
  %2846 = vmatprep.subr.mxu0 0.0
  %2847 = vmatpush2.msra.mxu0 0.0
  %2848 = vmatprep.subr.mxu0 0.0
  %2849 = vmatpush2.msra.mxu0 0.0
  %2850 = vmatprep.subr.mxu0 0.0
  %2851 = vmatpush2.msra.mxu0 0.0
  %2852 = vmatprep.subr.mxu0 0.0
  %2853 = vmatpush2.msra.mxu0 0.0
  %2854 = vmatprep.subr.mxu0 0.0
  %2855 = vmatpush2.msra.mxu0 0.0
  %2856 = vmatprep.subr.mxu0 0.0
  %2857 = vmatpush2.msra.mxu0 0.0
  %2858 = vmatprep.mubr.f32.mxu0 0.0
  %2859 = vmatmul.mubr.f32.gmra.mxu0 %v2783
  %v2860 = vpop.f32.mrf.mxu0
  %v2861 = vadd.f32 0.0, %v2860
  %v2862 = vpop.f32.mrf.mxu0
  %2863 = vmatprep.mubr.f32.mxu0 0.0
  %2864 = vmatmul.mubr.f32.gmra.mxu0 %v2786
  %v2865 = vpop.f32.mrf.mxu0
  %v2866 = vadd.f32 0.0, %v2865
  %v2867 = vpop.f32.mrf.mxu0
  %2868 = vmatprep.mubr.f32.mxu0 0.0
  %2869 = vmatmul.mubr.f32.gmra.mxu0 %v2789
  %v2870 = vpop.f32.mrf.mxu0
  %v2871 = vadd.f32 0.0, %v2870
  %v2872 = vpop.f32.mrf.mxu0
  %2873 = vmatprep.mubr.f32.mxu0 0.0
  %2874 = vmatmul.mubr.f32.gmra.mxu0 %v2792
  %v2875 = vpop.f32.mrf.mxu0
  %v2876 = vadd.f32 0.0, %v2875
  %v2877 = vpop.f32.mrf.mxu0
  %2878 = vdwg.mxu0
  %2879 = vrot.lane.b32.xlu0 %v2083, 104
  %v2880 = vpop.permute.xlu0 %2879
  %2881 = vrot.lane.b32.xlu0 %v2088, 104
  %v2882 = vpop.permute.xlu0 %2881
  %2883 = vrot.lane.b32.xlu0 %v2093, 104
  %v2884 = vpop.permute.xlu0 %2883
  %2885 = vrot.lane.b32.xlu0 %v2098, 104
  %v2886 = vpop.permute.xlu0 %2885
  %v2887 = vsel %vm389, %v2880, 0
  %v2889 = vsel %vm389, %v2882, 0
  %v2891 = vsel %vm389, %v2884, 0
  %v2893 = vsel %vm389, %v2886, 0
  %2895 = vmatprep.subr.mxu0 0.0
  %2896 = vmatpush1.xpose.msra.mxu0 0.0
  %2897 = vmatprep.subr.mxu0 0.0
  %2898 = vmatpush1.xpose.msra.mxu0 0.0
  %2899 = vmatprep.subr.mxu0 0.0
  %2900 = vmatpush1.xpose.msra.mxu0 0.0
  %2901 = vmatprep.subr.mxu0 0.0
  %2902 = vmatpush1.xpose.msra.mxu0 0.0
  %2903 = vmatprep.subr.mxu0 0.0
  %2904 = vmatpush1.xpose.msra.mxu0 0.0
  %2905 = vmatprep.subr.mxu0 0.0
  %2906 = vmatpush1.xpose.msra.mxu0 0.0
  %2907 = vmatprep.subr.mxu0 0.0
  %2908 = vmatpush1.xpose.msra.mxu0 0.0
  %2909 = vmatprep.subr.mxu0 0.0
  %2910 = vmatpush1.xpose.msra.mxu0 0.0
  %2911 = vmatprep.subr.mxu0 0.0
  %2912 = vmatpush1.xpose.msra.mxu0 0.0
  %2913 = vmatprep.subr.mxu0 0.0
  %2914 = vmatpush1.xpose.msra.mxu0 0.0
  %2915 = vmatprep.subr.mxu0 0.0
  %2916 = vmatpush1.xpose.msra.mxu0 0.0
  %2917 = vmatprep.subr.mxu0 0.0
  %2918 = vmatpush1.xpose.msra.mxu0 0.0
  %2919 = vmatprep.subr.mxu0 0.0
  %2920 = vmatpush1.xpose.msra.mxu0 %v2639
  %2921 = vmatprep.subr.mxu0 0.0
  %2922 = vmatpush1.xpose.msra.mxu0 %v2637
  %2923 = vmatprep.subr.mxu0 0.0
  %2924 = vmatpush1.xpose.msra.mxu0 %v2635
  %2925 = vmatprep.subr.mxu0 0.0
  %2926 = vmatpush1.xpose.msra.mxu0 %v2633
  %2927 = vmatprep.subr.mxu0 0.0
  %2928 = vmatpush2.xpose.msra.mxu0 0.0
  %2929 = vmatprep.subr.mxu0 0.0
  %2930 = vmatpush2.xpose.msra.mxu0 0.0
  %2931 = vmatprep.subr.mxu0 0.0
  %2932 = vmatpush2.xpose.msra.mxu0 0.0
  %2933 = vmatprep.subr.mxu0 0.0
  %2934 = vmatpush2.xpose.msra.mxu0 0.0
  %2935 = vmatprep.subr.mxu0 0.0
  %2936 = vmatpush2.xpose.msra.mxu0 0.0
  %2937 = vmatprep.subr.mxu0 0.0
  %2938 = vmatpush2.xpose.msra.mxu0 0.0
  %2939 = vmatprep.subr.mxu0 0.0
  %2940 = vmatpush2.xpose.msra.mxu0 0.0
  %2941 = vmatprep.subr.mxu0 0.0
  %2942 = vmatpush2.xpose.msra.mxu0 0.0
  %2943 = vmatprep.subr.mxu0 0.0
  %2944 = vmatpush2.xpose.msra.mxu0 0.0
  %2945 = vmatprep.subr.mxu0 0.0
  %2946 = vmatpush2.xpose.msra.mxu0 0.0
  %2947 = vmatprep.subr.mxu0 0.0
  %2948 = vmatpush2.xpose.msra.mxu0 0.0
  %2949 = vmatprep.subr.mxu0 0.0
  %2950 = vmatpush2.xpose.msra.mxu0 0.0
  %2951 = vmatprep.subr.mxu0 0.0
  %2952 = vmatpush2.xpose.msra.mxu0 0.0
  %2953 = vmatprep.subr.mxu0 0.0
  %2954 = vmatpush2.xpose.msra.mxu0 0.0
  %2955 = vmatprep.subr.mxu0 0.0
  %2956 = vmatpush2.xpose.msra.mxu0 0.0
  %2957 = vmatprep.subr.mxu0 0.0
  %2958 = vmatpush2.xpose.msra.mxu0 0.0
  %2959 = vmatprep.mubr.f32.mxu0 0.0
  %2960 = vmatmul.mubr.f32.gmra.mxu0 %v2887
  %v2961 = vpop.f32.mrf.mxu0
  %v2962 = vadd.f32 %v190, %v2961
  %v2963 = vpop.f32.mrf.mxu0
  %2964 = vmatprep.mubr.f32.mxu0 0.0
  %2965 = vmatmul.mubr.f32.gmra.mxu0 %v2889
  %v2966 = vpop.f32.mrf.mxu0
  %v2967 = vadd.f32 %v191, %v2966
  %v2968 = vpop.f32.mrf.mxu0
  %2969 = vmatprep.mubr.f32.mxu0 0.0
  %2970 = vmatmul.mubr.f32.gmra.mxu0 %v2891
  %v2971 = vpop.f32.mrf.mxu0
  %v2972 = vadd.f32 %v192, %v2971
  %v2973 = vpop.f32.mrf.mxu0
  %2974 = vmatprep.mubr.f32.mxu0 0.0
  %2975 = vmatmul.mubr.f32.gmra.mxu0 %v2893
  %v2976 = vpop.f32.mrf.mxu0
  %v2977 = vadd.f32 %v193, %v2976
  %v2978 = vpop.f32.mrf.mxu0
  %2979 = vdwg.mxu0
  %v2980 = vsel %vm60, %v2962, -inf
  %2981 = vmax.xlane.f32.xlu0 %v2980
  %v2982 = vpop.xlane.xlu0 %2981
  %v2983 = vsel %vm60, %v2967, -inf
  %2984 = vmax.xlane.f32.xlu0 %v2983
  %v2985 = vpop.xlane.xlu0 %2984
  %v2986 = vsel %vm60, %v2972, -inf
  %2987 = vmax.xlane.f32.xlu0 %v2986
  %v2988 = vpop.xlane.xlu0 %2987
  %v2989 = vsel %vm60, %v2977, -inf
  %2990 = vmax.xlane.f32.xlu0 %v2989
  %v2991 = vpop.xlane.xlu0 %2990
  %v2992 = vsub.f32 %v2962, %v2982
  %v2993 = vsub.f32 %v2967, %v2985
  %v2994 = vsub.f32 %v2972, %v2988
  %v2995 = vsub.f32 %v2977, %v2991
  %v2996 = vmul.f32 %v2992, 1.442695
  %v2997 = vpow.pop %v2996
  %v2998 = vmul.f32 %v2993, 1.442695
  %v2999 = vpow.pop %v2998
  %v3000 = vmul.f32 %v2994, 1.442695
  %v3001 = vpow.pop %v3000
  %v3002 = vmul.f32 %v2995, 1.442695
  %v3003 = vpow.pop %v3002
  %v3004 = vsel %vm60, %v2997, 0.0
  %3005 = vadd.xlane.f32.xlu0 %v3004
  %v3006 = vpop.xlane.xlu0 %3005
  %v3007 = vsel %vm60, %v2999, 0.0
  %3008 = vadd.xlane.f32.xlu0 %v3007
  %v3009 = vpop.xlane.xlu0 %3008
  %v3010 = vsel %vm60, %v3001, 0.0
  %3011 = vadd.xlane.f32.xlu0 %v3010
  %v3012 = vpop.xlane.xlu0 %3011
  %v3013 = vsel %vm60, %v3003, 0.0
  %3014 = vadd.xlane.f32.xlu0 %v3013
  %v3015 = vpop.xlane.xlu0 %3014
  %v3016 = vrcp.pop %v3006
  %v3017 = vrcp.pop %v3009
  %v3018 = vrcp.pop %v3012
  %v3019 = vrcp.pop %v3015
  %v3020 = vmul.f32 %v2997, %v3016
  %v3021 = vmul.f32 %v2999, %v3017
  %v3022 = vmul.f32 %v3001, %v3018
  %v3023 = vmul.f32 %v3003, %v3019
  %v3025 = vsel %vm60, %v3020, 0
  %v3028 = vsel %vm60, %v3021, 0
  %v3031 = vsel %vm60, %v3022, 0
  %v3034 = vsel %vm60, %v3023, 0
  %3036 = vmatprep.subr.mxu0 0.0
  %3037 = vmatpush1.msra.mxu0 0.0
  %3038 = vmatprep.subr.mxu0 0.0
  %3039 = vmatpush1.msra.mxu0 0.0
  %3040 = vmatprep.subr.mxu0 0.0
  %3041 = vmatpush1.msra.mxu0 0.0
  %3042 = vmatprep.subr.mxu0 0.0
  %3043 = vmatpush1.msra.mxu0 0.0
  %3044 = vmatprep.subr.mxu0 0.0
  %3045 = vmatpush1.msra.mxu0 0.0
  %3046 = vmatprep.subr.mxu0 0.0
  %3047 = vmatpush1.msra.mxu0 0.0
  %3048 = vmatprep.subr.mxu0 0.0
  %3049 = vmatpush1.msra.mxu0 0.0
  %3050 = vmatprep.subr.mxu0 0.0
  %3051 = vmatpush1.msra.mxu0 0.0
  %3052 = vmatprep.subr.mxu0 0.0
  %3053 = vmatpush1.msra.mxu0 0.0
  %3054 = vmatprep.subr.mxu0 0.0
  %3055 = vmatpush1.msra.mxu0 0.0
  %3056 = vmatprep.subr.mxu0 0.0
  %3057 = vmatpush1.msra.mxu0 0.0
  %3058 = vmatprep.subr.mxu0 0.0
  %3059 = vmatpush1.msra.mxu0 0.0
  %3060 = vmatprep.subr.mxu0 0.0
  %3061 = vmatpush1.msra.mxu0 %v2777
  %3062 = vmatprep.subr.mxu0 0.0
  %3063 = vmatpush1.msra.mxu0 %v2775
  %3064 = vmatprep.subr.mxu0 0.0
  %3065 = vmatpush1.msra.mxu0 %v2773
  %3066 = vmatprep.subr.mxu0 0.0
  %3067 = vmatpush1.msra.mxu0 %v2771
  %3068 = vmatprep.subr.mxu0 0.0
  %3069 = vmatpush2.msra.mxu0 0.0
  %3070 = vmatprep.subr.mxu0 0.0
  %3071 = vmatpush2.msra.mxu0 0.0
  %3072 = vmatprep.subr.mxu0 0.0
  %3073 = vmatpush2.msra.mxu0 0.0
  %3074 = vmatprep.subr.mxu0 0.0
  %3075 = vmatpush2.msra.mxu0 0.0
  %3076 = vmatprep.subr.mxu0 0.0
  %3077 = vmatpush2.msra.mxu0 0.0
  %3078 = vmatprep.subr.mxu0 0.0
  %3079 = vmatpush2.msra.mxu0 0.0
  %3080 = vmatprep.subr.mxu0 0.0
  %3081 = vmatpush2.msra.mxu0 0.0
  %3082 = vmatprep.subr.mxu0 0.0
  %3083 = vmatpush2.msra.mxu0 0.0
  %3084 = vmatprep.subr.mxu0 0.0
  %3085 = vmatpush2.msra.mxu0 0.0
  %3086 = vmatprep.subr.mxu0 0.0
  %3087 = vmatpush2.msra.mxu0 0.0
  %3088 = vmatprep.subr.mxu0 0.0
  %3089 = vmatpush2.msra.mxu0 0.0
  %3090 = vmatprep.subr.mxu0 0.0
  %3091 = vmatpush2.msra.mxu0 0.0
  %3092 = vmatprep.subr.mxu0 0.0
  %3093 = vmatpush2.msra.mxu0 0.0
  %3094 = vmatprep.subr.mxu0 0.0
  %3095 = vmatpush2.msra.mxu0 0.0
  %3096 = vmatprep.subr.mxu0 0.0
  %3097 = vmatpush2.msra.mxu0 0.0
  %3098 = vmatprep.subr.mxu0 0.0
  %3099 = vmatpush2.msra.mxu0 0.0
  %3100 = vmatprep.mubr.f32.mxu0 0.0
  %3101 = vmatmul.mubr.f32.gmra.mxu0 %v3025
  %v3102 = vpop.f32.mrf.mxu0
  %v3103 = vadd.f32 0.0, %v3102
  %v3104 = vpop.f32.mrf.mxu0
  %3105 = vmatprep.mubr.f32.mxu0 0.0
  %3106 = vmatmul.mubr.f32.gmra.mxu0 %v3028
  %v3107 = vpop.f32.mrf.mxu0
  %v3108 = vadd.f32 0.0, %v3107
  %v3109 = vpop.f32.mrf.mxu0
  %3110 = vmatprep.mubr.f32.mxu0 0.0
  %3111 = vmatmul.mubr.f32.gmra.mxu0 %v3031
  %v3112 = vpop.f32.mrf.mxu0
  %v3113 = vadd.f32 0.0, %v3112
  %v3114 = vpop.f32.mrf.mxu0
  %3115 = vmatprep.mubr.f32.mxu0 0.0
  %3116 = vmatmul.mubr.f32.gmra.mxu0 %v3034
  %v3117 = vpop.f32.mrf.mxu0
  %v3118 = vadd.f32 0.0, %v3117
  %v3119 = vpop.f32.mrf.mxu0
  %3120 = vdwg.mxu0
  %3125 = vrot.lane.b32.xlu0 %v2591, 8
  %v3126 = vpop.permute.xlu0 %3125
  %3127 = vrot.lane.b32.xlu0 %v2596, 8
  %v3128 = vpop.permute.xlu0 %3127
  %3129 = vrot.lane.b32.xlu0 %v2601, 8
  %v3130 = vpop.permute.xlu0 %3129
  %3131 = vrot.lane.b32.xlu0 %v2606, 8
  %v3132 = vpop.permute.xlu0 %3131
  %3141 = vrot.lane.b32.xlu0 %v2861, 16
  %v3142 = vpop.permute.xlu0 %3141
  %3143 = vrot.lane.b32.xlu0 %v2866, 16
  %v3144 = vpop.permute.xlu0 %3143
  %3145 = vrot.lane.b32.xlu0 %v2871, 16
  %v3146 = vpop.permute.xlu0 %3145
  %3147 = vrot.lane.b32.xlu0 %v2876, 16
  %v3148 = vpop.permute.xlu0 %3147
  %3157 = vrot.lane.b32.xlu0 %v3103, 24
  %v3158 = vpop.permute.xlu0 %3157
  %3159 = vrot.lane.b32.xlu0 %v3108, 24
  %v3160 = vpop.permute.xlu0 %3159
  %3161 = vrot.lane.b32.xlu0 %v3113, 24
  %v3162 = vpop.permute.xlu0 %3161
  %3163 = vrot.lane.b32.xlu0 %v3118, 24
  %v3164 = vpop.permute.xlu0 %3163
  %v3169 = vsel %vm389, %v2349, %v3126
  %v3170 = vsel %vm389, %v2354, %v3128
  %v3171 = vsel %vm389, %v2359, %v3130
  %v3172 = vsel %vm389, %v2364, %v3132
  %v3173 = vsel %vm1450, %v3169, %v3142
  %v3174 = vsel %vm1450, %v3170, %v3144
  %v3175 = vsel %vm1450, %v3171, %v3146
  %v3176 = vsel %vm1450, %v3172, %v3148
  %v3177 = vsel %vm1455, %v3173, %v3158
  %v3178 = vsel %vm1455, %v3174, %v3160
  %v3179 = vsel %vm1455, %v3175, %v3162
  %v3180 = vsel %vm1455, %v3176, %v3164
  %s3181 = scalar_lea.vmem %s7, 32
  %v3182 = vld [vmem:[%s3181] sm:$0xff]
  %v3183 = vld [vmem:[%s3181 + $0x8] sm:$0xff]
  %v3184 = vld [vmem:[%s3181 + $0x10] sm:$0xff]
  %v3185 = vld [vmem:[%s3181 + $0x18] sm:$0xff]
  %v3187 = vsel %vm60, %v3177, 0
  %v3190 = vsel %vm60, %v3178, 0
  %v3193 = vsel %vm60, %v3179, 0
  %v3196 = vsel %vm60, %v3180, 0
  %3198 = vmatprep.subr.mxu0 0.0
  %3199 = vmatpush1.msra.mxu0 0.0
  %3200 = vmatprep.subr.mxu0 0.0
  %3201 = vmatpush1.msra.mxu0 0.0
  %3202 = vmatprep.subr.mxu0 0.0
  %3203 = vmatpush1.msra.mxu0 0.0
  %3204 = vmatprep.subr.mxu0 0.0
  %3205 = vmatpush1.msra.mxu0 0.0
  %3206 = vmatprep.subr.mxu0 0.0
  %3207 = vmatpush1.msra.mxu0 0.0
  %3208 = vmatprep.subr.mxu0 0.0
  %3209 = vmatpush1.msra.mxu0 0.0
  %3210 = vmatprep.subr.mxu0 0.0
  %3211 = vmatpush1.msra.mxu0 0.0
  %3212 = vmatprep.subr.mxu0 0.0
  %3213 = vmatpush1.msra.mxu0 0.0
  %3214 = vmatprep.subr.mxu0 0.0
  %3215 = vmatpush1.msra.mxu0 0.0
  %3216 = vmatprep.subr.mxu0 0.0
  %3217 = vmatpush1.msra.mxu0 0.0
  %3218 = vmatprep.subr.mxu0 0.0
  %3219 = vmatpush1.msra.mxu0 0.0
  %3220 = vmatprep.subr.mxu0 0.0
  %3221 = vmatpush1.msra.mxu0 0.0
  %3222 = vmatprep.subr.mxu0 0.0
  %3223 = vmatpush1.msra.mxu0 %v3185
  %3224 = vmatprep.subr.mxu0 0.0
  %3225 = vmatpush1.msra.mxu0 %v3184
  %3226 = vmatprep.subr.mxu0 0.0
  %3227 = vmatpush1.msra.mxu0 %v3183
  %3228 = vmatprep.subr.mxu0 0.0
  %3229 = vmatpush1.msra.mxu0 %v3182
  %3230 = vmatprep.subr.mxu0 0.0
  %3231 = vmatpush2.msra.mxu0 0.0
  %3232 = vmatprep.subr.mxu0 0.0
  %3233 = vmatpush2.msra.mxu0 0.0
  %3234 = vmatprep.subr.mxu0 0.0
  %3235 = vmatpush2.msra.mxu0 0.0
  %3236 = vmatprep.subr.mxu0 0.0
  %3237 = vmatpush2.msra.mxu0 0.0
  %3238 = vmatprep.subr.mxu0 0.0
  %3239 = vmatpush2.msra.mxu0 0.0
  %3240 = vmatprep.subr.mxu0 0.0
  %3241 = vmatpush2.msra.mxu0 0.0
  %3242 = vmatprep.subr.mxu0 0.0
  %3243 = vmatpush2.msra.mxu0 0.0
  %3244 = vmatprep.subr.mxu0 0.0
  %3245 = vmatpush2.msra.mxu0 0.0
  %3246 = vmatprep.subr.mxu0 0.0
  %3247 = vmatpush2.msra.mxu0 0.0
  %3248 = vmatprep.subr.mxu0 0.0
  %3249 = vmatpush2.msra.mxu0 0.0
  %3250 = vmatprep.subr.mxu0 0.0
  %3251 = vmatpush2.msra.mxu0 0.0
  %3252 = vmatprep.subr.mxu0 0.0
  %3253 = vmatpush2.msra.mxu0 0.0
  %3254 = vmatprep.subr.mxu0 0.0
  %3255 = vmatpush2.msra.mxu0 0.0
  %3256 = vmatprep.subr.mxu0 0.0
  %3257 = vmatpush2.msra.mxu0 0.0
  %3258 = vmatprep.subr.mxu0 0.0
  %3259 = vmatpush2.msra.mxu0 0.0
  %3260 = vmatprep.subr.mxu0 0.0
  %3261 = vmatpush2.msra.mxu0 0.0
  %3262 = vmatprep.mubr.f32.mxu0 0.0
  %3263 = vmatmul.mubr.f32.gmra.mxu0 %v3187
  %v3264 = vpop.f32.mrf.mxu0
  %v3265 = vadd.f32 0.0, %v3264
  %v3266 = vpop.f32.mrf.mxu0
  %3267 = vmatprep.mubr.f32.mxu0 0.0
  %3268 = vmatmul.mubr.f32.gmra.mxu0 %v3190
  %v3269 = vpop.f32.mrf.mxu0
  %v3270 = vadd.f32 0.0, %v3269
  %v3271 = vpop.f32.mrf.mxu0
  %3272 = vmatprep.mubr.f32.mxu0 0.0
  %3273 = vmatmul.mubr.f32.gmra.mxu0 %v3193
  %v3274 = vpop.f32.mrf.mxu0
  %v3275 = vadd.f32 0.0, %v3274
  %v3276 = vpop.f32.mrf.mxu0
  %3277 = vmatprep.mubr.f32.mxu0 0.0
  %3278 = vmatmul.mubr.f32.gmra.mxu0 %v3196
  %v3279 = vpop.f32.mrf.mxu0
  %v3280 = vadd.f32 0.0, %v3279
  %v3281 = vpop.f32.mrf.mxu0
  %3282 = vdwg.mxu0
  %v3283 = vadd.f32 %v1911, %v3265
  %v3284 = vadd.f32 %v1912, %v3270
  %v3285 = vadd.f32 %v1913, %v3275
  %v3286 = vadd.f32 %v1914, %v3280
  %s3287 = scalar_lea.vmem %s8, 1
  %v3288 = vld [vmem:[%s3287] sm:$0x1]
  %v3290 = vlaneseq
  %v3291 = vshrl.u32 %v3290, 7
  %v3292 = vsub.s32 0, %v3291
  %v3293 = vrot.slane %v3288, %v3292
  %v3295 = vadd.f32 %v3283, %v3293
  %v3296 = vadd.f32 %v3284, %v3293
  %v3297 = vadd.f32 %v3285, %v3293
  %v3298 = vadd.f32 %v3286, %v3293
  %s3299 = scalar_lea.vmem %s9, 1
  %v3300 = vld [vmem:[%s3299] sm:$0x1]
  %s3301 = scalar_lea.vmem %s10, 1
  %v3302 = vld [vmem:[%s3301] sm:$0x1]
  %v3303 = vsel %vm60, %v3295, 0.0
  %3304 = vadd.xlane.f32.xlu0 %v3303
  %v3305 = vpop.xlane.xlu0 %3304
  %v3306 = vsel %vm60, %v3296, 0.0
  %3307 = vadd.xlane.f32.xlu0 %v3306
  %v3308 = vpop.xlane.xlu0 %3307
  %v3309 = vsel %vm60, %v3297, 0.0
  %3310 = vadd.xlane.f32.xlu0 %v3309
  %v3311 = vpop.xlane.xlu0 %3310
  %v3312 = vsel %vm60, %v3298, 0.0
  %3313 = vadd.xlane.f32.xlu0 %v3312
  %v3314 = vpop.xlane.xlu0 %3313
  %v3315 = vmul.f32 %v3305, %v208
  %v3316 = vmul.f32 %v3308, %v208
  %v3317 = vmul.f32 %v3311, %v208
  %v3318 = vmul.f32 %v3314, %v208
  %v3319 = vsub.f32 %v3295, %v3315
  %v3320 = vsub.f32 %v3296, %v3316
  %v3321 = vsub.f32 %v3297, %v3317
  %v3322 = vsub.f32 %v3298, %v3318
  %v3323 = vmul.f32 %v3319, %v3319
  %v3324 = vmul.f32 %v3320, %v3320
  %v3325 = vmul.f32 %v3321, %v3321
  %v3326 = vmul.f32 %v3322, %v3322
  %v3327 = vsel %vm60, %v3323, 0.0
  %3328 = vadd.xlane.f32.xlu0 %v3327
  %v3329 = vpop.xlane.xlu0 %3328
  %v3330 = vsel %vm60, %v3324, 0.0
  %3331 = vadd.xlane.f32.xlu0 %v3330
  %v3332 = vpop.xlane.xlu0 %3331
  %v3333 = vsel %vm60, %v3325, 0.0
  %3334 = vadd.xlane.f32.xlu0 %v3333
  %v3335 = vpop.xlane.xlu0 %3334
  %v3336 = vsel %vm60, %v3326, 0.0
  %3337 = vadd.xlane.f32.xlu0 %v3336
  %v3338 = vpop.xlane.xlu0 %3337
  %v3339 = vmul.f32 %v3329, %v208
  %v3340 = vmul.f32 %v3332, %v208
  %v3341 = vmul.f32 %v3335, %v208
  %v3342 = vmul.f32 %v3338, %v208
  %v3343 = vadd.f32 %v3339, 1e-05
  %v3344 = vadd.f32 %v3340, 1e-05
  %v3345 = vadd.f32 %v3341, 1e-05
  %v3346 = vadd.f32 %v3342, 1e-05
  %v3347 = vrsqrt.pop %v3343
  %v3348 = vrsqrt.pop %v3344
  %v3349 = vrsqrt.pop %v3345
  %v3350 = vrsqrt.pop %v3346
  %v3351 = vmul.f32 %v3319, %v3347
  %v3352 = vmul.f32 %v3320, %v3348
  %v3353 = vmul.f32 %v3321, %v3349
  %v3354 = vmul.f32 %v3322, %v3350
  %v3356 = vlaneseq
  %v3357 = vshrl.u32 %v3356, 7
  %v3358 = vsub.s32 0, %v3357
  %v3359 = vrot.slane %v3300, %v3358
  %v3361 = vmul.f32 %v3351, %v3359
  %v3362 = vmul.f32 %v3352, %v3359
  %v3363 = vmul.f32 %v3353, %v3359
  %v3364 = vmul.f32 %v3354, %v3359
  %v3366 = vlaneseq
  %v3367 = vshrl.u32 %v3366, 7
  %v3368 = vsub.s32 0, %v3367
  %v3369 = vrot.slane %v3302, %v3368
  %v3371 = vadd.f32 %v3361, %v3369
  %v3372 = vadd.f32 %v3362, %v3369
  %v3373 = vadd.f32 %v3363, %v3369
  %v3374 = vadd.f32 %v3364, %v3369
  %s3375 = scalar_lea.vmem %s11, 32
  %v3376 = vld [vmem:[%s3375] sm:$0xff]
  %v3377 = vld [vmem:[%s3375 + $0x8] sm:$0xff]
  %v3378 = vld [vmem:[%s3375 + $0x10] sm:$0xff]
  %v3379 = vld [vmem:[%s3375 + $0x18] sm:$0xff]
  %s3380 = scalar_lea.vmem %s12, 1
  %v3381 = vld [vmem:[%s3380] sm:$0x1]
  %v3383 = vlaneseq
  %v3384 = vshrl.u32 %v3383, 7
  %v3385 = vsub.s32 0, %v3384
  %v3386 = vrot.slane %v3381, %v3385
  %v3389 = vsel %vm60, %v3371, 0
  %v3392 = vsel %vm60, %v3372, 0
  %v3395 = vsel %vm60, %v3373, 0
  %v3398 = vsel %vm60, %v3374, 0
  %3400 = vmatprep.subr.mxu0 0.0
  %3401 = vmatpush1.msra.mxu0 0.0
  %3402 = vmatprep.subr.mxu0 0.0
  %3403 = vmatpush1.msra.mxu0 0.0
  %3404 = vmatprep.subr.mxu0 0.0
  %3405 = vmatpush1.msra.mxu0 0.0
  %3406 = vmatprep.subr.mxu0 0.0
  %3407 = vmatpush1.msra.mxu0 0.0
  %3408 = vmatprep.subr.mxu0 0.0
  %3409 = vmatpush1.msra.mxu0 0.0
  %3410 = vmatprep.subr.mxu0 0.0
  %3411 = vmatpush1.msra.mxu0 0.0
  %3412 = vmatprep.subr.mxu0 0.0
  %3413 = vmatpush1.msra.mxu0 0.0
  %3414 = vmatprep.subr.mxu0 0.0
  %3415 = vmatpush1.msra.mxu0 0.0
  %3416 = vmatprep.subr.mxu0 0.0
  %3417 = vmatpush1.msra.mxu0 0.0
  %3418 = vmatprep.subr.mxu0 0.0
  %3419 = vmatpush1.msra.mxu0 0.0
  %3420 = vmatprep.subr.mxu0 0.0
  %3421 = vmatpush1.msra.mxu0 0.0
  %3422 = vmatprep.subr.mxu0 0.0
  %3423 = vmatpush1.msra.mxu0 0.0
  %3424 = vmatprep.subr.mxu0 0.0
  %3425 = vmatpush1.msra.mxu0 %v3379
  %3426 = vmatprep.subr.mxu0 0.0
  %3427 = vmatpush1.msra.mxu0 %v3378
  %3428 = vmatprep.subr.mxu0 0.0
  %3429 = vmatpush1.msra.mxu0 %v3377
  %3430 = vmatprep.subr.mxu0 0.0
  %3431 = vmatpush1.msra.mxu0 %v3376
  %3432 = vmatprep.subr.mxu0 0.0
  %3433 = vmatpush2.msra.mxu0 0.0
  %3434 = vmatprep.subr.mxu0 0.0
  %3435 = vmatpush2.msra.mxu0 0.0
  %3436 = vmatprep.subr.mxu0 0.0
  %3437 = vmatpush2.msra.mxu0 0.0
  %3438 = vmatprep.subr.mxu0 0.0
  %3439 = vmatpush2.msra.mxu0 0.0
  %3440 = vmatprep.subr.mxu0 0.0
  %3441 = vmatpush2.msra.mxu0 0.0
  %3442 = vmatprep.subr.mxu0 0.0
  %3443 = vmatpush2.msra.mxu0 0.0
  %3444 = vmatprep.subr.mxu0 0.0
  %3445 = vmatpush2.msra.mxu0 0.0
  %3446 = vmatprep.subr.mxu0 0.0
  %3447 = vmatpush2.msra.mxu0 0.0
  %3448 = vmatprep.subr.mxu0 0.0
  %3449 = vmatpush2.msra.mxu0 0.0
  %3450 = vmatprep.subr.mxu0 0.0
  %3451 = vmatpush2.msra.mxu0 0.0
  %3452 = vmatprep.subr.mxu0 0.0
  %3453 = vmatpush2.msra.mxu0 0.0
  %3454 = vmatprep.subr.mxu0 0.0
  %3455 = vmatpush2.msra.mxu0 0.0
  %3456 = vmatprep.subr.mxu0 0.0
  %3457 = vmatpush2.msra.mxu0 0.0
  %3458 = vmatprep.subr.mxu0 0.0
  %3459 = vmatpush2.msra.mxu0 0.0
  %3460 = vmatprep.subr.mxu0 0.0
  %3461 = vmatpush2.msra.mxu0 0.0
  %3462 = vmatprep.subr.mxu0 0.0
  %3463 = vmatpush2.msra.mxu0 0.0
  %3464 = vmatprep.mubr.f32.mxu0 0.0
  %3465 = vmatmul.mubr.f32.gmra.mxu0 %v3389
  %v3466 = vpop.f32.mrf.mxu0
  %v3467 = vadd.f32 %v3386, %v3466
  %v3468 = vpop.f32.mrf.mxu0
  %3469 = vmatprep.mubr.f32.mxu0 0.0
  %3470 = vmatmul.mubr.f32.gmra.mxu0 %v3392
  %v3471 = vpop.f32.mrf.mxu0
  %v3472 = vadd.f32 %v3386, %v3471
  %v3473 = vpop.f32.mrf.mxu0
  %3474 = vmatprep.mubr.f32.mxu0 0.0
  %3475 = vmatmul.mubr.f32.gmra.mxu0 %v3395
  %v3476 = vpop.f32.mrf.mxu0
  %v3477 = vadd.f32 %v3386, %v3476
  %v3478 = vpop.f32.mrf.mxu0
  %3479 = vmatprep.mubr.f32.mxu0 0.0
  %3480 = vmatmul.mubr.f32.gmra.mxu0 %v3398
  %v3481 = vpop.f32.mrf.mxu0
  %v3482 = vadd.f32 %v3386, %v3481
  %v3483 = vpop.f32.mrf.mxu0
  %3484 = vdwg.mxu0
  %v3485 = vmul.f32 %v3467, %v3467
  %v3486 = vmul.f32 %v3472, %v3472
  %v3487 = vmul.f32 %v3477, %v3477
  %v3488 = vmul.f32 %v3482, %v3482
  %v3489 = vmul.f32 %v3467, %v3485
  %v3490 = vmul.f32 %v3472, %v3486
  %v3491 = vmul.f32 %v3477, %v3487
  %v3492 = vmul.f32 %v3482, %v3488
  %v3493 = vmul.f32 %v3489, 0.044715
  %v3494 = vmul.f32 %v3490, 0.044715
  %v3495 = vmul.f32 %v3491, 0.044715
  %v3496 = vmul.f32 %v3492, 0.044715
  %v3497 = vadd.f32 %v3467, %v3493
  %v3498 = vadd.f32 %v3472, %v3494
  %v3499 = vadd.f32 %v3477, %v3495
  %v3500 = vadd.f32 %v3482, %v3496
  %v3501 = vmul.f32 %v3497, 0.7978846
  %v3502 = vmul.f32 %v3498, 0.7978846
  %v3503 = vmul.f32 %v3499, 0.7978846
  %v3504 = vmul.f32 %v3500, 0.7978846
  %v3505 = vtanh.pop %v3501
  %v3506 = vtanh.pop %v3502
  %v3507 = vtanh.pop %v3503
  %v3508 = vtanh.pop %v3504
  %v3509 = vadd.f32 %v3505, 1.0
  %v3510 = vadd.f32 %v3506, 1.0
  %v3511 = vadd.f32 %v3507, 1.0
  %v3512 = vadd.f32 %v3508, 1.0
  %v3513 = vmul.f32 %v3509, 0.5
  %v3514 = vmul.f32 %v3510, 0.5
  %v3515 = vmul.f32 %v3511, 0.5
  %v3516 = vmul.f32 %v3512, 0.5
  %v3517 = vmul.f32 %v3467, %v3513
  %v3518 = vmul.f32 %v3472, %v3514
  %v3519 = vmul.f32 %v3477, %v3515
  %v3520 = vmul.f32 %v3482, %v3516
  %s3521 = scalar_lea.vmem %s13, 64
  %v3522 = vld [vmem:[%s3521] sm:$0xff]
  %v3523 = vld [vmem:[%s3521 + $0x8] sm:$0xff]
  %v3524 = vld [vmem:[%s3521 + $0x10] sm:$0xff]
  %v3525 = vld [vmem:[%s3521 + $0x18] sm:$0xff]
  %v3526 = vld [vmem:[%s3521 + $0x20] sm:$0xff]
  %v3527 = vld [vmem:[%s3521 + $0x28] sm:$0xff]
  %v3528 = vld [vmem:[%s3521 + $0x30] sm:$0xff]
  %v3529 = vld [vmem:[%s3521 + $0x38] sm:$0xff]
  %v3531 = vsel %vm1802, %v3517, 0
  %v3534 = vsel %vm1802, %v3518, 0
  %v3537 = vsel %vm1802, %v3519, 0
  %v3540 = vsel %vm1802, %v3520, 0
  %3542 = vmatprep.subr.mxu0 0.0
  %3543 = vmatpush1.msra.mxu0 0.0
  %3544 = vmatprep.subr.mxu0 0.0
  %3545 = vmatpush1.msra.mxu0 0.0
  %3546 = vmatprep.subr.mxu0 0.0
  %3547 = vmatpush1.msra.mxu0 0.0
  %3548 = vmatprep.subr.mxu0 0.0
  %3549 = vmatpush1.msra.mxu0 0.0
  %3550 = vmatprep.subr.mxu0 0.0
  %3551 = vmatpush1.msra.mxu0 0.0
  %3552 = vmatprep.subr.mxu0 0.0
  %3553 = vmatpush1.msra.mxu0 0.0
  %3554 = vmatprep.subr.mxu0 0.0
  %3555 = vmatpush1.msra.mxu0 0.0
  %3556 = vmatprep.subr.mxu0 0.0
  %3557 = vmatpush1.msra.mxu0 0.0
  %3558 = vmatprep.subr.mxu0 0.0
  %3559 = vmatpush1.msra.mxu0 %v3529
  %3560 = vmatprep.subr.mxu0 0.0
  %3561 = vmatpush1.msra.mxu0 %v3528
  %3562 = vmatprep.subr.mxu0 0.0
  %3563 = vmatpush1.msra.mxu0 %v3527
  %3564 = vmatprep.subr.mxu0 0.0
  %3565 = vmatpush1.msra.mxu0 %v3526
  %3566 = vmatprep.subr.mxu0 0.0
  %3567 = vmatpush1.msra.mxu0 %v3525
  %3568 = vmatprep.subr.mxu0 0.0
  %3569 = vmatpush1.msra.mxu0 %v3524
  %3570 = vmatprep.subr.mxu0 0.0
  %3571 = vmatpush1.msra.mxu0 %v3523
  %3572 = vmatprep.subr.mxu0 0.0
  %3573 = vmatpush1.msra.mxu0 %v3522
  %3574 = vmatprep.subr.mxu0 0.0
  %3575 = vmatpush2.msra.mxu0 0.0
  %3576 = vmatprep.subr.mxu0 0.0
  %3577 = vmatpush2.msra.mxu0 0.0
  %3578 = vmatprep.subr.mxu0 0.0
  %3579 = vmatpush2.msra.mxu0 0.0
  %3580 = vmatprep.subr.mxu0 0.0
  %3581 = vmatpush2.msra.mxu0 0.0
  %3582 = vmatprep.subr.mxu0 0.0
  %3583 = vmatpush2.msra.mxu0 0.0
  %3584 = vmatprep.subr.mxu0 0.0
  %3585 = vmatpush2.msra.mxu0 0.0
  %3586 = vmatprep.subr.mxu0 0.0
  %3587 = vmatpush2.msra.mxu0 0.0
  %3588 = vmatprep.subr.mxu0 0.0
  %3589 = vmatpush2.msra.mxu0 0.0
  %3590 = vmatprep.subr.mxu0 0.0
  %3591 = vmatpush2.msra.mxu0 0.0
  %3592 = vmatprep.subr.mxu0 0.0
  %3593 = vmatpush2.msra.mxu0 0.0
  %3594 = vmatprep.subr.mxu0 0.0
  %3595 = vmatpush2.msra.mxu0 0.0
  %3596 = vmatprep.subr.mxu0 0.0
  %3597 = vmatpush2.msra.mxu0 0.0
  %3598 = vmatprep.subr.mxu0 0.0
  %3599 = vmatpush2.msra.mxu0 0.0
  %3600 = vmatprep.subr.mxu0 0.0
  %3601 = vmatpush2.msra.mxu0 0.0
  %3602 = vmatprep.subr.mxu0 0.0
  %3603 = vmatpush2.msra.mxu0 0.0
  %3604 = vmatprep.subr.mxu0 0.0
  %3605 = vmatpush2.msra.mxu0 0.0
  %3606 = vmatprep.mubr.f32.mxu0 0.0
  %3607 = vmatmul.mubr.f32.gmra.mxu0 %v3531
  %v3608 = vpop.f32.mrf.mxu0
  %v3609 = vadd.f32 0.0, %v3608
  %v3610 = vpop.f32.mrf.mxu0
  %3611 = vmatprep.mubr.f32.mxu0 0.0
  %3612 = vmatmul.mubr.f32.gmra.mxu0 %v3534
  %v3613 = vpop.f32.mrf.mxu0
  %v3614 = vadd.f32 0.0, %v3613
  %v3615 = vpop.f32.mrf.mxu0
  %3616 = vmatprep.mubr.f32.mxu0 0.0
  %3617 = vmatmul.mubr.f32.gmra.mxu0 %v3537
  %v3618 = vpop.f32.mrf.mxu0
  %v3619 = vadd.f32 0.0, %v3618
  %v3620 = vpop.f32.mrf.mxu0
  %3621 = vmatprep.mubr.f32.mxu0 0.0
  %3622 = vmatmul.mubr.f32.gmra.mxu0 %v3540
  %v3623 = vpop.f32.mrf.mxu0
  %v3624 = vadd.f32 0.0, %v3623
  %v3625 = vpop.f32.mrf.mxu0
  %3626 = vdwg.mxu0
  %v3627 = vadd.f32 %v3295, %v3609
  %v3628 = vadd.f32 %v3296, %v3614
  %v3629 = vadd.f32 %v3297, %v3619
  %v3630 = vadd.f32 %v3298, %v3624
  %s3631 = scalar_lea.vmem %s14, 1
  %v3632 = vld [vmem:[%s3631] sm:$0x1]
  %v3634 = vlaneseq
  %v3635 = vshrl.u32 %v3634, 7
  %v3636 = vsub.s32 0, %v3635
  %v3637 = vrot.slane %v3632, %v3636
  %v3639 = vadd.f32 %v3627, %v3637
  %v3640 = vadd.f32 %v3628, %v3637
  %v3641 = vadd.f32 %v3629, %v3637
  %v3642 = vadd.f32 %v3630, %v3637
  %v3643 = vld [vmem:[%s15] sm:$0xff]
  %v3644 = vld [vmem:[%s15 + $0x8] sm:$0xff]
  %v3645 = vld [vmem:[%s15 + $0x10] sm:$0xff]
  %v3646 = vld [vmem:[%s15 + $0x18] sm:$0xff]
  %v3647 = vld [vmem:[%s15 + $0x20] sm:$0xff]
  %v3648 = vld [vmem:[%s15 + $0x28] sm:$0xff]
  %v3649 = vld [vmem:[%s15 + $0x30] sm:$0xff]
  %v3650 = vld [vmem:[%s15 + $0x38] sm:$0xff]
  %v3651 = vld [vmem:[%s15 + $0x40] sm:$0xff]
  %v3652 = vld [vmem:[%s15 + $0x48] sm:$0xff]
  %v3653 = vld [vmem:[%s15 + $0x50] sm:$0xff]
  %v3654 = vld [vmem:[%s15 + $0x58] sm:$0xff]
  %v3655 = vld [vmem:[%s15 + $0x60] sm:$0xff]
  %v3656 = vld [vmem:[%s15 + $0x68] sm:$0xff]
  %v3657 = vld [vmem:[%s15 + $0x70] sm:$0xff]
  %v3658 = vld [vmem:[%s15 + $0x78] sm:$0xff]
  %v3659 = vld [vmem:[%s16] sm:$0xf]
  %v3661 = vlaneseq
  %v3662 = vshrl.u32 %v3661, 7
  %v3663 = vsub.s32 0, %v3662
  %v3664 = vrot.slane %v3659, %v3663
  %v3665 = vlaneseq
  %v3666 = vshrl.u32 %v3665, 7
  %v3667 = vsub.s32 1, %v3666
  %v3668 = vrot.slane %v3659, %v3667
  %v3669 = vlaneseq
  %v3670 = vshrl.u32 %v3669, 7
  %v3671 = vsub.s32 2, %v3670
  %v3672 = vrot.slane %v3659, %v3671
  %v3673 = vlaneseq
  %v3674 = vshrl.u32 %v3673, 7
  %v3675 = vsub.s32 3, %v3674
  %v3676 = vrot.slane %v3659, %v3675
  %v3682 = vsel %vm60, %v3639, 0
  %v3685 = vsel %vm60, %v3640, 0
  %v3688 = vsel %vm60, %v3641, 0
  %v3691 = vsel %vm60, %v3642, 0
  %3693 = vmatprep.subr.mxu0 0.0
  %3694 = vmatpush1.msra.mxu0 0.0
  %3695 = vmatprep.subr.mxu0 0.0
  %3696 = vmatpush1.msra.mxu0 0.0
  %3697 = vmatprep.subr.mxu0 0.0
  %3698 = vmatpush1.msra.mxu0 0.0
  %3699 = vmatprep.subr.mxu0 0.0
  %3700 = vmatpush1.msra.mxu0 0.0
  %3701 = vmatprep.subr.mxu0 0.0
  %3702 = vmatpush1.msra.mxu0 0.0
  %3703 = vmatprep.subr.mxu0 0.0
  %3704 = vmatpush1.msra.mxu0 0.0
  %3705 = vmatprep.subr.mxu0 0.0
  %3706 = vmatpush1.msra.mxu0 0.0
  %3707 = vmatprep.subr.mxu0 0.0
  %3708 = vmatpush1.msra.mxu0 0.0
  %3709 = vmatprep.subr.mxu0 0.0
  %3710 = vmatpush1.msra.mxu0 0.0
  %3711 = vmatprep.subr.mxu0 0.0
  %3712 = vmatpush1.msra.mxu0 0.0
  %3713 = vmatprep.subr.mxu0 0.0
  %3714 = vmatpush1.msra.mxu0 0.0
  %3715 = vmatprep.subr.mxu0 0.0
  %3716 = vmatpush1.msra.mxu0 0.0
  %3717 = vmatprep.subr.mxu0 %v3656
  %3718 = vmatpush1.msra.mxu0 %v3655
  %3719 = vmatprep.subr.mxu0 %v3652
  %3720 = vmatpush1.msra.mxu0 %v3651
  %3721 = vmatprep.subr.mxu0 %v3648
  %3722 = vmatpush1.msra.mxu0 %v3647
  %3723 = vmatprep.subr.mxu0 %v3644
  %3724 = vmatpush1.msra.mxu0 %v3643
  %3725 = vmatprep.subr.mxu0 0.0
  %3726 = vmatpush2.msra.mxu0 0.0
  %3727 = vmatprep.subr.mxu0 0.0
  %3728 = vmatpush2.msra.mxu0 0.0
  %3729 = vmatprep.subr.mxu0 0.0
  %3730 = vmatpush2.msra.mxu0 0.0
  %3731 = vmatprep.subr.mxu0 0.0
  %3732 = vmatpush2.msra.mxu0 0.0
  %3733 = vmatprep.subr.mxu0 0.0
  %3734 = vmatpush2.msra.mxu0 0.0
  %3735 = vmatprep.subr.mxu0 0.0
  %3736 = vmatpush2.msra.mxu0 0.0
  %3737 = vmatprep.subr.mxu0 0.0
  %3738 = vmatpush2.msra.mxu0 0.0
  %3739 = vmatprep.subr.mxu0 0.0
  %3740 = vmatpush2.msra.mxu0 0.0
  %3741 = vmatprep.subr.mxu0 0.0
  %3742 = vmatpush2.msra.mxu0 0.0
  %3743 = vmatprep.subr.mxu0 0.0
  %3744 = vmatpush2.msra.mxu0 0.0
  %3745 = vmatprep.subr.mxu0 0.0
  %3746 = vmatpush2.msra.mxu0 0.0
  %3747 = vmatprep.subr.mxu0 0.0
  %3748 = vmatpush2.msra.mxu0 0.0
  %3749 = vmatprep.subr.mxu0 0.0
  %3750 = vmatpush2.msra.mxu0 0.0
  %3751 = vmatprep.subr.mxu0 0.0
  %3752 = vmatpush2.msra.mxu0 0.0
  %3753 = vmatprep.subr.mxu0 0.0
  %3754 = vmatpush2.msra.mxu0 0.0
  %3755 = vmatprep.subr.mxu0 0.0
  %3756 = vmatpush2.msra.mxu0 0.0
  %3757 = vmatprep.mubr.f32.mxu0 0.0
  %3758 = vmatmul.mubr.f32.gmra.mxu0 %v3682
  %v3759 = vpop.f32.mrf.mxu0
  %v3760 = vadd.f32 %v3664, %v3759
  %v3761 = vpop.f32.mrf.mxu0
  %v3762 = vadd.f32 %v3668, %v3761
  %3763 = vmatprep.mubr.f32.mxu0 0.0
  %3764 = vmatmul.mubr.f32.gmra.mxu0 %v3685
  %v3765 = vpop.f32.mrf.mxu0
  %v3766 = vadd.f32 %v3664, %v3765
  %v3767 = vpop.f32.mrf.mxu0
  %v3768 = vadd.f32 %v3668, %v3767
  %3769 = vmatprep.mubr.f32.mxu0 0.0
  %3770 = vmatmul.mubr.f32.gmra.mxu0 %v3688
  %v3771 = vpop.f32.mrf.mxu0
  %v3772 = vadd.f32 %v3664, %v3771
  %v3773 = vpop.f32.mrf.mxu0
  %v3774 = vadd.f32 %v3668, %v3773
  %3775 = vmatprep.mubr.f32.mxu0 0.0
  %3776 = vmatmul.mubr.f32.gmra.mxu0 %v3691
  %v3777 = vpop.f32.mrf.mxu0
  %v3778 = vadd.f32 %v3664, %v3777
  %v3779 = vpop.f32.mrf.mxu0
  %v3780 = vadd.f32 %v3668, %v3779
  %3781 = vdwg.mxu0
  %3782 = vmatprep.subr.mxu0 0.0
  %3783 = vmatpush1.msra.mxu0 0.0
  %3784 = vmatprep.subr.mxu0 0.0
  %3785 = vmatpush1.msra.mxu0 0.0
  %3786 = vmatprep.subr.mxu0 0.0
  %3787 = vmatpush1.msra.mxu0 0.0
  %3788 = vmatprep.subr.mxu0 0.0
  %3789 = vmatpush1.msra.mxu0 0.0
  %3790 = vmatprep.subr.mxu0 0.0
  %3791 = vmatpush1.msra.mxu0 0.0
  %3792 = vmatprep.subr.mxu0 0.0
  %3793 = vmatpush1.msra.mxu0 0.0
  %3794 = vmatprep.subr.mxu0 0.0
  %3795 = vmatpush1.msra.mxu0 0.0
  %3796 = vmatprep.subr.mxu0 0.0
  %3797 = vmatpush1.msra.mxu0 0.0
  %3798 = vmatprep.subr.mxu0 0.0
  %3799 = vmatpush1.msra.mxu0 0.0
  %3800 = vmatprep.subr.mxu0 0.0
  %3801 = vmatpush1.msra.mxu0 0.0
  %3802 = vmatprep.subr.mxu0 0.0
  %3803 = vmatpush1.msra.mxu0 0.0
  %3804 = vmatprep.subr.mxu0 0.0
  %3805 = vmatpush1.msra.mxu0 0.0
  %3806 = vmatprep.subr.mxu0 %v3658
  %3807 = vmatpush1.msra.mxu0 %v3657
  %3808 = vmatprep.subr.mxu0 %v3654
  %3809 = vmatpush1.msra.mxu0 %v3653
  %3810 = vmatprep.subr.mxu0 %v3650
  %3811 = vmatpush1.msra.mxu0 %v3649
  %3812 = vmatprep.subr.mxu0 %v3646
  %3813 = vmatpush1.msra.mxu0 %v3645
  %3814 = vmatprep.subr.mxu0 0.0
  %3815 = vmatpush2.msra.mxu0 0.0
  %3816 = vmatprep.subr.mxu0 0.0
  %3817 = vmatpush2.msra.mxu0 0.0
  %3818 = vmatprep.subr.mxu0 0.0
  %3819 = vmatpush2.msra.mxu0 0.0
  %3820 = vmatprep.subr.mxu0 0.0
  %3821 = vmatpush2.msra.mxu0 0.0
  %3822 = vmatprep.subr.mxu0 0.0
  %3823 = vmatpush2.msra.mxu0 0.0
  %3824 = vmatprep.subr.mxu0 0.0
  %3825 = vmatpush2.msra.mxu0 0.0
  %3826 = vmatprep.subr.mxu0 0.0
  %3827 = vmatpush2.msra.mxu0 0.0
  %3828 = vmatprep.subr.mxu0 0.0
  %3829 = vmatpush2.msra.mxu0 0.0
  %3830 = vmatprep.subr.mxu0 0.0
  %3831 = vmatpush2.msra.mxu0 0.0
  %3832 = vmatprep.subr.mxu0 0.0
  %3833 = vmatpush2.msra.mxu0 0.0
  %3834 = vmatprep.subr.mxu0 0.0
  %3835 = vmatpush2.msra.mxu0 0.0
  %3836 = vmatprep.subr.mxu0 0.0
  %3837 = vmatpush2.msra.mxu0 0.0
  %3838 = vmatprep.subr.mxu0 0.0
  %3839 = vmatpush2.msra.mxu0 0.0
  %3840 = vmatprep.subr.mxu0 0.0
  %3841 = vmatpush2.msra.mxu0 0.0
  %3842 = vmatprep.subr.mxu0 0.0
  %3843 = vmatpush2.msra.mxu0 0.0
  %3844 = vmatprep.subr.mxu0 0.0
  %3845 = vmatpush2.msra.mxu0 0.0
  %3846 = vmatprep.mubr.f32.mxu0 0.0
  %3847 = vmatmul.mubr.f32.gmra.mxu0 %v3682
  %v3848 = vpop.f32.mrf.mxu0
  %v3849 = vadd.f32 %v3672, %v3848
  %v3850 = vpop.f32.mrf.mxu0
  %v3851 = vadd.f32 %v3676, %v3850
  %3852 = vmatprep.mubr.f32.mxu0 0.0
  %3853 = vmatmul.mubr.f32.gmra.mxu0 %v3685
  %v3854 = vpop.f32.mrf.mxu0
  %v3855 = vadd.f32 %v3672, %v3854
  %v3856 = vpop.f32.mrf.mxu0
  %v3857 = vadd.f32 %v3676, %v3856
  %3858 = vmatprep.mubr.f32.mxu0 0.0
  %3859 = vmatmul.mubr.f32.gmra.mxu0 %v3688
  %v3860 = vpop.f32.mrf.mxu0
  %v3861 = vadd.f32 %v3672, %v3860
  %v3862 = vpop.f32.mrf.mxu0
  %v3863 = vadd.f32 %v3676, %v3862
  %3864 = vmatprep.mubr.f32.mxu0 0.0
  %3865 = vmatmul.mubr.f32.gmra.mxu0 %v3691
  %v3866 = vpop.f32.mrf.mxu0
  %v3867 = vadd.f32 %v3672, %v3866
  %v3868 = vpop.f32.mrf.mxu0
  %v3869 = vadd.f32 %v3676, %v3868
  %3870 = vdwg.mxu0
  %3871 = vst [vmem:[%s17] sm:$0xff] %v3760
  %3872 = vst [vmem:[%s17 + $0x8] sm:$0xff] %v3762
  %3873 = vst [vmem:[%s17 + $0x10] sm:$0xff] %v3849
  %3874 = vst [vmem:[%s17 + $0x18] sm:$0xff] %v3851
  %3875 = vst [vmem:[%s17 + $0x20] sm:$0xff] %v3766
  %3876 = vst [vmem:[%s17 + $0x28] sm:$0xff] %v3768
  %3877 = vst [vmem:[%s17 + $0x30] sm:$0xff] %v3855
  %3878 = vst [vmem:[%s17 + $0x38] sm:$0xff] %v3857
  %3879 = vst [vmem:[%s17 + $0x40] sm:$0xff] %v3772
  %3880 = vst [vmem:[%s17 + $0x48] sm:$0xff] %v3774
  %3881 = vst [vmem:[%s17 + $0x50] sm:$0xff] %v3861
  %3882 = vst [vmem:[%s17 + $0x58] sm:$0xff] %v3863
  %3883 = vst [vmem:[%s17 + $0x60] sm:$0x3f] %v3778
  %3884 = vst [vmem:[%s17 + $0x68] sm:$0x3f] %v3780
  %3885 = vst [vmem:[%s17 + $0x70] sm:$0x3f] %v3867
  %3886 = vst [vmem:[%s17 + $0x78] sm:$0x3f] %v3869
  // Predicated region
  $region66: #{net_forward.1} parent=0 // pred_check
    _
  $region67: #{net_forward.1} parent=0 // pred_check_branch
    %3888 = sbr.rel (0) target = $region69
  $region68: #{net_forward.1} parent=0 // pred_region
    _
  $region69: #{net_forward.1} parent=0 // pred_fallthru
    _
  // Predicated region
  $region70: #{net_forward.1} parent=0 // pred_check
    _
  $region71: #{net_forward.1} parent=0 // pred_check_branch
    %3890 = sbr.rel (0) target = $region73
  $region72: #{net_forward.1} parent=0 // pred_region
    _
  $region73: #{net_forward.1} parent=0 // pred_fallthru
    _

</llo_original>
